<compile_context>
chip_gen: v7x
topology: tpu7x:2x2x1
jax: 0.10.0
libtpu: 0.0.40
codegen_flags: <defaults>
</compile_context>

<pallas_src>
import jax
import jax.numpy as jnp
from jax import lax
from jax.experimental import pallas as pl
from jax.experimental.pallas import tpu as pltpu


_VMEM_LIMIT = 48 * 1024 * 1024  # explicit scoped-VMEM budget, fits v5e/v6e/v7x


# ----------------------- fused projection conv (q, k, v, res) ------------------------

def _make_fused_conv_kernel(C, Csq, O, H, W, N, PAD):
    O_tot = 2 * Csq + 2 * O
    row_k = Csq
    row_v = 2 * Csq
    row_r = 2 * Csq + O

    def kernel(w_ref, b_ref, m_ref, x_ref,
               q_ref, k_ref, v_ref, r_ref, mu_ref, rstd_ref):
        # w: (9, O_tot, C)  b: (O_tot, 1)  m: (3, 1, N)  x: (1, C, N + 2*PAD)
        x = x_ref[0]
        acc = jnp.zeros((O_tot, N), jnp.float32)
        for kh in range(3):
            for kw in range(3):
                shift = (kh - 1) * W + (kw - 1)
                # static lane slice of the flat, edge-padded image (vertical taps read
                # zeros from the flat padding; horizontal taps also need a column mask)
                xs = x[:, PAD + shift: PAD + shift + N]          # (C, N)
                if kw != 1:
                    xs = xs * m_ref[kw]
                acc = acc + jnp.dot(w_ref[kh * 3 + kw], xs,
                                    preferred_element_type=jnp.float32)
        acc = acc + b_ref[...]

        q_ref[0] = acc[0:Csq, :].astype(q_ref.dtype)
        k_ref[0] = acc[row_k:row_k + Csq, :].astype(k_ref.dtype)
        v_ref[0] = acc[row_v:row_v + O, :].astype(v_ref.dtype)
        res = acc[row_r:row_r + O, :]
        r_ref[0] = res.astype(r_ref.dtype)

        # InstanceNorm2d statistics of the residual branch (per channel, over spatial N)
        mu = jnp.mean(res, axis=-1, keepdims=True)
        var = jnp.mean(jnp.square(res - mu), axis=-1, keepdims=True)
        mu_ref[0] = mu
        rstd_ref[0] = lax.rsqrt(var + 1e-5)

    return kernel


def fused_projection_conv(x, w_all, b_all, Csq, O):
    """All four 3x3 convs (stride 1, pad 1) in one Pallas pass over x (NCHW).

    Returns q, k: (B, Csq, N); v, res: (B, O, N); res mean / rstd: (B, O, 1).
    """
    B, C, H, W = x.shape
    N = H * W
    O_tot = 2 * Csq + 2 * O
    PAD = W + 1

    # 9 weight taps (O_tot, C), indexed kh*3+kw, matching w[o, c, kh, kw]
    w_taps = jnp.transpose(w_all, (2, 3, 0, 1)).reshape(9, O_tot, C)
    b_col = b_all.reshape(O_tot, 1)

    # flat edge-padded input + column-validity masks for the horizontal taps
    x_flat = x.reshape(B, C, N)
    x_pad = jnp.pad(x_flat, ((0, 0), (0, 0), (PAD, PAD)))
    col = jnp.arange(N, dtype=jnp.int32) % W
    masks = jnp.stack(
        [((col + dw) >= 0) & ((col + dw) < W) for dw in (-1, 0, 1)],
        axis=0)[:, None, :].astype(x.dtype)                       # (3, 1, N)

    kernel = _make_fused_conv_kernel(C, Csq, O, H, W, N, PAD)
    out_shapes = (
        jax.ShapeDtypeStruct((B, Csq, N), x.dtype),    # q
        jax.ShapeDtypeStruct((B, Csq, N), x.dtype),    # k
        jax.ShapeDtypeStruct((B, O, N), x.dtype),      # v
        jax.ShapeDtypeStruct((B, O, N), x.dtype),      # res
        jax.ShapeDtypeStruct((B, O, 1), jnp.float32),  # res mean
        jax.ShapeDtypeStruct((B, O, 1), jnp.float32),  # res rstd
    )
    return pl.pallas_call(
        kernel,
        out_shape=out_shapes,
        grid_spec=pltpu.PrefetchScalarGridSpec(
            num_scalar_prefetch=0,
            grid=(B,),
            in_specs=[
                pl.BlockSpec((9, O_tot, C), lambda b: (0, 0, 0)),       # weights (resident)
                pl.BlockSpec((O_tot, 1), lambda b: (0, 0)),             # bias (resident)
                pl.BlockSpec((3, 1, N), lambda b: (0, 0, 0)),           # column masks
                pl.BlockSpec((1, C, N + 2 * PAD), lambda b: (b, 0, 0)),  # padded image
            ],
            out_specs=[
                pl.BlockSpec((1, Csq, N), lambda b: (b, 0, 0)),
                pl.BlockSpec((1, Csq, N), lambda b: (b, 0, 0)),
                pl.BlockSpec((1, O, N), lambda b: (b, 0, 0)),
                pl.BlockSpec((1, O, N), lambda b: (b, 0, 0)),
                pl.BlockSpec((1, O, 1), lambda b: (b, 0, 0)),
                pl.BlockSpec((1, O, 1), lambda b: (b, 0, 0)),
            ],
        ),
        compiler_params=pltpu.CompilerParams(
            dimension_semantics=("parallel",),
            vmem_limit_bytes=_VMEM_LIMIT,
        ),
    )(w_taps, b_col, masks, x_pad)


# -------------------- attention + fused finalize (per query tile) --------------------

def _attention_kernel(gamma_ref, q_ref, k_ref, v_ref, res_ref, mu_ref, rstd_ref,
                      out_ref, att_ref):
    # gamma: SMEM (1,); q: (1, Csq, TQ); k: (1, Csq, N); v: (1, O, N);
    # res: (1, O, TQ); mu/rstd: (1, O, 1); out: (1, O, TQ); att: (1, TQ, N)
    q = q_ref[0].astype(jnp.bfloat16)                              # (Csq, TQ)
    k = k_ref[0].astype(jnp.bfloat16)                              # (Csq, N)

    # energy[t, m] = sum_c q[c, t] * k[c, m]; exact softmax over full key axis
    energy = lax.dot_general(q, k, (((0,), (0,)), ((), ())),
                             preferred_element_type=jnp.float32)   # (TQ, N) f32
    energy = energy - jnp.max(energy, axis=-1, keepdims=True)
    p = jnp.exp(energy)
    att = p * pl.reciprocal(jnp.sum(p, axis=-1, keepdims=True), approx=True)
    att_ref[0] = att.astype(att_ref.dtype)

    # out[o, t] = sum_m v[o, m] * att[t, m]  (transpose att once; output stays lane-dense)
    p_t = jnp.transpose(att).astype(jnp.bfloat16)                  # (N, TQ)
    v = v_ref[0].astype(jnp.bfloat16)                              # (O, N)
    attn_out = jnp.dot(v, p_t, preferred_element_type=jnp.float32)  # (O, TQ) f32

    # fused epilogue: InstanceNorm(res) with precomputed stats, LeakyReLU(0.2), gamma mix
    g = gamma_ref[0]
    res = res_ref[0].astype(jnp.float32)
    res_n = (res - mu_ref[0]) * rstd_ref[0]
    lrelu = lambda t: jnp.where(t >= 0, t, 0.2 * t)
    out = g * lrelu(attn_out) + (1.0 - g) * lrelu(res_n)
    out_ref[0] = out.astype(out_ref.dtype)


def attention_with_epilogue(gamma, q, k, v, res, mu, rstd):
    B, Csq, N = q.shape
    O = v.shape[1]
    TQ = 128 if (N % 128 == 0) else N   # query-row tile (128-multiple for the MXU)
    nq = N // TQ

    return pl.pallas_call(
        _attention_kernel,
        out_shape=(
            jax.ShapeDtypeStruct((B, O, N), v.dtype),
            jax.ShapeDtypeStruct((B, N, N), q.dtype),
        ),
        grid_spec=pltpu.PrefetchScalarGridSpec(
            num_scalar_prefetch=0,
            grid=(B, nq),
            in_specs=[
                pl.BlockSpec(memory_space=pltpu.MemorySpace.SMEM),    # gamma scalar
                pl.BlockSpec((1, Csq, TQ), lambda b, t: (b, 0, t)),   # q tile (lane-dense)
                pl.BlockSpec((1, Csq, N), lambda b, t: (b, 0, 0)),    # k (resident per b)
                pl.BlockSpec((1, O, N), lambda b, t: (b, 0, 0)),      # v (resident per b)
                pl.BlockSpec((1, O, TQ), lambda b, t: (b, 0, t)),     # res tile
                pl.BlockSpec((1, O, 1), lambda b, t: (b, 0, 0)),      # res mean
                pl.BlockSpec((1, O, 1), lambda b, t: (b, 0, 0)),      # res rstd
            ],
            out_specs=[
                pl.BlockSpec((1, O, TQ), lambda b, t: (b, 0, t)),     # fused output tile
                pl.BlockSpec((1, TQ, N), lambda b, t: (b, t, 0)),     # attention rows
            ],
        ),
        compiler_params=pltpu.CompilerParams(
            dimension_semantics=("parallel", "parallel"),
            vmem_limit_bytes=_VMEM_LIMIT,
        ),
    )(gamma, q, k, v, res, mu, rstd)


# ----------------------------------- forward pass ------------------------------------

def spectral_normalize(w_bar, u):
    """One power iteration, matching SpectralNorm._update_u_v (power_iterations=1)."""
    height = w_bar.shape[0]
    w_mat = w_bar.reshape(height, -1)

    def l2n(t, eps=1e-12):
        return t / (jnp.linalg.norm(t) + eps)

    v = l2n(w_mat.T @ u)
    wv = w_mat @ v
    u_new = l2n(wv)
    sigma = u_new @ wv
    return w_bar / sigma


def full_attention_forward(x, params):
    B, C, H, W = x.shape
    N = H * W
    Csq = params["query_w"].shape[0]
    O = params["value_w"].shape[0]

    # spectral-norm the residual conv weight (tiny vector math, kept in plain JAX)
    w_res = spectral_normalize(params["res_w_bar"], params["res_u"])

    # fuse the four projection convs into one weight / bias stack
    w_all = jnp.concatenate(
        [params["query_w"], params["key_w"], params["value_w"], w_res], axis=0)
    b_all = jnp.concatenate(
        [params["query_b"], params["key_b"], params["value_b"], params["res_b"]])

    q, k, v, res, mu, rstd = fused_projection_conv(x, w_all, b_all, Csq, O)
    out, attention = attention_with_epilogue(params["gamma"], q, k, v, res, mu, rstd)

    return out.reshape(B, O, H, W), attention.reshape(B, N, H, W)


# --------------------------------- parameter init ------------------------------------

def init_params(key, in_channels, out_channels, squeeze_factor=8):
    csq = in_channels // squeeze_factor
    ks = jax.random.split(key, 10)
    s = 0.1

    def l2n(t, eps=1e-12):
        return t / (jnp.linalg.norm(t) + eps)

    return {
        "gamma": jnp.zeros((1,), jnp.float32),                     # Parameter(torch.zeros(1))
        "query_w": s * jax.random.normal(ks[0], (csq, in_channels, 3, 3), jnp.float32),
        "query_b": s * jax.random.normal(ks[1], (csq,), jnp.float32),
        "key_w": s * jax.random.normal(ks[2], (csq, in_channels, 3, 3), jnp.float32),
        "key_b": s * jax.random.normal(ks[3], (csq,), jnp.float32),
        "value_w": s * jax.random.normal(ks[4], (out_channels, in_channels, 3, 3), jnp.float32),
        "value_b": s * jax.random.normal(ks[5], (out_channels,), jnp.float32),
        "res_w_bar": s * jax.random.normal(ks[6], (out_channels, in_channels, 3, 3), jnp.float32),
        "res_b": s * jax.random.normal(ks[7], (out_channels,), jnp.float32),
        "res_u": l2n(jax.random.normal(ks[8], (out_channels,), jnp.float32)),
        "res_v": l2n(jax.random.normal(ks[9], (in_channels * 9,), jnp.float32)),
    }


if __name__ == "__main__":
    B, C, H, W = 2, 16, 16, 16   # N = 256 -> two 128-row query tiles per batch element
    O = 16

    key = jax.random.PRNGKey(0)
    kx, kp = jax.random.split(key)
    x = jax.random.normal(kx, (B, C, H, W), jnp.float32)
    params = init_params(kp, C, O)
    # use a nonzero gamma so both branches of the gamma mix are exercised at runtime
    params["gamma"] = jnp.full((1,), 0.25, jnp.float32)

    fwd = jax.jit(full_attention_forward)
    out, attention = fwd(x, params)
    jax.block_until_ready((out, attention))

    assert out.shape == (B, O, H, W)
    assert attention.shape == (B, H * W, H, W)
    assert bool(jnp.all(jnp.isfinite(out)))
    assert bool(jnp.all(jnp.isfinite(attention)))
    print("KERNEL_OK")
</pallas_src>

<mosaic_0001>
module attributes {stable_mosaic.version = 11 : i64} {
  func.func @kernel(%arg0: i32, %arg1: memref<9x36x16xf32, #tpu.memory_space<vmem>>, %arg2: memref<36x1xf32, #tpu.memory_space<vmem>>, %arg3: memref<3x1x256xf32, #tpu.memory_space<vmem>>, %arg4: memref<1x16x290xf32, #tpu.memory_space<vmem>>, %arg5: memref<1x2x256xf32, #tpu.memory_space<vmem>>, %arg6: memref<1x2x256xf32, #tpu.memory_space<vmem>>, %arg7: memref<1x16x256xf32, #tpu.memory_space<vmem>>, %arg8: memref<1x16x256xf32, #tpu.memory_space<vmem>>, %arg9: memref<1x16x1xf32, #tpu.memory_space<vmem>>, %arg10: memref<1x16x1xf32, #tpu.memory_space<vmem>>) attributes {dimension_semantics = [#tpu.dimension_semantics<parallel>], iteration_bounds = array<i64: 2>, scalar_prefetch = 0 : i64, scratch_operands = 0 : i64, tpu.core_type = #tpu.core_type<tc>, window_params = [{pipeline_mode = #tpu.pipeline_mode<synchronous>, transform_indices = @transform_0, window_bounds = array<i64: 9, 36, 16>}, {pipeline_mode = #tpu.pipeline_mode<synchronous>, transform_indices = @transform_1, window_bounds = array<i64: 36, 1>}, {pipeline_mode = #tpu.pipeline_mode<synchronous>, transform_indices = @transform_2, window_bounds = array<i64: 3, 1, 256>}, {transform_indices = @transform_3, window_bounds = array<i64: 1, 16, 290>}, {transform_indices = @transform_4, window_bounds = array<i64: 1, 2, 256>}, {transform_indices = @transform_5, window_bounds = array<i64: 1, 2, 256>}, {transform_indices = @transform_6, window_bounds = array<i64: 1, 16, 256>}, {transform_indices = @transform_7, window_bounds = array<i64: 1, 16, 256>}, {transform_indices = @transform_8, window_bounds = array<i64: 1, 16, 1>}, {transform_indices = @transform_9, window_bounds = array<i64: 1, 16, 1>}]} {
    %c0 = arith.constant 0 : index
    %c0_0 = arith.constant 0 : index
    %c0_1 = arith.constant 0 : index
    %0 = vector.load %arg4[%c0, %c0_0, %c0_1] : memref<1x16x290xf32, #tpu.memory_space<vmem>>, vector<1x16x290xf32>
    %1 = vector.shape_cast %0 : vector<1x16x290xf32> to vector<16x290xf32>
    %cst = arith.constant 0.000000e+00 : f32
    %2 = vector.broadcast %cst : f32 to vector<36x256xf32>
    %3 = vector.extract_strided_slice %1 {offsets = [0, 0], sizes = [16, 256], strides = [1, 1]} : vector<16x290xf32> to vector<16x256xf32>
    %c0_2 = arith.constant 0 : index
    %c0_3 = arith.constant 0 : index
    %c0_4 = arith.constant 0 : index
    %4 = vector.load %arg3[%c0_2, %c0_3, %c0_4] : memref<3x1x256xf32, #tpu.memory_space<vmem>>, vector<1x1x256xf32>
    %5 = vector.shape_cast %4 : vector<1x1x256xf32> to vector<1x256xf32>
    %6 = vector.broadcast %5 : vector<1x256xf32> to vector<16x256xf32>
    %7 = arith.mulf %3, %6 : vector<16x256xf32>
    %c0_5 = arith.constant 0 : index
    %c0_6 = arith.constant 0 : index
    %c0_7 = arith.constant 0 : index
    %8 = vector.load %arg1[%c0_5, %c0_6, %c0_7] : memref<9x36x16xf32, #tpu.memory_space<vmem>>, vector<1x36x16xf32>
    %9 = vector.shape_cast %8 : vector<1x36x16xf32> to vector<36x16xf32>
    %cst_8 = arith.constant dense<0.000000e+00> : vector<36x256xf32>
    %10 = tpu.matmul %9, %7, %cst_8 {dimension_numbers = #tpu.dot_dimension_numbers<[1], [0], [0], [1], [0, 0, 1, 1], [], []>} : vector<36x16xf32>, vector<16x256xf32>, vector<36x256xf32> -> vector<36x256xf32>
    %11 = arith.addf %2, %10 : vector<36x256xf32>
    %12 = vector.extract_strided_slice %1 {offsets = [0, 1], sizes = [16, 256], strides = [1, 1]} : vector<16x290xf32> to vector<16x256xf32>
    %c1 = arith.constant 1 : index
    %c0_9 = arith.constant 0 : index
    %c0_10 = arith.constant 0 : index
    %13 = vector.load %arg1[%c1, %c0_9, %c0_10] : memref<9x36x16xf32, #tpu.memory_space<vmem>>, vector<1x36x16xf32>
    %14 = vector.shape_cast %13 : vector<1x36x16xf32> to vector<36x16xf32>
    %cst_11 = arith.constant dense<0.000000e+00> : vector<36x256xf32>
    %15 = tpu.matmul %14, %12, %cst_11 {dimension_numbers = #tpu.dot_dimension_numbers<[1], [0], [0], [1], [0, 0, 1, 1], [], []>} : vector<36x16xf32>, vector<16x256xf32>, vector<36x256xf32> -> vector<36x256xf32>
    %16 = arith.addf %11, %15 : vector<36x256xf32>
    %17 = vector.extract_strided_slice %1 {offsets = [0, 2], sizes = [16, 256], strides = [1, 1]} : vector<16x290xf32> to vector<16x256xf32>
    %c2 = arith.constant 2 : index
    %c0_12 = arith.constant 0 : index
    %c0_13 = arith.constant 0 : index
    %18 = vector.load %arg3[%c2, %c0_12, %c0_13] : memref<3x1x256xf32, #tpu.memory_space<vmem>>, vector<1x1x256xf32>
    %19 = vector.shape_cast %18 : vector<1x1x256xf32> to vector<1x256xf32>
    %20 = vector.broadcast %19 : vector<1x256xf32> to vector<16x256xf32>
    %21 = arith.mulf %17, %20 : vector<16x256xf32>
    %c2_14 = arith.constant 2 : index
    %c0_15 = arith.constant 0 : index
    %c0_16 = arith.constant 0 : index
    %22 = vector.load %arg1[%c2_14, %c0_15, %c0_16] : memref<9x36x16xf32, #tpu.memory_space<vmem>>, vector<1x36x16xf32>
    %23 = vector.shape_cast %22 : vector<1x36x16xf32> to vector<36x16xf32>
    %cst_17 = arith.constant dense<0.000000e+00> : vector<36x256xf32>
    %24 = tpu.matmul %23, %21, %cst_17 {dimension_numbers = #tpu.dot_dimension_numbers<[1], [0], [0], [1], [0, 0, 1, 1], [], []>} : vector<36x16xf32>, vector<16x256xf32>, vector<36x256xf32> -> vector<36x256xf32>
    %25 = arith.addf %16, %24 : vector<36x256xf32>
    %26 = vector.extract_strided_slice %1 {offsets = [0, 16], sizes = [16, 256], strides = [1, 1]} : vector<16x290xf32> to vector<16x256xf32>
    %c0_18 = arith.constant 0 : index
    %c0_19 = arith.constant 0 : index
    %c0_20 = arith.constant 0 : index
    %27 = vector.load %arg3[%c0_18, %c0_19, %c0_20] : memref<3x1x256xf32, #tpu.memory_space<vmem>>, vector<1x1x256xf32>
    %28 = vector.shape_cast %27 : vector<1x1x256xf32> to vector<1x256xf32>
    %29 = vector.broadcast %28 : vector<1x256xf32> to vector<16x256xf32>
    %30 = arith.mulf %26, %29 : vector<16x256xf32>
    %c3 = arith.constant 3 : index
    %c0_21 = arith.constant 0 : index
    %c0_22 = arith.constant 0 : index
    %31 = vector.load %arg1[%c3, %c0_21, %c0_22] : memref<9x36x16xf32, #tpu.memory_space<vmem>>, vector<1x36x16xf32>
    %32 = vector.shape_cast %31 : vector<1x36x16xf32> to vector<36x16xf32>
    %cst_23 = arith.constant dense<0.000000e+00> : vector<36x256xf32>
    %33 = tpu.matmul %32, %30, %cst_23 {dimension_numbers = #tpu.dot_dimension_numbers<[1], [0], [0], [1], [0, 0, 1, 1], [], []>} : vector<36x16xf32>, vector<16x256xf32>, vector<36x256xf32> -> vector<36x256xf32>
    %34 = arith.addf %25, %33 : vector<36x256xf32>
    %35 = vector.extract_strided_slice %1 {offsets = [0, 17], sizes = [16, 256], strides = [1, 1]} : vector<16x290xf32> to vector<16x256xf32>
    %c4 = arith.constant 4 : index
    %c0_24 = arith.constant 0 : index
    %c0_25 = arith.constant 0 : index
    %36 = vector.load %arg1[%c4, %c0_24, %c0_25] : memref<9x36x16xf32, #tpu.memory_space<vmem>>, vector<1x36x16xf32>
    %37 = vector.shape_cast %36 : vector<1x36x16xf32> to vector<36x16xf32>
    %cst_26 = arith.constant dense<0.000000e+00> : vector<36x256xf32>
    %38 = tpu.matmul %37, %35, %cst_26 {dimension_numbers = #tpu.dot_dimension_numbers<[1], [0], [0], [1], [0, 0, 1, 1], [], []>} : vector<36x16xf32>, vector<16x256xf32>, vector<36x256xf32> -> vector<36x256xf32>
    %39 = arith.addf %34, %38 : vector<36x256xf32>
    %40 = vector.extract_strided_slice %1 {offsets = [0, 18], sizes = [16, 256], strides = [1, 1]} : vector<16x290xf32> to vector<16x256xf32>
    %c2_27 = arith.constant 2 : index
    %c0_28 = arith.constant 0 : index
    %c0_29 = arith.constant 0 : index
    %41 = vector.load %arg3[%c2_27, %c0_28, %c0_29] : memref<3x1x256xf32, #tpu.memory_space<vmem>>, vector<1x1x256xf32>
    %42 = vector.shape_cast %41 : vector<1x1x256xf32> to vector<1x256xf32>
    %43 = vector.broadcast %42 : vector<1x256xf32> to vector<16x256xf32>
    %44 = arith.mulf %40, %43 : vector<16x256xf32>
    %c5 = arith.constant 5 : index
    %c0_30 = arith.constant 0 : index
    %c0_31 = arith.constant 0 : index
    %45 = vector.load %arg1[%c5, %c0_30, %c0_31] : memref<9x36x16xf32, #tpu.memory_space<vmem>>, vector<1x36x16xf32>
    %46 = vector.shape_cast %45 : vector<1x36x16xf32> to vector<36x16xf32>
    %cst_32 = arith.constant dense<0.000000e+00> : vector<36x256xf32>
    %47 = tpu.matmul %46, %44, %cst_32 {dimension_numbers = #tpu.dot_dimension_numbers<[1], [0], [0], [1], [0, 0, 1, 1], [], []>} : vector<36x16xf32>, vector<16x256xf32>, vector<36x256xf32> -> vector<36x256xf32>
    %48 = arith.addf %39, %47 : vector<36x256xf32>
    %49 = vector.extract_strided_slice %1 {offsets = [0, 32], sizes = [16, 256], strides = [1, 1]} : vector<16x290xf32> to vector<16x256xf32>
    %c0_33 = arith.constant 0 : index
    %c0_34 = arith.constant 0 : index
    %c0_35 = arith.constant 0 : index
    %50 = vector.load %arg3[%c0_33, %c0_34, %c0_35] : memref<3x1x256xf32, #tpu.memory_space<vmem>>, vector<1x1x256xf32>
    %51 = vector.shape_cast %50 : vector<1x1x256xf32> to vector<1x256xf32>
    %52 = vector.broadcast %51 : vector<1x256xf32> to vector<16x256xf32>
    %53 = arith.mulf %49, %52 : vector<16x256xf32>
    %c6 = arith.constant 6 : index
    %c0_36 = arith.constant 0 : index
    %c0_37 = arith.constant 0 : index
    %54 = vector.load %arg1[%c6, %c0_36, %c0_37] : memref<9x36x16xf32, #tpu.memory_space<vmem>>, vector<1x36x16xf32>
    %55 = vector.shape_cast %54 : vector<1x36x16xf32> to vector<36x16xf32>
    %cst_38 = arith.constant dense<0.000000e+00> : vector<36x256xf32>
    %56 = tpu.matmul %55, %53, %cst_38 {dimension_numbers = #tpu.dot_dimension_numbers<[1], [0], [0], [1], [0, 0, 1, 1], [], []>} : vector<36x16xf32>, vector<16x256xf32>, vector<36x256xf32> -> vector<36x256xf32>
    %57 = arith.addf %48, %56 : vector<36x256xf32>
    %58 = vector.extract_strided_slice %1 {offsets = [0, 33], sizes = [16, 256], strides = [1, 1]} : vector<16x290xf32> to vector<16x256xf32>
    %c7 = arith.constant 7 : index
    %c0_39 = arith.constant 0 : index
    %c0_40 = arith.constant 0 : index
    %59 = vector.load %arg1[%c7, %c0_39, %c0_40] : memref<9x36x16xf32, #tpu.memory_space<vmem>>, vector<1x36x16xf32>
    %60 = vector.shape_cast %59 : vector<1x36x16xf32> to vector<36x16xf32>
    %cst_41 = arith.constant dense<0.000000e+00> : vector<36x256xf32>
    %61 = tpu.matmul %60, %58, %cst_41 {dimension_numbers = #tpu.dot_dimension_numbers<[1], [0], [0], [1], [0, 0, 1, 1], [], []>} : vector<36x16xf32>, vector<16x256xf32>, vector<36x256xf32> -> vector<36x256xf32>
    %62 = arith.addf %57, %61 : vector<36x256xf32>
    %63 = vector.extract_strided_slice %1 {offsets = [0, 34], sizes = [16, 256], strides = [1, 1]} : vector<16x290xf32> to vector<16x256xf32>
    %c2_42 = arith.constant 2 : index
    %c0_43 = arith.constant 0 : index
    %c0_44 = arith.constant 0 : index
    %64 = vector.load %arg3[%c2_42, %c0_43, %c0_44] : memref<3x1x256xf32, #tpu.memory_space<vmem>>, vector<1x1x256xf32>
    %65 = vector.shape_cast %64 : vector<1x1x256xf32> to vector<1x256xf32>
    %66 = vector.broadcast %65 : vector<1x256xf32> to vector<16x256xf32>
    %67 = arith.mulf %63, %66 : vector<16x256xf32>
    %c8 = arith.constant 8 : index
    %c0_45 = arith.constant 0 : index
    %c0_46 = arith.constant 0 : index
    %68 = vector.load %arg1[%c8, %c0_45, %c0_46] : memref<9x36x16xf32, #tpu.memory_space<vmem>>, vector<1x36x16xf32>
    %69 = vector.shape_cast %68 : vector<1x36x16xf32> to vector<36x16xf32>
    %cst_47 = arith.constant dense<0.000000e+00> : vector<36x256xf32>
    %70 = tpu.matmul %69, %67, %cst_47 {dimension_numbers = #tpu.dot_dimension_numbers<[1], [0], [0], [1], [0, 0, 1, 1], [], []>} : vector<36x16xf32>, vector<16x256xf32>, vector<36x256xf32> -> vector<36x256xf32>
    %71 = arith.addf %62, %70 : vector<36x256xf32>
    %c0_48 = arith.constant 0 : index
    %c0_49 = arith.constant 0 : index
    %72 = vector.load %arg2[%c0_48, %c0_49] : memref<36x1xf32, #tpu.memory_space<vmem>>, vector<36x1xf32>
    %73 = vector.broadcast %72 : vector<36x1xf32> to vector<36x256xf32>
    %74 = arith.addf %71, %73 : vector<36x256xf32>
    %75 = vector.extract_strided_slice %74 {offsets = [0, 0], sizes = [2, 256], strides = [1, 1]} : vector<36x256xf32> to vector<2x256xf32>
    %c0_50 = arith.constant 0 : index
    %c0_51 = arith.constant 0 : index
    %c0_52 = arith.constant 0 : index
    %76 = vector.load %arg5[%c0_50, %c0_51, %c0_52] : memref<1x2x256xf32, #tpu.memory_space<vmem>>, vector<1x2x256xf32>
    %77 = vector.shape_cast %76 : vector<1x2x256xf32> to vector<2x256xf32>
    %78 = vector.shape_cast %75 : vector<2x256xf32> to vector<1x2x256xf32>
    tpu.vector_store %arg5[%c0_50, %c0_51, %c0_52], %78 {strides = array<i32>} : memref<1x2x256xf32, #tpu.memory_space<vmem>>, vector<1x2x256xf32>,
    %79 = vector.extract_strided_slice %74 {offsets = [2, 0], sizes = [2, 256], strides = [1, 1]} : vector<36x256xf32> to vector<2x256xf32>
    %c0_53 = arith.constant 0 : index
    %c0_54 = arith.constant 0 : index
    %c0_55 = arith.constant 0 : index
    %80 = vector.load %arg6[%c0_53, %c0_54, %c0_55] : memref<1x2x256xf32, #tpu.memory_space<vmem>>, vector<1x2x256xf32>
    %81 = vector.shape_cast %80 : vector<1x2x256xf32> to vector<2x256xf32>
    %82 = vector.shape_cast %79 : vector<2x256xf32> to vector<1x2x256xf32>
    tpu.vector_store %arg6[%c0_53, %c0_54, %c0_55], %82 {strides = array<i32>} : memref<1x2x256xf32, #tpu.memory_space<vmem>>, vector<1x2x256xf32>,
    %83 = vector.extract_strided_slice %74 {offsets = [4, 0], sizes = [16, 256], strides = [1, 1]} : vector<36x256xf32> to vector<16x256xf32>
    %c0_56 = arith.constant 0 : index
    %c0_57 = arith.constant 0 : index
    %c0_58 = arith.constant 0 : index
    %84 = vector.load %arg7[%c0_56, %c0_57, %c0_58] : memref<1x16x256xf32, #tpu.memory_space<vmem>>, vector<1x16x256xf32>
    %85 = vector.shape_cast %84 : vector<1x16x256xf32> to vector<16x256xf32>
    %86 = vector.shape_cast %83 : vector<16x256xf32> to vector<1x16x256xf32>
    tpu.vector_store %arg7[%c0_56, %c0_57, %c0_58], %86 {strides = array<i32>} : memref<1x16x256xf32, #tpu.memory_space<vmem>>, vector<1x16x256xf32>,
    %87 = vector.extract_strided_slice %74 {offsets = [20, 0], sizes = [16, 256], strides = [1, 1]} : vector<36x256xf32> to vector<16x256xf32>
    %c0_59 = arith.constant 0 : index
    %c0_60 = arith.constant 0 : index
    %c0_61 = arith.constant 0 : index
    %88 = vector.load %arg8[%c0_59, %c0_60, %c0_61] : memref<1x16x256xf32, #tpu.memory_space<vmem>>, vector<1x16x256xf32>
    %89 = vector.shape_cast %88 : vector<1x16x256xf32> to vector<16x256xf32>
    %90 = vector.shape_cast %87 : vector<16x256xf32> to vector<1x16x256xf32>
    tpu.vector_store %arg8[%c0_59, %c0_60, %c0_61], %90 {strides = array<i32>} : memref<1x16x256xf32, #tpu.memory_space<vmem>>, vector<1x16x256xf32>,
    %cst_62 = arith.constant dense<0.000000e+00> : vector<16xf32>
    %91 = vector.multi_reduction <add>, %87, %cst_62 [1] : vector<16x256xf32> to vector<16xf32>
    %92 = vector.shape_cast %91 : vector<16xf32> to vector<16x1xf32>
    %cst_63 = arith.constant 2.560000e+02 : f32
    %93 = vector.broadcast %cst_63 : f32 to vector<16x1xf32>
    %94 = arith.divf %92, %93 : vector<16x1xf32>
    %95 = vector.broadcast %94 : vector<16x1xf32> to vector<16x256xf32>
    %96 = arith.subf %87, %95 : vector<16x256xf32>
    %97 = arith.mulf %96, %96 : vector<16x256xf32>
    %cst_64 = arith.constant dense<0.000000e+00> : vector<16xf32>
    %98 = vector.multi_reduction <add>, %97, %cst_64 [1] : vector<16x256xf32> to vector<16xf32>
    %99 = vector.shape_cast %98 : vector<16xf32> to vector<16x1xf32>
    %cst_65 = arith.constant 2.560000e+02 : f32
    %100 = vector.broadcast %cst_65 : f32 to vector<16x1xf32>
    %101 = arith.divf %99, %100 : vector<16x1xf32>
    %c0_66 = arith.constant 0 : index
    %c0_67 = arith.constant 0 : index
    %c0_68 = arith.constant 0 : index
    %102 = vector.load %arg9[%c0_66, %c0_67, %c0_68] : memref<1x16x1xf32, #tpu.memory_space<vmem>>, vector<1x16x1xf32>
    %103 = vector.shape_cast %102 : vector<1x16x1xf32> to vector<16x1xf32>
    %104 = vector.shape_cast %94 : vector<16x1xf32> to vector<1x16x1xf32>
    tpu.vector_store %arg9[%c0_66, %c0_67, %c0_68], %104 {strides = array<i32>} : memref<1x16x1xf32, #tpu.memory_space<vmem>>, vector<1x16x1xf32>,
    %cst_69 = arith.constant 9.99999974E-6 : f32
    %105 = vector.broadcast %cst_69 : f32 to vector<16x1xf32>
    %106 = arith.addf %101, %105 : vector<16x1xf32>
    %107 = math.rsqrt %106 : vector<16x1xf32>
    %c0_70 = arith.constant 0 : index
    %c0_71 = arith.constant 0 : index
    %c0_72 = arith.constant 0 : index
    %108 = vector.load %arg10[%c0_70, %c0_71, %c0_72] : memref<1x16x1xf32, #tpu.memory_space<vmem>>, vector<1x16x1xf32>
    %109 = vector.shape_cast %108 : vector<1x16x1xf32> to vector<16x1xf32>
    %110 = vector.shape_cast %107 : vector<16x1xf32> to vector<1x16x1xf32>
    tpu.vector_store %arg10[%c0_70, %c0_71, %c0_72], %110 {strides = array<i32>} : memref<1x16x1xf32, #tpu.memory_space<vmem>>, vector<1x16x1xf32>,
    return
  }
  func.func @transform_0(%arg0: i32) -> (i32, i32, i32) {
    %c0_i32 = arith.constant 0 : i32
    %c0_i32_0 = arith.constant 0 : i32
    %c0_i32_1 = arith.constant 0 : i32
    %c0_i32_2 = arith.constant 0 : i32
    return %c0_i32, %c0_i32_0, %c0_i32_1 : i32, i32, i32
  }
  func.func @transform_1(%arg0: i32) -> (i32, i32) {
    %c0_i32 = arith.constant 0 : i32
    %c0_i32_0 = arith.constant 0 : i32
    %c0_i32_1 = arith.constant 0 : i32
    return %c0_i32, %c0_i32_0 : i32, i32
  }
  func.func @transform_2(%arg0: i32) -> (i32, i32, i32) {
    %c0_i32 = arith.constant 0 : i32
    %c0_i32_0 = arith.constant 0 : i32
    %c0_i32_1 = arith.constant 0 : i32
    %c0_i32_2 = arith.constant 0 : i32
    return %c0_i32, %c0_i32_0, %c0_i32_1 : i32, i32, i32
  }
  func.func @transform_3(%arg0: i32) -> (i32, i32, i32) {
    %c0_i32 = arith.constant 0 : i32
    %c0_i32_0 = arith.constant 0 : i32
    %c0_i32_1 = arith.constant 0 : i32
    return %arg0, %c0_i32, %c0_i32_0 : i32, i32, i32
  }
  func.func @transform_4(%arg0: i32) -> (i32, i32, i32) {
    %c0_i32 = arith.constant 0 : i32
    %c0_i32_0 = arith.constant 0 : i32
    %c0_i32_1 = arith.constant 0 : i32
    return %arg0, %c0_i32, %c0_i32_0 : i32, i32, i32
  }
  func.func @transform_5(%arg0: i32) -> (i32, i32, i32) {
    %c0_i32 = arith.constant 0 : i32
    %c0_i32_0 = arith.constant 0 : i32
    %c0_i32_1 = arith.constant 0 : i32
    return %arg0, %c0_i32, %c0_i32_0 : i32, i32, i32
  }
  func.func @transform_6(%arg0: i32) -> (i32, i32, i32) {
    %c0_i32 = arith.constant 0 : i32
    %c0_i32_0 = arith.constant 0 : i32
    %c0_i32_1 = arith.constant 0 : i32
    return %arg0, %c0_i32, %c0_i32_0 : i32, i32, i32
  }
  func.func @transform_7(%arg0: i32) -> (i32, i32, i32) {
    %c0_i32 = arith.constant 0 : i32
    %c0_i32_0 = arith.constant 0 : i32
    %c0_i32_1 = arith.constant 0 : i32
    return %arg0, %c0_i32, %c0_i32_0 : i32, i32, i32
  }
  func.func @transform_8(%arg0: i32) -> (i32, i32, i32) {
    %c0_i32 = arith.constant 0 : i32
    %c0_i32_0 = arith.constant 0 : i32
    %c0_i32_1 = arith.constant 0 : i32
    return %arg0, %c0_i32, %c0_i32_0 : i32, i32, i32
  }
  func.func @transform_9(%arg0: i32) -> (i32, i32, i32) {
    %c0_i32 = arith.constant 0 : i32
    %c0_i32_0 = arith.constant 0 : i32
    %c0_i32_1 = arith.constant 0 : i32
    return %arg0, %c0_i32, %c0_i32_0 : i32, i32, i32
  }
}

module attributes {stable_mosaic.version = 11 : i64} {
  func.func @_attention_kernel(%arg0: i32, %arg1: i32, %arg2: memref<1xf32, #tpu.memory_space<smem>>, %arg3: memref<1x2x128xf32, #tpu.memory_space<vmem>>, %arg4: memref<1x2x256xf32, #tpu.memory_space<vmem>>, %arg5: memref<1x16x256xf32, #tpu.memory_space<vmem>>, %arg6: memref<1x16x128xf32, #tpu.memory_space<vmem>>, %arg7: memref<1x16x1xf32, #tpu.memory_space<vmem>>, %arg8: memref<1x16x1xf32, #tpu.memory_space<vmem>>, %arg9: memref<1x16x128xf32, #tpu.memory_space<vmem>>, %arg10: memref<1x128x256xf32, #tpu.memory_space<vmem>>) attributes {dimension_semantics = [#tpu.dimension_semantics<parallel>, #tpu.dimension_semantics<parallel>], iteration_bounds = array<i64: 2, 2>, scalar_prefetch = 0 : i64, scratch_operands = 0 : i64, tpu.core_type = #tpu.core_type<tc>, window_params = [{transform_indices = @transform_0, window_bounds = array<i64: 1>}, {transform_indices = @transform_1, window_bounds = array<i64: 1, 2, 128>}, {transform_indices = @transform_2, window_bounds = array<i64: 1, 2, 256>}, {transform_indices = @transform_3, window_bounds = array<i64: 1, 16, 256>}, {transform_indices = @transform_4, window_bounds = array<i64: 1, 16, 128>}, {transform_indices = @transform_5, window_bounds = array<i64: 1, 16, 1>}, {transform_indices = @transform_6, window_bounds = array<i64: 1, 16, 1>}, {transform_indices = @transform_7, window_bounds = array<i64: 1, 16, 128>}, {transform_indices = @transform_8, window_bounds = array<i64: 1, 128, 256>}]} {
    %c0 = arith.constant 0 : index
    %c0_0 = arith.constant 0 : index
    %c0_1 = arith.constant 0 : index
    %0 = vector.load %arg3[%c0, %c0_0, %c0_1] : memref<1x2x128xf32, #tpu.memory_space<vmem>>, vector<1x2x128xf32>
    %1 = vector.shape_cast %0 : vector<1x2x128xf32> to vector<2x128xf32>
    %2 = arith.truncf %1 : vector<2x128xf32> to vector<2x128xbf16>
    %c0_2 = arith.constant 0 : index
    %c0_3 = arith.constant 0 : index
    %c0_4 = arith.constant 0 : index
    %3 = vector.load %arg4[%c0_2, %c0_3, %c0_4] : memref<1x2x256xf32, #tpu.memory_space<vmem>>, vector<1x2x256xf32>
    %4 = vector.shape_cast %3 : vector<1x2x256xf32> to vector<2x256xf32>
    %5 = arith.truncf %4 : vector<2x256xf32> to vector<2x256xbf16>
    %cst = arith.constant dense<0.000000e+00> : vector<128x256xf32>
    %6 = tpu.matmul %2, %5, %cst {dimension_numbers = #tpu.dot_dimension_numbers<[0], [0], [1], [1], [0, 1, 1, 1], [], []>} : vector<2x128xbf16>, vector<2x256xbf16>, vector<128x256xf32> -> vector<128x256xf32>
    %cst_5 = arith.constant dense<0xFF800000> : vector<128xf32>
    %7 = vector.multi_reduction <maximumf>, %6, %cst_5 [1] : vector<128x256xf32> to vector<128xf32>
    %8 = vector.shape_cast %7 : vector<128xf32> to vector<128x1xf32>
    %9 = vector.broadcast %8 : vector<128x1xf32> to vector<128x256xf32>
    %10 = arith.subf %6, %9 : vector<128x256xf32>
    %11 = math.exp %10 : vector<128x256xf32>
    %cst_6 = arith.constant dense<0.000000e+00> : vector<128xf32>
    %12 = vector.multi_reduction <add>, %11, %cst_6 [1] : vector<128x256xf32> to vector<128xf32>
    %13 = vector.shape_cast %12 : vector<128xf32> to vector<128x1xf32>
    %14 = tpu.reciprocal %13 {approx = true} : vector<128x1xf32> -> vector<128x1xf32>
    %15 = vector.broadcast %14 : vector<128x1xf32> to vector<128x256xf32>
    %16 = arith.mulf %11, %15 : vector<128x256xf32>
    %c0_7 = arith.constant 0 : index
    %c0_8 = arith.constant 0 : index
    %c0_9 = arith.constant 0 : index
    %17 = vector.load %arg10[%c0_7, %c0_8, %c0_9] : memref<1x128x256xf32, #tpu.memory_space<vmem>>, vector<1x128x256xf32>
    %18 = vector.shape_cast %17 : vector<1x128x256xf32> to vector<128x256xf32>
    %19 = vector.shape_cast %16 : vector<128x256xf32> to vector<1x128x256xf32>
    tpu.vector_store %arg10[%c0_7, %c0_8, %c0_9], %19 {strides = array<i32>} : memref<1x128x256xf32, #tpu.memory_space<vmem>>, vector<1x128x256xf32>,
    %20 = tpu.transpose %16, [1, 0] : vector<128x256xf32> -> vector<256x128xf32>
    %21 = arith.truncf %20 : vector<256x128xf32> to vector<256x128xbf16>
    %c0_10 = arith.constant 0 : index
    %c0_11 = arith.constant 0 : index
    %c0_12 = arith.constant 0 : index
    %22 = vector.load %arg5[%c0_10, %c0_11, %c0_12] : memref<1x16x256xf32, #tpu.memory_space<vmem>>, vector<1x16x256xf32>
    %23 = vector.shape_cast %22 : vector<1x16x256xf32> to vector<16x256xf32>
    %24 = arith.truncf %23 : vector<16x256xf32> to vector<16x256xbf16>
    %cst_13 = arith.constant dense<0.000000e+00> : vector<16x128xf32>
    %25 = tpu.matmul %24, %21, %cst_13 {dimension_numbers = #tpu.dot_dimension_numbers<[1], [0], [0], [1], [0, 0, 1, 1], [], []>} : vector<16x256xbf16>, vector<256x128xbf16>, vector<16x128xf32> -> vector<16x128xf32>
    %c0_14 = arith.constant 0 : index
    %26 = memref.load %arg2[%c0_14] : memref<1xf32, #tpu.memory_space<smem>>
    %c0_15 = arith.constant 0 : index
    %c0_16 = arith.constant 0 : index
    %c0_17 = arith.constant 0 : index
    %27 = vector.load %arg6[%c0_15, %c0_16, %c0_17] : memref<1x16x128xf32, #tpu.memory_space<vmem>>, vector<1x16x128xf32>
    %28 = vector.shape_cast %27 : vector<1x16x128xf32> to vector<16x128xf32>
    %c0_18 = arith.constant 0 : index
    %c0_19 = arith.constant 0 : index
    %c0_20 = arith.constant 0 : index
    %29 = vector.load %arg7[%c0_18, %c0_19, %c0_20] : memref<1x16x1xf32, #tpu.memory_space<vmem>>, vector<1x16x1xf32>
    %30 = vector.shape_cast %29 : vector<1x16x1xf32> to vector<16x1xf32>
    %31 = vector.broadcast %30 : vector<16x1xf32> to vector<16x128xf32>
    %32 = arith.subf %28, %31 : vector<16x128xf32>
    %c0_21 = arith.constant 0 : index
    %c0_22 = arith.constant 0 : index
    %c0_23 = arith.constant 0 : index
    %33 = vector.load %arg8[%c0_21, %c0_22, %c0_23] : memref<1x16x1xf32, #tpu.memory_space<vmem>>, vector<1x16x1xf32>
    %34 = vector.shape_cast %33 : vector<1x16x1xf32> to vector<16x1xf32>
    %35 = vector.broadcast %34 : vector<16x1xf32> to vector<16x128xf32>
    %36 = arith.mulf %32, %35 : vector<16x128xf32>
    %cst_24 = arith.constant 0.000000e+00 : f32
    %37 = vector.broadcast %cst_24 : f32 to vector<16x128xf32>
    %38 = arith.cmpf oge, %25, %37 : vector<16x128xf32>
    %cst_25 = arith.constant 2.000000e-01 : f32
    %39 = vector.broadcast %cst_25 : f32 to vector<16x128xf32>
    %40 = arith.mulf %39, %25 : vector<16x128xf32>
    %41 = arith.select %38, %25, %40 : vector<16x128xi1>, vector<16x128xf32>
    %42 = vector.broadcast %26 : f32 to vector<16x128xf32>
    %43 = arith.mulf %42, %41 : vector<16x128xf32>
    %cst_26 = arith.constant 1.000000e+00 : f32
    %44 = arith.subf %cst_26, %26 : f32
    %cst_27 = arith.constant 0.000000e+00 : f32
    %45 = vector.broadcast %cst_27 : f32 to vector<16x128xf32>
    %46 = arith.cmpf oge, %36, %45 : vector<16x128xf32>
    %cst_28 = arith.constant 2.000000e-01 : f32
    %47 = vector.broadcast %cst_28 : f32 to vector<16x128xf32>
    %48 = arith.mulf %47, %36 : vector<16x128xf32>
    %49 = arith.select %46, %36, %48 : vector<16x128xi1>, vector<16x128xf32>
    %50 = vector.broadcast %44 : f32 to vector<16x128xf32>
    %51 = arith.mulf %50, %49 : vector<16x128xf32>
    %52 = arith.addf %43, %51 : vector<16x128xf32>
    %c0_29 = arith.constant 0 : index
    %c0_30 = arith.constant 0 : index
    %c0_31 = arith.constant 0 : index
    %53 = vector.load %arg9[%c0_29, %c0_30, %c0_31] : memref<1x16x128xf32, #tpu.memory_space<vmem>>, vector<1x16x128xf32>
    %54 = vector.shape_cast %53 : vector<1x16x128xf32> to vector<16x128xf32>
    %55 = vector.shape_cast %52 : vector<16x128xf32> to vector<1x16x128xf32>
    tpu.vector_store %arg9[%c0_29, %c0_30, %c0_31], %55 {strides = array<i32>} : memref<1x16x128xf32, #tpu.memory_space<vmem>>, vector<1x16x128xf32>,
    return
  }
  func.func @transform_0(%arg0: i32, %arg1: i32) -> i32 {
    %c0_i32 = arith.constant 0 : i32
    %c0_i32_0 = arith.constant 0 : i32
    return %c0_i32 : i32
  }
  func.func @transform_1(%arg0: i32, %arg1: i32) -> (i32, i32, i32) {
    %c0_i32 = arith.constant 0 : i32
    %c0_i32_0 = arith.constant 0 : i32
    return %arg0, %c0_i32, %arg1 : i32, i32, i32
  }
  func.func @transform_2(%arg0: i32, %arg1: i32) -> (i32, i32, i32) {
    %c0_i32 = arith.constant 0 : i32
    %c0_i32_0 = arith.constant 0 : i32
    %c0_i32_1 = arith.constant 0 : i32
    return %arg0, %c0_i32, %c0_i32_0 : i32, i32, i32
  }
  func.func @transform_3(%arg0: i32, %arg1: i32) -> (i32, i32, i32) {
    %c0_i32 = arith.constant 0 : i32
    %c0_i32_0 = arith.constant 0 : i32
    %c0_i32_1 = arith.constant 0 : i32
    return %arg0, %c0_i32, %c0_i32_0 : i32, i32, i32
  }
  func.func @transform_4(%arg0: i32, %arg1: i32) -> (i32, i32, i32) {
    %c0_i32 = arith.constant 0 : i32
    %c0_i32_0 = arith.constant 0 : i32
    return %arg0, %c0_i32, %arg1 : i32, i32, i32
  }
  func.func @transform_5(%arg0: i32, %arg1: i32) -> (i32, i32, i32) {
    %c0_i32 = arith.constant 0 : i32
    %c0_i32_0 = arith.constant 0 : i32
    %c0_i32_1 = arith.constant 0 : i32
    return %arg0, %c0_i32, %c0_i32_0 : i32, i32, i32
  }
  func.func @transform_6(%arg0: i32, %arg1: i32) -> (i32, i32, i32) {
    %c0_i32 = arith.constant 0 : i32
    %c0_i32_0 = arith.constant 0 : i32
    %c0_i32_1 = arith.constant 0 : i32
    return %arg0, %c0_i32, %c0_i32_0 : i32, i32, i32
  }
  func.func @transform_7(%arg0: i32, %arg1: i32) -> (i32, i32, i32) {
    %c0_i32 = arith.constant 0 : i32
    %c0_i32_0 = arith.constant 0 : i32
    return %arg0, %c0_i32, %arg1 : i32, i32, i32
  }
  func.func @transform_8(%arg0: i32, %arg1: i32) -> (i32, i32, i32) {
    %c0_i32 = arith.constant 0 : i32
    %c0_i32_0 = arith.constant 0 : i32
    return %arg0, %arg1, %c0_i32 : i32, i32, i32
  }
}

</mosaic_0001>

<llo_original>
// kernel: full_attention_forward.3
$region0: #{full_attention_forward.3}
  #allocation0 [shape = 'u32[]', space=smem, size = 0x4, offset = 0x4, fixed_abs, tag = 'smem constant byte address 0x4 - core index']
  #allocation1 [shape = 'u32[144,128]{1,0:T(1,128)}', space=vmem, size = 0x12000, scoped, tag = 'internal scratch']
  #allocation2 [shape = 'f32[1]{0:T(128)S(6)}', space=smem, size = 0x200, scoped, tag = 'scoped memory for full_attention_forward.3']
  %s0 = inlined_call_operand.<no memory space> [shape: f32[1], index: 0, kind: input, shape index: {}]
  %s1 = inlined_call_operand.vmem [shape: f32[2,2,256], index: 1, kind: input, shape index: {}]
  %s2 = inlined_call_operand.vmem [shape: f32[2,2,256], index: 2, kind: input, shape index: {}]
  %s3 = inlined_call_operand.vmem [shape: f32[2,16,256], index: 3, kind: input, shape index: {}]
  %s4 = inlined_call_operand.vmem [shape: f32[2,16,256], index: 4, kind: input, shape index: {}]
  %s5 = inlined_call_operand.vmem [shape: f32[2,16,1], index: 5, kind: input, shape index: {}]
  %s6 = inlined_call_operand.vmem [shape: f32[2,16,1], index: 6, kind: input, shape index: {}]
  %s7 = inlined_call_operand.vmem [shape: f32[2,16,256], index: 7, kind: output, shape index: {0}]
  %s8 = inlined_call_operand.vmem [shape: f32[2,256,256], index: 8, kind: output, shape index: {1}]
  %9 = xla_tuple %s7, %s8
  %s10 = sld [smem:[#allocation0]]
  $region141: #{full_attention_forward.3} parent=0
    _
  %s12 = ssub.s32 1, %s10
  %s13 = scalar_select 0, %s12, %s10
  %14 = sst [smem:[#allocation2]] %s0
  $region1: #{full_attention_forward.3} parent=0
    #allocation3 [shape = 'u8[16384]{0}', space=vmem, size = 0x4000, scoped, tag = 'input window, operand 4']
    #allocation4 [shape = 'u8[16384]{0}', space=vmem, size = 0x4000, scoped, tag = 'output window, operand 0']
    loop: start=0, step=1, limit=6
    $region2: #{full_attention_forward.3} parent=1 // loop_pre_header
      _
    $region3: #{full_attention_forward.3} parent=1 // loop_header
      %s16 = sphi 0, %s20
      %p17 = scmp.ge.s32.totalorder %s16, 6
      %s23 = sphi 0, %s35
      %s24 = sphi 0, %s31
      %s25 = sphi 0, %s23
      %s26 = sphi 0, %s24
      %s27 = sphi 0, %s25
      %s28 = sphi 0, %s26
      %s36 = sphi 0, %s36
      %s38 = sphi 0, %s36
      %s39 = sphi 0, %s38
      %s53 = sphi 0, %s39
      %s61 = sphi 0, %s63
      %s64 = sphi 0, %s61
      %s65 = sphi 0, %s64
      %s81 = sphi 0, %s65
      %s87 = sphi 0, %s89
      %s90 = sphi 0, %s87
      %s91 = sphi 0, %s90
      %s107 = sphi 0, %s91
      %s113 = sphi 0, %s115
      %s116 = sphi 0, %s113
      %s117 = sphi 0, %s116
      %s133 = sphi 0, %s117
      %s141 = sphi 0, %s143
      %s144 = sphi 0, %s141
      %s145 = sphi 0, %s144
      %s161 = sphi 0, %s145
      %s167 = sphi 0, %s169
      %s170 = sphi 0, %s167
      %s171 = sphi 0, %s170
      %s187 = sphi 0, %s171
      %s193 = sphi 0, %s195
      %s196 = sphi 0, %s193
      %s197 = sphi 0, %s196
      %s213 = sphi 0, %s197
      %s221 = sphi 0, %s223
      %s224 = sphi 0, %s221
      %s225 = sphi 0, %s224
      %s241 = sphi 0, %s225
      %s249 = sphi 0, %s251
      %s252 = sphi 0, %s249
      %s253 = sphi 0, %s252
      %s269 = sphi 0, %s253
    $region4: #{full_attention_forward.3} parent=1 // loop_header_branch
      %19 = sbr.rel (%p17) target = $region8
    $region5: #{full_attention_forward.3} parent=1 // loop_body
      %s21 = ssub.s32 %s16, 1
      %s22 = ssub.s32 %s16, 2
      %s29 = sadd.s32 1, %s24
      %p30 = scmp.ge.s32.totalorder %s29, 2
      %s31 = scalar_select %p30, 0, %s29
      %s32 = sadd.s32 1, %s23
      %s33 = scalar_select %p30, %s32, %s23
      %p34 = scmp.ge.s32.totalorder %s33, 2
      %s35 = scalar_select %p34, 0, %s33
      %s37 = sadd.s32 %s36, 1
      %p40 = scmp.eq.s32.totalorder %s16, 3
      %p41 = scmp.ne.s32.totalorder %s36, %s38
      %p42 = scmp.eq.s32.totalorder %s16, 0
      %p43 = por %p41, %p42
      %p44 = scmp.ne.s32.totalorder %s36, %s38
      %p45 = scmp.eq.s32.totalorder %s21, 3
      %p46 = por %p44, %p45
      %p47 = scmp.ne.s32.totalorder %s38, %s39
      %p48 = scmp.eq.s32.totalorder %s21, 0
      %p49 = por %p47, %p48
      %p50 = scmp.ne.s32.totalorder %s38, %s39
      %p51 = scmp.eq.s32.totalorder %s22, 3
      %p52 = por %p50, %p51
      %p54 = scmp.ne.s32.totalorder %s39, %s53
      %p55 = scmp.eq.s32.totalorder %s22, 0
      %p56 = por %p54, %p55
      %s57 = ssub.s32 %s23, %s35
      %s58 = ssub.s32 %s24, %s31
      %s59 = sor.u32 %s57, %s58
      %p60 = scmp.eq.s32.totalorder %s59, 0
      %s62 = sadd.s32 %s61, 1
      %s63 = scalar_select %p60, %s61, %s62
      %p66 = pneg %p60
      %p67 = scmp.eq.s32.totalorder %s16, 3
      %p68 = por %p66, %p67
      %p69 = scmp.ne.s32.totalorder %s61, %s64
      %p70 = scmp.eq.s32.totalorder %s16, 0
      %p71 = por %p69, %p70
      %p72 = scmp.ne.s32.totalorder %s61, %s64
      %p73 = scmp.eq.s32.totalorder %s21, 3
      %p74 = por %p72, %p73
      %p75 = scmp.ne.s32.totalorder %s64, %s65
      %p76 = scmp.eq.s32.totalorder %s21, 0
      %p77 = por %p75, %p76
      %p78 = scmp.ne.s32.totalorder %s64, %s65
      %p79 = scmp.eq.s32.totalorder %s22, 3
      %p80 = por %p78, %p79
      %p82 = scmp.ne.s32.totalorder %s65, %s81
      %p83 = scmp.eq.s32.totalorder %s22, 0
      %p84 = por %p82, %p83
      %s85 = ssub.s32 %s23, %s35
      %p86 = scmp.eq.s32.totalorder %s85, 0
      %s88 = sadd.s32 %s87, 1
      %s89 = scalar_select %p86, %s87, %s88
      %p92 = pneg %p86
      %p93 = scmp.eq.s32.totalorder %s16, 3
      %p94 = por %p92, %p93
      %p95 = scmp.ne.s32.totalorder %s87, %s90
      %p96 = scmp.eq.s32.totalorder %s16, 0
      %p97 = por %p95, %p96
      %p98 = scmp.ne.s32.totalorder %s87, %s90
      %p99 = scmp.eq.s32.totalorder %s21, 3
      %p100 = por %p98, %p99
      %p101 = scmp.ne.s32.totalorder %s90, %s91
      %p102 = scmp.eq.s32.totalorder %s21, 0
      %p103 = por %p101, %p102
      %p104 = scmp.ne.s32.totalorder %s90, %s91
      %p105 = scmp.eq.s32.totalorder %s22, 3
      %p106 = por %p104, %p105
      %p108 = scmp.ne.s32.totalorder %s91, %s107
      %p109 = scmp.eq.s32.totalorder %s22, 0
      %p110 = por %p108, %p109
      %s111 = ssub.s32 %s23, %s35
      %p112 = scmp.eq.s32.totalorder %s111, 0
      %s114 = sadd.s32 %s113, 1
      %s115 = scalar_select %p112, %s113, %s114
      %p118 = pneg %p112
      %p119 = scmp.eq.s32.totalorder %s16, 3
      %p120 = por %p118, %p119
      %p121 = scmp.ne.s32.totalorder %s113, %s116
      %p122 = scmp.eq.s32.totalorder %s16, 0
      %p123 = por %p121, %p122
      %p124 = scmp.ne.s32.totalorder %s113, %s116
      %p125 = scmp.eq.s32.totalorder %s21, 3
      %p126 = por %p124, %p125
      %p127 = scmp.ne.s32.totalorder %s116, %s117
      %p128 = scmp.eq.s32.totalorder %s21, 0
      %p129 = por %p127, %p128
      %p130 = scmp.ne.s32.totalorder %s116, %s117
      %p131 = scmp.eq.s32.totalorder %s22, 3
      %p132 = por %p130, %p131
      %p134 = scmp.ne.s32.totalorder %s117, %s133
      %p135 = scmp.eq.s32.totalorder %s22, 0
      %p136 = por %p134, %p135
      %s137 = ssub.s32 %s23, %s35
      %s138 = ssub.s32 %s24, %s31
      %s139 = sor.u32 %s137, %s138
      %p140 = scmp.eq.s32.totalorder %s139, 0
      %s142 = sadd.s32 %s141, 1
      %s143 = scalar_select %p140, %s141, %s142
      %p146 = pneg %p140
      %p147 = scmp.eq.s32.totalorder %s16, 3
      %p148 = por %p146, %p147
      %p149 = scmp.ne.s32.totalorder %s141, %s144
      %p150 = scmp.eq.s32.totalorder %s16, 0
      %p151 = por %p149, %p150
      %p152 = scmp.ne.s32.totalorder %s141, %s144
      %p153 = scmp.eq.s32.totalorder %s21, 3
      %p154 = por %p152, %p153
      %p155 = scmp.ne.s32.totalorder %s144, %s145
      %p156 = scmp.eq.s32.totalorder %s21, 0
      %p157 = por %p155, %p156
      %p158 = scmp.ne.s32.totalorder %s144, %s145
      %p159 = scmp.eq.s32.totalorder %s22, 3
      %p160 = por %p158, %p159
      %p162 = scmp.ne.s32.totalorder %s145, %s161
      %p163 = scmp.eq.s32.totalorder %s22, 0
      %p164 = por %p162, %p163
      %s165 = ssub.s32 %s23, %s35
      %p166 = scmp.eq.s32.totalorder %s165, 0
      %s168 = sadd.s32 %s167, 1
      %s169 = scalar_select %p166, %s167, %s168
      %p172 = pneg %p166
      %p173 = scmp.eq.s32.totalorder %s16, 3
      %p174 = por %p172, %p173
      %p175 = scmp.ne.s32.totalorder %s167, %s170
      %p176 = scmp.eq.s32.totalorder %s16, 0
      %p177 = por %p175, %p176
      %p178 = scmp.ne.s32.totalorder %s167, %s170
      %p179 = scmp.eq.s32.totalorder %s21, 3
      %p180 = por %p178, %p179
      %p181 = scmp.ne.s32.totalorder %s170, %s171
      %p182 = scmp.eq.s32.totalorder %s21, 0
      %p183 = por %p181, %p182
      %p184 = scmp.ne.s32.totalorder %s170, %s171
      %p185 = scmp.eq.s32.totalorder %s22, 3
      %p186 = por %p184, %p185
      %p188 = scmp.ne.s32.totalorder %s171, %s187
      %p189 = scmp.eq.s32.totalorder %s22, 0
      %p190 = por %p188, %p189
      %s191 = ssub.s32 %s23, %s35
      %p192 = scmp.eq.s32.totalorder %s191, 0
      %s194 = sadd.s32 %s193, 1
      %s195 = scalar_select %p192, %s193, %s194
      %p198 = pneg %p192
      %p199 = scmp.eq.s32.totalorder %s16, 3
      %p200 = por %p198, %p199
      %p201 = scmp.ne.s32.totalorder %s193, %s196
      %p202 = scmp.eq.s32.totalorder %s16, 0
      %p203 = por %p201, %p202
      %p204 = scmp.ne.s32.totalorder %s193, %s196
      %p205 = scmp.eq.s32.totalorder %s21, 3
      %p206 = por %p204, %p205
      %p207 = scmp.ne.s32.totalorder %s196, %s197
      %p208 = scmp.eq.s32.totalorder %s21, 0
      %p209 = por %p207, %p208
      %p210 = scmp.ne.s32.totalorder %s196, %s197
      %p211 = scmp.eq.s32.totalorder %s22, 3
      %p212 = por %p210, %p211
      %p214 = scmp.ne.s32.totalorder %s197, %s213
      %p215 = scmp.eq.s32.totalorder %s22, 0
      %p216 = por %p214, %p215
      %s217 = ssub.s32 %s23, %s35
      %s218 = ssub.s32 %s24, %s31
      %s219 = sor.u32 %s217, %s218
      %p220 = scmp.eq.s32.totalorder %s219, 0
      %s222 = sadd.s32 %s221, 1
      %s223 = scalar_select %p220, %s221, %s222
      %p226 = pneg %p220
      %p227 = scmp.eq.s32.totalorder %s16, 3
      %p228 = por %p226, %p227
      %p229 = scmp.ne.s32.totalorder %s221, %s224
      %p230 = scmp.eq.s32.totalorder %s16, 0
      %p231 = por %p229, %p230
      %p232 = scmp.ne.s32.totalorder %s221, %s224
      %p233 = scmp.eq.s32.totalorder %s21, 3
      %p234 = por %p232, %p233
      %p235 = scmp.ne.s32.totalorder %s224, %s225
      %p236 = scmp.eq.s32.totalorder %s21, 0
      %p237 = por %p235, %p236
      %p238 = scmp.ne.s32.totalorder %s224, %s225
      %p239 = scmp.eq.s32.totalorder %s22, 3
      %p240 = por %p238, %p239
      %p242 = scmp.ne.s32.totalorder %s225, %s241
      %p243 = scmp.eq.s32.totalorder %s22, 0
      %p244 = por %p242, %p243
      %s245 = ssub.s32 %s23, %s35
      %s246 = ssub.s32 %s24, %s31
      %s247 = sor.u32 %s245, %s246
      %p248 = scmp.eq.s32.totalorder %s247, 0
      %s250 = sadd.s32 %s249, 1
      %s251 = scalar_select %p248, %s249, %s250
      %p254 = pneg %p248
      %p255 = scmp.eq.s32.totalorder %s16, 3
      %p256 = por %p254, %p255
      %p257 = scmp.ne.s32.totalorder %s249, %s252
      %p258 = scmp.eq.s32.totalorder %s16, 0
      %p259 = por %p257, %p258
      %p260 = scmp.ne.s32.totalorder %s249, %s252
      %p261 = scmp.eq.s32.totalorder %s21, 3
      %p262 = por %p260, %p261
      %p263 = scmp.ne.s32.totalorder %s252, %s253
      %p264 = scmp.eq.s32.totalorder %s21, 0
      %p265 = por %p263, %p264
      %p266 = scmp.ne.s32.totalorder %s252, %s253
      %p267 = scmp.eq.s32.totalorder %s22, 3
      %p268 = por %p266, %p267
      %p270 = scmp.ne.s32.totalorder %s253, %s269
      %p271 = scmp.eq.s32.totalorder %s22, 0
      %p272 = por %p270, %p271
      %p273 = scmp.le.s32.totalorder 1, %s16
      %p274 = scmp.lt.s32.totalorder %s16, 5
      %p275 = pnand %p273, %p274
      %p276 = pneg %p275
      // Predicated region
      $region9: #{full_attention_forward.3} parent=5 // pred_check
        _
      $region10: #{full_attention_forward.3} parent=5 // pred_check_branch
        %278 = sbr.rel (%p275) target = $region12
      $region11: #{full_attention_forward.3} parent=5 // pred_region
        %s279 = ssub.s32 %s16, 1
        // Predicated region
        $region13: #{full_attention_forward.3} parent=11 // pred_check
          %p280 = pneg %p49
        $region14: #{full_attention_forward.3} parent=11 // pred_check_branch
          %282 = sbr.rel (%p280) target = $region16
        $region15: #{full_attention_forward.3} parent=11 // pred_region
          _
        $region16: #{full_attention_forward.3} parent=11 // pred_fallthru
          _
      $region12: #{full_attention_forward.3} parent=5 // pred_fallthru
        _
      %p283 = scmp.lt.s32.totalorder %s16, 4
      // Predicated region
      $region17: #{full_attention_forward.3} parent=5 // pred_check
        %p284 = pneg %p283
      $region18: #{full_attention_forward.3} parent=5 // pred_check_branch
        %286 = sbr.rel (%p284) target = $region20
      $region19: #{full_attention_forward.3} parent=5 // pred_region
        // Predicated region
        $region21: #{full_attention_forward.3} parent=19 // pred_check
          %p287 = pneg %p71
        $region22: #{full_attention_forward.3} parent=19 // pred_check_branch
          %289 = sbr.rel (%p287) target = $region24
        $region23: #{full_attention_forward.3} parent=19 // pred_region
          %p290 = scmp.lt.s32.totalorder %s23, 1
          %s291 = scalar_select %p290, %s23, 1
          %p292 = scmp.lt.s32.totalorder %s24, 1
          %s293 = scalar_select %p292, %s24, 1
          %s294 = smul.addr %s291, 2
          %s295 = sadd.s32 %s293, %s294
          %s296 = smul.addr %s295, 2
          %s297 = scalar_lea.vmem %s1, %s296
        $region24: #{full_attention_forward.3} parent=19 // pred_fallthru
          _
        // Predicated region
        $region25: #{full_attention_forward.3} parent=19 // pred_check
          %p298 = pneg %p97
        $region26: #{full_attention_forward.3} parent=19 // pred_check_branch
          %300 = sbr.rel (%p298) target = $region28
        $region27: #{full_attention_forward.3} parent=19 // pred_region
          %p301 = scmp.lt.s32.totalorder %s23, 1
          %s302 = scalar_select %p301, %s23, 1
          %s303 = smul.addr %s302, 2
          %s304 = smul.addr %s303, 2
          %s305 = scalar_lea.vmem %s2, %s304
        $region28: #{full_attention_forward.3} parent=19 // pred_fallthru
          _
        // Predicated region
        $region29: #{full_attention_forward.3} parent=19 // pred_check
          %p306 = pneg %p123
        $region30: #{full_attention_forward.3} parent=19 // pred_check_branch
          %308 = sbr.rel (%p306) target = $region32
        $region31: #{full_attention_forward.3} parent=19 // pred_region
          %p309 = scmp.lt.s32.totalorder %s23, 1
          %s310 = scalar_select %p309, %s23, 1
          %s311 = smul.addr %s310, 4
          %s312 = smul.addr %s311, 8
          %s313 = scalar_lea.vmem %s3, %s312
        $region32: #{full_attention_forward.3} parent=19 // pred_fallthru
          _
        // Predicated region
        $region33: #{full_attention_forward.3} parent=19 // pred_check
          %p314 = pneg %p151
        $region34: #{full_attention_forward.3} parent=19 // pred_check_branch
          %316 = sbr.rel (%p314) target = $region36
        $region35: #{full_attention_forward.3} parent=19 // pred_region
          %s317 = sand.u32 %s141, 1
          %s318 = sand.u32 %s141, 1
          %s319 = smul.addr %s318, 16
          %s320 = scalar_lea.vmem [#allocation3], %s319
          %s321 = smul.addr %s23, 4
          %s322 = sadd.s32 %s24, %s321
          %s323 = smul.addr %s322, 8
          %s324 = scalar_lea.vmem %s4, %s323
          // Predicated region
          $region37: #{full_attention_forward.3} parent=35 // pred_check
            _
          $region38: #{full_attention_forward.3} parent=35 // pred_check_branch
            %326 = sbr.rel (0) target = $region40
          $region39: #{full_attention_forward.3} parent=35 // pred_region
            // Predicated region
            $region41: #{full_attention_forward.3} parent=39 // pred_check
              _
            $region42: #{full_attention_forward.3} parent=39 // pred_check_branch
              %328 = sbr.rel (0) target = $region44
            $region43: #{full_attention_forward.3} parent=39 // pred_region
              // Predicated region
              $region56: #{full_attention_forward.3} parent=43 // pred_check
                _
              $region57: #{full_attention_forward.3} parent=43 // pred_check_branch
                %345 = sbr.rel (0) target = $region59
              $region58: #{full_attention_forward.3} parent=43 // pred_region
                loop: start=0, step=1, limit=1
                $region60: #{full_attention_forward.3} parent=58 // loop_pre_header
                  _
                $region61: #{full_attention_forward.3} parent=58 // loop_header
                  %s347 = sphi 0, %s351
                  %p348 = scmp.ge.s32.totalorder %s347, 1
                  %s352 = sphi %s324, %s324
                  %s353 = sphi %s320, %s320
                $region62: #{full_attention_forward.3} parent=58 // loop_header_branch
                  %350 = sbr.rel (%p348) target = $region66
                $region63: #{full_attention_forward.3} parent=58 // loop_body
                  %v354 = vld [vmem:[%s352] sm:$0xff]
                  %355 = vst [vmem:[%s353] sm:$0xff] %v354
                  %v356 = vld [vmem:[%s352 + $0x10] sm:$0xff]
                  %357 = vst [vmem:[%s353 + $0x8] sm:$0xff] %v356
                $region64: #{full_attention_forward.3} parent=58 // loop_footer
                  %s351 = sadd.s32 1, %s347
                $region65: #{full_attention_forward.3} parent=58 // loop_footer_branch
                  %346 = sbr.rel target = $region61
                $region66: #{full_attention_forward.3} parent=58 // loop_exit
                  _
              $region59: #{full_attention_forward.3} parent=43 // pred_fallthru
                _
              // Predicated region
              $region67: #{full_attention_forward.3} parent=43 // pred_check
                _
              $region68: #{full_attention_forward.3} parent=43 // pred_check_branch
                %359 = sbr.rel target = $region70
              $region69: #{full_attention_forward.3} parent=43 // pred_region
                _
              $region70: #{full_attention_forward.3} parent=43 // pred_fallthru
                _
            $region44: #{full_attention_forward.3} parent=39 // pred_fallthru
              _
            // Predicated region
            $region45: #{full_attention_forward.3} parent=39 // pred_check
              _
            $region46: #{full_attention_forward.3} parent=39 // pred_check_branch
              %330 = sbr.rel target = $region48
            $region47: #{full_attention_forward.3} parent=39 // pred_region
              loop: start=0, step=1, limit=1
              $region49: #{full_attention_forward.3} parent=47 // loop_pre_header
                _
              $region50: #{full_attention_forward.3} parent=47 // loop_header
                %s333 = sphi 0, %s337
                %p334 = scmp.ge.s32.totalorder %s333, 1
                %s338 = sphi %s324, %s324
                %s339 = sphi %s320, %s320
              $region51: #{full_attention_forward.3} parent=47 // loop_header_branch
                %336 = sbr.rel (%p334) target = $region55
              $region52: #{full_attention_forward.3} parent=47 // loop_body
                %v340 = vld [vmem:[%s338] sm:$0xff]
                %341 = vst [vmem:[%s339] sm:$0xff] %v340
                %v342 = vld [vmem:[%s338 + $0x10] sm:$0xff]
                %343 = vst [vmem:[%s339 + $0x8] sm:$0xff] %v342
              $region53: #{full_attention_forward.3} parent=47 // loop_footer
                %s337 = sadd.s32 1, %s333
              $region54: #{full_attention_forward.3} parent=47 // loop_footer_branch
                %332 = sbr.rel target = $region50
              $region55: #{full_attention_forward.3} parent=47 // loop_exit
                _
            $region48: #{full_attention_forward.3} parent=39 // pred_fallthru
              _
          $region40: #{full_attention_forward.3} parent=35 // pred_fallthru
            _
          %360 = vnop
        $region36: #{full_attention_forward.3} parent=19 // pred_fallthru
          _
        // Predicated region
        $region71: #{full_attention_forward.3} parent=19 // pred_check
          %p361 = pneg %p177
        $region72: #{full_attention_forward.3} parent=19 // pred_check_branch
          %363 = sbr.rel (%p361) target = $region74
        $region73: #{full_attention_forward.3} parent=19 // pred_region
          %p364 = scmp.lt.s32.totalorder %s23, 1
          %s365 = scalar_select %p364, %s23, 1
          %s366 = smul.addr %s365, 2
          %s367 = smul.addr %s366, 8
          %s368 = scalar_lea.vmem %s5, %s367
        $region74: #{full_attention_forward.3} parent=19 // pred_fallthru
          _
        // Predicated region
        $region75: #{full_attention_forward.3} parent=19 // pred_check
          %p369 = pneg %p203
        $region76: #{full_attention_forward.3} parent=19 // pred_check_branch
          %371 = sbr.rel (%p369) target = $region78
        $region77: #{full_attention_forward.3} parent=19 // pred_region
          %p372 = scmp.lt.s32.totalorder %s23, 1
          %s373 = scalar_select %p372, %s23, 1
          %s374 = smul.addr %s373, 2
          %s375 = smul.addr %s374, 8
          %s376 = scalar_lea.vmem %s6, %s375
        $region78: #{full_attention_forward.3} parent=19 // pred_fallthru
          _
      $region20: #{full_attention_forward.3} parent=5 // pred_fallthru
        _
      %p377 = scmp.le.s32.totalorder 1, %s16
      %p378 = scmp.lt.s32.totalorder %s16, 5
      %p379 = pnand %p377, %p378
      %p380 = pneg %p379
      // Predicated region
      $region79: #{full_attention_forward.3} parent=5 // pred_check
        _
      $region80: #{full_attention_forward.3} parent=5 // pred_check_branch
        %382 = sbr.rel (%p379) target = $region82
      $region81: #{full_attention_forward.3} parent=5 // pred_region
        %s383 = ssub.s32 %s16, 1
        %s384 = sand.u32 %s144, 1
        %s385 = sand.u32 %s144, 1
        %s386 = smul.addr %s385, 16
        %s387 = scalar_lea.vmem [#allocation3], %s386
        // Predicated region
        $region83: #{full_attention_forward.3} parent=81 // pred_check
          %p388 = pneg %p157
        $region84: #{full_attention_forward.3} parent=81 // pred_check_branch
          %390 = sbr.rel (%p388) target = $region86
        $region85: #{full_attention_forward.3} parent=81 // pred_region
          _
        $region86: #{full_attention_forward.3} parent=81 // pred_fallthru
          _
        %p391 = pneg %p49
        %p392 = pneg %p46
        %p393 = scmp.lt.s32.totalorder %s25, 1
        %s394 = scalar_select %p393, %s25, 1
        %p395 = scmp.lt.s32.totalorder %s26, 1
        %s396 = scalar_select %p395, %s26, 1
        %s397 = smul.addr %s394, 2
        %s398 = sadd.s32 %s396, %s397
        %s399 = smul.addr %s398, 2
        %s400 = scalar_lea.vmem %s1, %s399
        %p401 = pneg %p77
        %p402 = pneg %p74
        %p403 = scmp.lt.s32.totalorder %s25, 1
        %s404 = scalar_select %p403, %s25, 1
        %s405 = smul.addr %s404, 2
        %s406 = smul.addr %s405, 2
        %s407 = scalar_lea.vmem %s2, %s406
        %p408 = pneg %p103
        %p409 = pneg %p100
        %p410 = scmp.lt.s32.totalorder %s25, 1
        %s411 = scalar_select %p410, %s25, 1
        %s412 = smul.addr %s411, 4
        %s413 = smul.addr %s412, 8
        %s414 = scalar_lea.vmem %s3, %s413
        %p415 = pneg %p129
        %p416 = pneg %p126
        %s417 = sand.u32 %s144, 1
        %s418 = sand.u32 %s144, 1
        %s419 = smul.addr %s418, 16
        %s420 = scalar_lea.vmem [#allocation3], %s419
        %p421 = pneg %p157
        %p422 = pneg %p154
        %p423 = scmp.lt.s32.totalorder %s25, 1
        %s424 = scalar_select %p423, %s25, 1
        %s425 = smul.addr %s424, 2
        %s426 = smul.addr %s425, 8
        %s427 = scalar_lea.vmem %s5, %s426
        %p428 = pneg %p183
        %p429 = pneg %p180
        %p430 = scmp.lt.s32.totalorder %s25, 1
        %s431 = scalar_select %p430, %s25, 1
        %s432 = smul.addr %s431, 2
        %s433 = smul.addr %s432, 8
        %s434 = scalar_lea.vmem %s6, %s433
        %p435 = pneg %p209
        %p436 = pneg %p206
        %p437 = pneg %p237
        %p438 = pneg %p234
        %s439 = sand.u32 %s224, 1
        %s440 = sand.u32 %s224, 1
        %s441 = smul.addr %s440, 16
        %s442 = scalar_lea.vmem [#allocation4], %s441
        %p443 = pneg %p265
        %p444 = pneg %p262
        %s445 = smul.u32 16, %s26
        %p446 = scmp.lt.s32.totalorder %s25, 1
        %s447 = scalar_select %p446, %s25, 1
        %p448 = scmp.lt.s32.totalorder %s445, 31
        %s449 = scalar_select %p448, %s445, 31
        %s450 = smul.addr %s449, 2
        %s451 = smul.addr %s447, 64
        %s452 = sadd.s32 %s450, %s451
        %s453 = smul.addr %s452, 8
        %s454 = scalar_lea.vmem %s8, %s453
        %p455 = scmp.lt.s32.totalorder %s25, 1
        %s456 = scalar_select %p455, %s25, 1
        %p457 = scmp.lt.s32.totalorder %s26, 1
        %s458 = scalar_select %p457, %s26, 1
        %s459 = smul.addr %s456, 2
        %s460 = sadd.s32 %s458, %s459
        %s461 = smul.addr %s460, 2
        %s462 = scalar_lea.vmem %s1, %s461
        %p463 = scmp.lt.s32.totalorder %s25, 1
        %s464 = scalar_select %p463, %s25, 1
        %s465 = smul.addr %s464, 2
        %s466 = smul.addr %s465, 2
        %s467 = scalar_lea.vmem %s2, %s466
        %p468 = scmp.lt.s32.totalorder %s25, 1
        %s469 = scalar_select %p468, %s25, 1
        %s470 = smul.addr %s469, 4
        %s471 = smul.addr %s470, 8
        %s472 = scalar_lea.vmem %s3, %s471
        %p473 = scmp.lt.s32.totalorder %s25, 1
        %s474 = scalar_select %p473, %s25, 1
        %s475 = smul.addr %s474, 2
        %s476 = smul.addr %s475, 8
        %s477 = scalar_lea.vmem %s5, %s476
        %p478 = scmp.lt.s32.totalorder %s25, 1
        %s479 = scalar_select %p478, %s25, 1
        %s480 = smul.addr %s479, 2
        %s481 = smul.addr %s480, 8
        %s482 = scalar_lea.vmem %s6, %s481
        %s483 = smul.u32 16, %s26
        %p484 = scmp.lt.s32.totalorder %s25, 1
        %s485 = scalar_select %p484, %s25, 1
        %p486 = scmp.lt.s32.totalorder %s483, 31
        %s487 = scalar_select %p486, %s483, 31
        %s488 = smul.addr %s487, 2
        %s489 = smul.addr %s485, 64
        %s490 = sadd.s32 %s488, %s489
        %s491 = smul.addr %s490, 8
        %s492 = scalar_lea.vmem %s8, %s491
        %s493 = smul.u32 16, %s26
        %v495 = vld [vmem:[%s462] sm:$0x3]
        %v496 = vpack.c.bf16 %v495, %v495
        %v497 = vld [vmem:[%s467] sm:$0xf]
        %v500 = vunpack.c.l.s4 1983009808
        %v501 = vunpack.c.0.s8 %v500
        %v502 = vlaneseq
        %v503 = vshrl.u32 %v502, 7
        %v504 = vsub.s32 %v501, %v503
        %v505 = vrot.slane %v497, %v504
        %v506 = vcombine.high %v505, %v505
        %v509 = vpack.c.bf16 %v505, %v505
        %v510 = vpack.c.bf16 %v506, %v506
        %511 = vxpose.xlu0.c.b16.start [1/8] %v496, 128
        %512 = vxpose.xlu0.c.b16.cont [2/8] 0, 128
        %513 = vxpose.xlu0.c.b16.cont [3/8] 0, 128
        %514 = vxpose.xlu0.c.b16.cont [4/8] 0, 128
        %515 = vxpose.xlu0.c.b16.cont [5/8] 0, 128
        %516 = vxpose.xlu0.c.b16.cont [6/8] 0, 128
        %517 = vxpose.xlu0.c.b16.cont [7/8] 0, 128
        %518 = vxpose.xlu0.c.b16.end [8/8] 0, 128
        %v519 = vpop.trf.xlu0
        %v520 = vpop.trf.xlu0
        %v521 = vpop.trf.xlu0
        %v522 = vpop.trf.xlu0
        %v523 = vpop.trf.xlu0
        %v524 = vpop.trf.xlu0
        %v525 = vpop.trf.xlu0
        %v526 = vpop.trf.xlu0
        %vm527 = vcmask 15360
        %v529 = vsel %vm527, %v519, 0
        %v532 = vsel %vm527, %v520, 0
        %v535 = vsel %vm527, %v521, 0
        %v538 = vsel %vm527, %v522, 0
        %v541 = vsel %vm527, %v523, 0
        %v544 = vsel %vm527, %v524, 0
        %v547 = vsel %vm527, %v525, 0
        %v550 = vsel %vm527, %v526, 0
        %vm552 = vcmask 1040384
        %v554 = vsel %vm552, %v509, 0
        %v557 = vsel %vm552, %v510, 0
        %559 = vmatprep.subr.bf16.mxu0 %v557
        %560 = vmatpush1.bf16.msra.mxu0 %v554
        %561 = vmatprep.subr.bf16.mxu0 0
        %562 = vmatpush1.bf16.msra.mxu0 0
        %563 = vmatprep.subr.bf16.mxu0 0
        %564 = vmatpush1.bf16.msra.mxu0 0
        %565 = vmatprep.subr.bf16.mxu0 0
        %566 = vmatpush1.bf16.msra.mxu0 0
        %567 = vmatprep.subr.bf16.mxu0 0
        %568 = vmatpush1.bf16.msra.mxu0 0
        %569 = vmatprep.subr.bf16.mxu0 0
        %570 = vmatpush1.bf16.msra.mxu0 0
        %571 = vmatprep.subr.bf16.mxu0 0
        %572 = vmatpush1.bf16.msra.mxu0 0
        %573 = vmatprep.subr.bf16.mxu0 0
        %574 = vmatpush1.bf16.msra.mxu0 0
        %575 = vmatprep.subr.bf16.mxu0 0
        %576 = vmatpush1.bf16.msra.mxu0 0
        %577 = vmatprep.subr.bf16.mxu0 0
        %578 = vmatpush1.bf16.msra.mxu0 0
        %579 = vmatprep.subr.bf16.mxu0 0
        %580 = vmatpush1.bf16.msra.mxu0 0
        %581 = vmatprep.subr.bf16.mxu0 0
        %582 = vmatpush1.bf16.msra.mxu0 0
        %583 = vmatprep.subr.bf16.mxu0 0
        %584 = vmatpush1.bf16.msra.mxu0 0
        %585 = vmatprep.subr.bf16.mxu0 0
        %586 = vmatpush1.bf16.msra.mxu0 0
        %587 = vmatprep.subr.bf16.mxu0 0
        %588 = vmatpush1.bf16.msra.mxu0 0
        %589 = vmatprep.subr.bf16.mxu0 0
        %590 = vmatpush1.bf16.msra.mxu0 0
        %591 = vmatprep.mubr.bf16.mxu0 0
        %592 = vmatmul.mubr.bf16.gmra.mrb[0].mxu0 %v529
        %v593 = vpop.f32.mrb[0].mxu0
        %v594 = vadd.f32 0.0, %v593
        %v595 = vpop.f32.mrb[0].mxu0
        %v596 = vadd.f32 0.0, %v595
        %v597 = vpop.f32.mrb[0].mxu0
        %v598 = vadd.f32 0.0, %v597
        %v599 = vpop.f32.mrb[0].mxu0
        %v600 = vadd.f32 0.0, %v599
        %601 = vmatprep.mubr.bf16.mxu0 0
        %602 = vmatmul.mubr.bf16.gmra.mrb[0].mxu0 %v532
        %v603 = vpop.f32.mrb[0].mxu0
        %v604 = vadd.f32 0.0, %v603
        %v605 = vpop.f32.mrb[0].mxu0
        %v606 = vadd.f32 0.0, %v605
        %v607 = vpop.f32.mrb[0].mxu0
        %v608 = vadd.f32 0.0, %v607
        %v609 = vpop.f32.mrb[0].mxu0
        %v610 = vadd.f32 0.0, %v609
        %611 = vmatprep.mubr.bf16.mxu0 0
        %612 = vmatmul.mubr.bf16.gmra.mrb[0].mxu0 %v535
        %v613 = vpop.f32.mrb[0].mxu0
        %v614 = vadd.f32 0.0, %v613
        %v615 = vpop.f32.mrb[0].mxu0
        %v616 = vadd.f32 0.0, %v615
        %v617 = vpop.f32.mrb[0].mxu0
        %v618 = vadd.f32 0.0, %v617
        %v619 = vpop.f32.mrb[0].mxu0
        %v620 = vadd.f32 0.0, %v619
        %621 = vmatprep.mubr.bf16.mxu0 0
        %622 = vmatmul.mubr.bf16.gmra.mrb[0].mxu0 %v538
        %v623 = vpop.f32.mrb[0].mxu0
        %v624 = vadd.f32 0.0, %v623
        %v625 = vpop.f32.mrb[0].mxu0
        %v626 = vadd.f32 0.0, %v625
        %v627 = vpop.f32.mrb[0].mxu0
        %v628 = vadd.f32 0.0, %v627
        %v629 = vpop.f32.mrb[0].mxu0
        %v630 = vadd.f32 0.0, %v629
        %631 = vmatprep.mubr.bf16.mxu0 0
        %632 = vmatmul.mubr.bf16.gmra.mrb[0].mxu0 %v541
        %v633 = vpop.f32.mrb[0].mxu0
        %v634 = vadd.f32 0.0, %v633
        %v635 = vpop.f32.mrb[0].mxu0
        %v636 = vadd.f32 0.0, %v635
        %v637 = vpop.f32.mrb[0].mxu0
        %v638 = vadd.f32 0.0, %v637
        %v639 = vpop.f32.mrb[0].mxu0
        %v640 = vadd.f32 0.0, %v639
        %641 = vmatprep.mubr.bf16.mxu0 0
        %642 = vmatmul.mubr.bf16.gmra.mrb[0].mxu0 %v544
        %v643 = vpop.f32.mrb[0].mxu0
        %v644 = vadd.f32 0.0, %v643
        %v645 = vpop.f32.mrb[0].mxu0
        %v646 = vadd.f32 0.0, %v645
        %v647 = vpop.f32.mrb[0].mxu0
        %v648 = vadd.f32 0.0, %v647
        %v649 = vpop.f32.mrb[0].mxu0
        %v650 = vadd.f32 0.0, %v649
        %651 = vmatprep.mubr.bf16.mxu0 0
        %652 = vmatmul.mubr.bf16.gmra.mrb[0].mxu0 %v547
        %v653 = vpop.f32.mrb[0].mxu0
        %v654 = vadd.f32 0.0, %v653
        %v655 = vpop.f32.mrb[0].mxu0
        %v656 = vadd.f32 0.0, %v655
        %v657 = vpop.f32.mrb[0].mxu0
        %v658 = vadd.f32 0.0, %v657
        %v659 = vpop.f32.mrb[0].mxu0
        %v660 = vadd.f32 0.0, %v659
        %661 = vmatprep.mubr.bf16.mxu0 0
        %662 = vmatmul.mubr.bf16.gmra.mrb[0].mxu0 %v550
        %v663 = vpop.f32.mrb[0].mxu0
        %v664 = vadd.f32 0.0, %v663
        %v665 = vpop.f32.mrb[0].mxu0
        %v666 = vadd.f32 0.0, %v665
        %v667 = vpop.f32.mrb[0].mxu0
        %v668 = vadd.f32 0.0, %v667
        %v669 = vpop.f32.mrb[0].mxu0
        %v670 = vadd.f32 0.0, %v669
        %671 = vdwg.mxu0
        %v672 = vmax.f32 %v594, %v596
        %673 = vmax.xlane.f32.xlu0 %v672
        %v674 = vpop.xlane.xlu0 %673
        %v675 = vmax.f32 %v598, %v600
        %676 = vmax.xlane.f32.xlu0 %v675
        %v677 = vpop.xlane.xlu0 %676
        %v678 = vmax.f32 %v604, %v606
        %679 = vmax.xlane.f32.xlu0 %v678
        %v680 = vpop.xlane.xlu0 %679
        %v681 = vmax.f32 %v608, %v610
        %682 = vmax.xlane.f32.xlu0 %v681
        %v683 = vpop.xlane.xlu0 %682
        %v684 = vmax.f32 %v614, %v616
        %685 = vmax.xlane.f32.xlu0 %v684
        %v686 = vpop.xlane.xlu0 %685
        %v687 = vmax.f32 %v618, %v620
        %688 = vmax.xlane.f32.xlu0 %v687
        %v689 = vpop.xlane.xlu0 %688
        %v690 = vmax.f32 %v624, %v626
        %691 = vmax.xlane.f32.xlu0 %v690
        %v692 = vpop.xlane.xlu0 %691
        %v693 = vmax.f32 %v628, %v630
        %694 = vmax.xlane.f32.xlu0 %v693
        %v695 = vpop.xlane.xlu0 %694
        %v696 = vmax.f32 %v634, %v636
        %697 = vmax.xlane.f32.xlu0 %v696
        %v698 = vpop.xlane.xlu0 %697
        %v699 = vmax.f32 %v638, %v640
        %700 = vmax.xlane.f32.xlu0 %v699
        %v701 = vpop.xlane.xlu0 %700
        %v702 = vmax.f32 %v644, %v646
        %703 = vmax.xlane.f32.xlu0 %v702
        %v704 = vpop.xlane.xlu0 %703
        %v705 = vmax.f32 %v648, %v650
        %706 = vmax.xlane.f32.xlu0 %v705
        %v707 = vpop.xlane.xlu0 %706
        %v708 = vmax.f32 %v654, %v656
        %709 = vmax.xlane.f32.xlu0 %v708
        %v710 = vpop.xlane.xlu0 %709
        %v711 = vmax.f32 %v658, %v660
        %712 = vmax.xlane.f32.xlu0 %v711
        %v713 = vpop.xlane.xlu0 %712
        %v714 = vmax.f32 %v664, %v666
        %715 = vmax.xlane.f32.xlu0 %v714
        %v716 = vpop.xlane.xlu0 %715
        %v717 = vmax.f32 %v668, %v670
        %718 = vmax.xlane.f32.xlu0 %v717
        %v719 = vpop.xlane.xlu0 %718
        %v720 = vsub.f32 %v594, %v674
        %v721 = vsub.f32 %v596, %v674
        %v722 = vsub.f32 %v598, %v677
        %v723 = vsub.f32 %v600, %v677
        %v724 = vsub.f32 %v604, %v680
        %v725 = vsub.f32 %v606, %v680
        %v726 = vsub.f32 %v608, %v683
        %v727 = vsub.f32 %v610, %v683
        %v728 = vsub.f32 %v614, %v686
        %v729 = vsub.f32 %v616, %v686
        %v730 = vsub.f32 %v618, %v689
        %v731 = vsub.f32 %v620, %v689
        %v732 = vsub.f32 %v624, %v692
        %v733 = vsub.f32 %v626, %v692
        %v734 = vsub.f32 %v628, %v695
        %v735 = vsub.f32 %v630, %v695
        %v736 = vsub.f32 %v634, %v698
        %v737 = vsub.f32 %v636, %v698
        %v738 = vsub.f32 %v638, %v701
        %v739 = vsub.f32 %v640, %v701
        %v740 = vsub.f32 %v644, %v704
        %v741 = vsub.f32 %v646, %v704
        %v742 = vsub.f32 %v648, %v707
        %v743 = vsub.f32 %v650, %v707
        %v744 = vsub.f32 %v654, %v710
        %v745 = vsub.f32 %v656, %v710
        %v746 = vsub.f32 %v658, %v713
        %v747 = vsub.f32 %v660, %v713
        %v748 = vsub.f32 %v664, %v716
        %v749 = vsub.f32 %v666, %v716
        %v750 = vsub.f32 %v668, %v719
        %v751 = vsub.f32 %v670, %v719
        %v752 = vmul.f32 %v720, 1.442695
        %v753 = vpow.pop %v752
        %v754 = vmul.f32 %v721, 1.442695
        %v755 = vpow.pop %v754
        %v756 = vmul.f32 %v722, 1.442695
        %v757 = vpow.pop %v756
        %v758 = vmul.f32 %v723, 1.442695
        %v759 = vpow.pop %v758
        %v760 = vmul.f32 %v724, 1.442695
        %v761 = vpow.pop %v760
        %v762 = vmul.f32 %v725, 1.442695
        %v763 = vpow.pop %v762
        %v764 = vmul.f32 %v726, 1.442695
        %v765 = vpow.pop %v764
        %v766 = vmul.f32 %v727, 1.442695
        %v767 = vpow.pop %v766
        %v768 = vmul.f32 %v728, 1.442695
        %v769 = vpow.pop %v768
        %v770 = vmul.f32 %v729, 1.442695
        %v771 = vpow.pop %v770
        %v772 = vmul.f32 %v730, 1.442695
        %v773 = vpow.pop %v772
        %v774 = vmul.f32 %v731, 1.442695
        %v775 = vpow.pop %v774
        %v776 = vmul.f32 %v732, 1.442695
        %v777 = vpow.pop %v776
        %v778 = vmul.f32 %v733, 1.442695
        %v779 = vpow.pop %v778
        %v780 = vmul.f32 %v734, 1.442695
        %v781 = vpow.pop %v780
        %v782 = vmul.f32 %v735, 1.442695
        %v783 = vpow.pop %v782
        %v784 = vmul.f32 %v736, 1.442695
        %v785 = vpow.pop %v784
        %v786 = vmul.f32 %v737, 1.442695
        %v787 = vpow.pop %v786
        %v788 = vmul.f32 %v738, 1.442695
        %v789 = vpow.pop %v788
        %v790 = vmul.f32 %v739, 1.442695
        %v791 = vpow.pop %v790
        %v792 = vmul.f32 %v740, 1.442695
        %v793 = vpow.pop %v792
        %v794 = vmul.f32 %v741, 1.442695
        %v795 = vpow.pop %v794
        %v796 = vmul.f32 %v742, 1.442695
        %v797 = vpow.pop %v796
        %v798 = vmul.f32 %v743, 1.442695
        %v799 = vpow.pop %v798
        %v800 = vmul.f32 %v744, 1.442695
        %v801 = vpow.pop %v800
        %v802 = vmul.f32 %v745, 1.442695
        %v803 = vpow.pop %v802
        %v804 = vmul.f32 %v746, 1.442695
        %v805 = vpow.pop %v804
        %v806 = vmul.f32 %v747, 1.442695
        %v807 = vpow.pop %v806
        %v808 = vmul.f32 %v748, 1.442695
        %v809 = vpow.pop %v808
        %v810 = vmul.f32 %v749, 1.442695
        %v811 = vpow.pop %v810
        %v812 = vmul.f32 %v750, 1.442695
        %v813 = vpow.pop %v812
        %v814 = vmul.f32 %v751, 1.442695
        %v815 = vpow.pop %v814
        %v816 = vadd.f32 %v753, %v755
        %817 = vadd.xlane.f32.xlu0 %v816
        %v818 = vpop.xlane.xlu0 %817
        %v819 = vadd.f32 %v757, %v759
        %820 = vadd.xlane.f32.xlu0 %v819
        %v821 = vpop.xlane.xlu0 %820
        %v822 = vadd.f32 %v761, %v763
        %823 = vadd.xlane.f32.xlu0 %v822
        %v824 = vpop.xlane.xlu0 %823
        %v825 = vadd.f32 %v765, %v767
        %826 = vadd.xlane.f32.xlu0 %v825
        %v827 = vpop.xlane.xlu0 %826
        %v828 = vadd.f32 %v769, %v771
        %829 = vadd.xlane.f32.xlu0 %v828
        %v830 = vpop.xlane.xlu0 %829
        %v831 = vadd.f32 %v773, %v775
        %832 = vadd.xlane.f32.xlu0 %v831
        %v833 = vpop.xlane.xlu0 %832
        %v834 = vadd.f32 %v777, %v779
        %835 = vadd.xlane.f32.xlu0 %v834
        %v836 = vpop.xlane.xlu0 %835
        %v837 = vadd.f32 %v781, %v783
        %838 = vadd.xlane.f32.xlu0 %v837
        %v839 = vpop.xlane.xlu0 %838
        %v840 = vadd.f32 %v785, %v787
        %841 = vadd.xlane.f32.xlu0 %v840
        %v842 = vpop.xlane.xlu0 %841
        %v843 = vadd.f32 %v789, %v791
        %844 = vadd.xlane.f32.xlu0 %v843
        %v845 = vpop.xlane.xlu0 %844
        %v846 = vadd.f32 %v793, %v795
        %847 = vadd.xlane.f32.xlu0 %v846
        %v848 = vpop.xlane.xlu0 %847
        %v849 = vadd.f32 %v797, %v799
        %850 = vadd.xlane.f32.xlu0 %v849
        %v851 = vpop.xlane.xlu0 %850
        %v852 = vadd.f32 %v801, %v803
        %853 = vadd.xlane.f32.xlu0 %v852
        %v854 = vpop.xlane.xlu0 %853
        %v855 = vadd.f32 %v805, %v807
        %856 = vadd.xlane.f32.xlu0 %v855
        %v857 = vpop.xlane.xlu0 %856
        %v858 = vadd.f32 %v809, %v811
        %859 = vadd.xlane.f32.xlu0 %v858
        %v860 = vpop.xlane.xlu0 %859
        %v861 = vadd.f32 %v813, %v815
        %862 = vadd.xlane.f32.xlu0 %v861
        %v863 = vpop.xlane.xlu0 %862
        %v864 = vrcp.pop %v818
        %v865 = vrcp.pop %v821
        %v866 = vrcp.pop %v824
        %v867 = vrcp.pop %v827
        %v868 = vrcp.pop %v830
        %v869 = vrcp.pop %v833
        %v870 = vrcp.pop %v836
        %v871 = vrcp.pop %v839
        %v872 = vrcp.pop %v842
        %v873 = vrcp.pop %v845
        %v874 = vrcp.pop %v848
        %v875 = vrcp.pop %v851
        %v876 = vrcp.pop %v854
        %v877 = vrcp.pop %v857
        %v878 = vrcp.pop %v860
        %v879 = vrcp.pop %v863
        %v880 = vmul.f32 %v753, %v864
        %v881 = vmul.f32 %v755, %v864
        %v882 = vmul.f32 %v757, %v865
        %v883 = vmul.f32 %v759, %v865
        %v884 = vmul.f32 %v761, %v866
        %v885 = vmul.f32 %v763, %v866
        %v886 = vmul.f32 %v765, %v867
        %v887 = vmul.f32 %v767, %v867
        %v888 = vmul.f32 %v769, %v868
        %v889 = vmul.f32 %v771, %v868
        %v890 = vmul.f32 %v773, %v869
        %v891 = vmul.f32 %v775, %v869
        %v892 = vmul.f32 %v777, %v870
        %v893 = vmul.f32 %v779, %v870
        %v894 = vmul.f32 %v781, %v871
        %v895 = vmul.f32 %v783, %v871
        %v896 = vmul.f32 %v785, %v872
        %v897 = vmul.f32 %v787, %v872
        %v898 = vmul.f32 %v789, %v873
        %v899 = vmul.f32 %v791, %v873
        %v900 = vmul.f32 %v793, %v874
        %v901 = vmul.f32 %v795, %v874
        %v902 = vmul.f32 %v797, %v875
        %v903 = vmul.f32 %v799, %v875
        %v904 = vmul.f32 %v801, %v876
        %v905 = vmul.f32 %v803, %v876
        %v906 = vmul.f32 %v805, %v877
        %v907 = vmul.f32 %v807, %v877
        %v908 = vmul.f32 %v809, %v878
        %v909 = vmul.f32 %v811, %v878
        %v910 = vmul.f32 %v813, %v879
        %v911 = vmul.f32 %v815, %v879
        %912 = vst [vmem:[%s492] sm:$0xff] %v880
        %913 = vst [vmem:[%s492 + $0x8] sm:$0xff] %v881
        %914 = vst [vmem:[%s492 + $0x10] sm:$0xff] %v882
        %915 = vst [vmem:[%s492 + $0x18] sm:$0xff] %v883
        %916 = vst [vmem:[%s492 + $0x20] sm:$0xff] %v884
        %917 = vst [vmem:[%s492 + $0x28] sm:$0xff] %v885
        %918 = vst [vmem:[%s492 + $0x30] sm:$0xff] %v886
        %919 = vst [vmem:[%s492 + $0x38] sm:$0xff] %v887
        %920 = vst [vmem:[%s492 + $0x40] sm:$0xff] %v888
        %921 = vst [vmem:[%s492 + $0x48] sm:$0xff] %v889
        %922 = vst [vmem:[%s492 + $0x50] sm:$0xff] %v890
        %923 = vst [vmem:[%s492 + $0x58] sm:$0xff] %v891
        %924 = vst [vmem:[%s492 + $0x60] sm:$0xff] %v892
        %925 = vst [vmem:[%s492 + $0x68] sm:$0xff] %v893
        %926 = vst [vmem:[%s492 + $0x70] sm:$0xff] %v894
        %927 = vst [vmem:[%s492 + $0x78] sm:$0xff] %v895
        %928 = vst [vmem:[%s492 + $0x80] sm:$0xff] %v896
        %929 = vst [vmem:[%s492 + $0x88] sm:$0xff] %v897
        %930 = vst [vmem:[%s492 + $0x90] sm:$0xff] %v898
        %931 = vst [vmem:[%s492 + $0x98] sm:$0xff] %v899
        %932 = vst [vmem:[%s492 + $0xa0] sm:$0xff] %v900
        %933 = vst [vmem:[%s492 + $0xa8] sm:$0xff] %v901
        %934 = vst [vmem:[%s492 + $0xb0] sm:$0xff] %v902
        %935 = vst [vmem:[%s492 + $0xb8] sm:$0xff] %v903
        %936 = vst [vmem:[%s492 + $0xc0] sm:$0xff] %v904
        %937 = vst [vmem:[%s492 + $0xc8] sm:$0xff] %v905
        %938 = vst [vmem:[%s492 + $0xd0] sm:$0xff] %v906
        %939 = vst [vmem:[%s492 + $0xd8] sm:$0xff] %v907
        %940 = vst [vmem:[%s492 + $0xe0] sm:$0xff] %v908
        %941 = vst [vmem:[%s492 + $0xe8] sm:$0xff] %v909
        %942 = vst [vmem:[%s492 + $0xf0] sm:$0xff] %v910
        %943 = vst [vmem:[%s492 + $0xf8] sm:$0xff] %v911
        %944 = vxpose.xlu0.b32.start [1/16] %v880, 128
        %945 = vxpose.xlu0.b32.cont [2/16] %v882, 128
        %946 = vxpose.xlu0.b32.cont [3/16] %v884, 128
        %947 = vxpose.xlu0.b32.cont [4/16] %v886, 128
        %948 = vxpose.xlu0.b32.cont [5/16] %v888, 128
        %949 = vxpose.xlu0.b32.cont [6/16] %v890, 128
        %950 = vxpose.xlu0.b32.cont [7/16] %v892, 128
        %951 = vxpose.xlu0.b32.cont [8/16] %v894, 128
        %952 = vxpose.xlu0.b32.cont [9/16] %v896, 128
        %953 = vxpose.xlu0.b32.cont [10/16] %v898, 128
        %954 = vxpose.xlu0.b32.cont [11/16] %v900, 128
        %955 = vxpose.xlu0.b32.cont [12/16] %v902, 128
        %956 = vxpose.xlu0.b32.cont [13/16] %v904, 128
        %957 = vxpose.xlu0.b32.cont [14/16] %v906, 128
        %958 = vxpose.xlu0.b32.cont [15/16] %v908, 128
        %959 = vxpose.xlu0.b32.end [16/16] %v910, 128
        %v960 = vpop.trf.xlu0
        %v961 = vpop.trf.xlu0
        %v962 = vpop.trf.xlu0
        %v963 = vpop.trf.xlu0
        %v964 = vpop.trf.xlu0
        %v965 = vpop.trf.xlu0
        %v966 = vpop.trf.xlu0
        %v967 = vpop.trf.xlu0
        %v968 = vpop.trf.xlu0
        %v969 = vpop.trf.xlu0
        %v970 = vpop.trf.xlu0
        %v971 = vpop.trf.xlu0
        %v972 = vpop.trf.xlu0
        %v973 = vpop.trf.xlu0
        %v974 = vpop.trf.xlu0
        %v975 = vpop.trf.xlu0
        %976 = vxpose.xlu0.b32.start [1/16] %v881, 128
        %977 = vxpose.xlu0.b32.cont [2/16] %v883, 128
        %978 = vxpose.xlu0.b32.cont [3/16] %v885, 128
        %979 = vxpose.xlu0.b32.cont [4/16] %v887, 128
        %980 = vxpose.xlu0.b32.cont [5/16] %v889, 128
        %981 = vxpose.xlu0.b32.cont [6/16] %v891, 128
        %982 = vxpose.xlu0.b32.cont [7/16] %v893, 128
        %983 = vxpose.xlu0.b32.cont [8/16] %v895, 128
        %984 = vxpose.xlu0.b32.cont [9/16] %v897, 128
        %985 = vxpose.xlu0.b32.cont [10/16] %v899, 128
        %986 = vxpose.xlu0.b32.cont [11/16] %v901, 128
        %987 = vxpose.xlu0.b32.cont [12/16] %v903, 128
        %988 = vxpose.xlu0.b32.cont [13/16] %v905, 128
        %989 = vxpose.xlu0.b32.cont [14/16] %v907, 128
        %990 = vxpose.xlu0.b32.cont [15/16] %v909, 128
        %991 = vxpose.xlu0.b32.end [16/16] %v911, 128
        %v992 = vpop.trf.xlu0
        %v993 = vpop.trf.xlu0
        %v994 = vpop.trf.xlu0
        %v995 = vpop.trf.xlu0
        %v996 = vpop.trf.xlu0
        %v997 = vpop.trf.xlu0
        %v998 = vpop.trf.xlu0
        %v999 = vpop.trf.xlu0
        %v1000 = vpop.trf.xlu0
        %v1001 = vpop.trf.xlu0
        %v1002 = vpop.trf.xlu0
        %v1003 = vpop.trf.xlu0
        %v1004 = vpop.trf.xlu0
        %v1005 = vpop.trf.xlu0
        %v1006 = vpop.trf.xlu0
        %v1007 = vpop.trf.xlu0
        %v1008 = vpack.c.bf16 %v961, %v960
        %v1009 = vpack.c.bf16 %v963, %v962
        %v1010 = vpack.c.bf16 %v965, %v964
        %v1011 = vpack.c.bf16 %v967, %v966
        %v1012 = vpack.c.bf16 %v969, %v968
        %v1013 = vpack.c.bf16 %v971, %v970
        %v1014 = vpack.c.bf16 %v973, %v972
        %v1015 = vpack.c.bf16 %v975, %v974
        %v1016 = vpack.c.bf16 %v993, %v992
        %v1017 = vpack.c.bf16 %v995, %v994
        %v1018 = vpack.c.bf16 %v997, %v996
        %v1019 = vpack.c.bf16 %v999, %v998
        %v1020 = vpack.c.bf16 %v1001, %v1000
        %v1021 = vpack.c.bf16 %v1003, %v1002
        %v1022 = vpack.c.bf16 %v1005, %v1004
        %v1023 = vpack.c.bf16 %v1007, %v1006
        %v1024 = vld [vmem:[%s472] sm:$0xff]
        %v1025 = vld [vmem:[%s472 + $0x8] sm:$0xff]
        %v1026 = vld [vmem:[%s472 + $0x10] sm:$0xff]
        %v1027 = vld [vmem:[%s472 + $0x18] sm:$0xff]
        %v1028 = vpack.c.bf16 %v1026, %v1024
        %v1029 = vpack.c.bf16 %v1027, %v1025
        %1030 = vmatprep.subr.bf16.mxu0 0
        %1031 = vmatpush1.bf16.msra.mxu0 %v1008
        %1032 = vmatprep.subr.bf16.mxu0 0
        %1033 = vmatpush1.bf16.msra.mxu0 %v1009
        %1034 = vmatprep.subr.bf16.mxu0 0
        %1035 = vmatpush1.bf16.msra.mxu0 %v1010
        %1036 = vmatprep.subr.bf16.mxu0 0
        %1037 = vmatpush1.bf16.msra.mxu0 %v1011
        %1038 = vmatprep.subr.bf16.mxu0 0
        %1039 = vmatpush1.bf16.msra.mxu0 %v1012
        %1040 = vmatprep.subr.bf16.mxu0 0
        %1041 = vmatpush1.bf16.msra.mxu0 %v1013
        %1042 = vmatprep.subr.bf16.mxu0 0
        %1043 = vmatpush1.bf16.msra.mxu0 %v1014
        %1044 = vmatprep.subr.bf16.mxu0 0
        %1045 = vmatpush1.bf16.msra.mxu0 %v1015
        %1046 = vmatprep.subr.bf16.mxu0 0
        %1047 = vmatpush1.bf16.msra.mxu0 %v1016
        %1048 = vmatprep.subr.bf16.mxu0 0
        %1049 = vmatpush1.bf16.msra.mxu0 %v1017
        %1050 = vmatprep.subr.bf16.mxu0 0
        %1051 = vmatpush1.bf16.msra.mxu0 %v1018
        %1052 = vmatprep.subr.bf16.mxu0 0
        %1053 = vmatpush1.bf16.msra.mxu0 %v1019
        %1054 = vmatprep.subr.bf16.mxu0 0
        %1055 = vmatpush1.bf16.msra.mxu0 %v1020
        %1056 = vmatprep.subr.bf16.mxu0 0
        %1057 = vmatpush1.bf16.msra.mxu0 %v1021
        %1058 = vmatprep.subr.bf16.mxu0 0
        %1059 = vmatpush1.bf16.msra.mxu0 %v1022
        %1060 = vmatprep.subr.bf16.mxu0 0
        %1061 = vmatpush1.bf16.msra.mxu0 %v1023
        %1062 = vmatprep.mubr.bf16.mxu0 %v1029
        %1063 = vmatmul.mubr.bf16.gmra.mrb[0].mxu0 %v1028
        %v1064 = vpop.f32.mrb[0].mxu0
        %v1065 = vadd.f32 0.0, %v1064
        %v1066 = vpop.f32.mrb[0].mxu0
        %v1067 = vpop.f32.mrb[0].mxu0
        %v1068 = vadd.f32 0.0, %v1067
        %v1069 = vpop.f32.mrb[0].mxu0
        %1070 = vdwg.mxu0
        %s1071 = sld [smem:[#allocation2]]
        %v1072 = vld [vmem:[%s387] sm:$0xff]
        %v1073 = vld [vmem:[%s387 + $0x8] sm:$0xff]
        %v1074 = vld [vmem:[%s477] sm:$0xff]
        %v1075 = vld [vmem:[%s477 + $0x8] sm:$0xff]
        %1077 = vset.pattern.permute.xlu0 0
        %1078 = vperm.xlu0 %1077, %v1074
        %v1079 = vpop.permute.xlu0 %1078
        %1082 = vset.pattern.permute.xlu0 0
        %1083 = vperm.xlu0 %1082, %v1075
        %v1084 = vpop.permute.xlu0 %1083
        %v1086 = vsub.f32 %v1072, %v1079
        %v1087 = vsub.f32 %v1073, %v1084
        %v1088 = vld [vmem:[%s482] sm:$0xff]
        %v1089 = vld [vmem:[%s482 + $0x8] sm:$0xff]
        %1091 = vset.pattern.permute.xlu0 0
        %1092 = vperm.xlu0 %1091, %v1088
        %v1093 = vpop.permute.xlu0 %1092
        %1096 = vset.pattern.permute.xlu0 0
        %1097 = vperm.xlu0 %1096, %v1089
        %v1098 = vpop.permute.xlu0 %1097
        %v1100 = vmul.f32 %v1086, %v1093
        %v1101 = vmul.f32 %v1087, %v1098
        %vm1102 = vcmp.ge.f32.partialorder %v1065, 0.0
        %vm1103 = vcmp.ge.f32.partialorder %v1068, 0.0
        %v1104 = vmul.f32 %v1065, 0.2
        %v1105 = vmul.f32 %v1068, 0.2
        %v1106 = vsel %vm1102, %v1065, %v1104
        %v1107 = vsel %vm1103, %v1068, %v1105
        %v1108 = vstv %s1071
        %v1109 = vmul.f32 %v1108, %v1106
        %v1110 = vmul.f32 %v1108, %v1107
        %s1111 = ssub.f32 1.0, %s1071
        %vm1112 = vcmp.ge.f32.partialorder %v1100, 0.0
        %vm1113 = vcmp.ge.f32.partialorder %v1101, 0.0
        %v1114 = vmul.f32 %v1100, 0.2
        %v1115 = vmul.f32 %v1101, 0.2
        %v1116 = vsel %vm1112, %v1100, %v1114
        %v1117 = vsel %vm1113, %v1101, %v1115
        %v1118 = vstv %s1111
        %v1119 = vmul.f32 %v1118, %v1116
        %v1120 = vmul.f32 %v1118, %v1117
        %v1121 = vadd.f32 %v1109, %v1119
        %v1122 = vadd.f32 %v1110, %v1120
        %1123 = vst [vmem:[%s442] sm:$0xff] %v1121
        %1124 = vst [vmem:[%s442 + $0x8] sm:$0xff] %v1122
        %s1125 = sand.u32 %s224, 1
        %s1126 = sand.u32 %s224, 1
        %s1127 = smul.addr %s1126, 16
        %s1128 = scalar_lea.vmem [#allocation4], %s1127
        %s1129 = smul.u32 16, %s26
        %p1130 = scmp.lt.s32.totalorder %s25, 1
        %s1131 = scalar_select %p1130, %s25, 1
        %p1132 = scmp.lt.s32.totalorder %s1129, 31
        %s1133 = scalar_select %p1132, %s1129, 31
        %s1134 = smul.addr %s1133, 2
        %s1135 = smul.addr %s1131, 64
        %s1136 = sadd.s32 %s1134, %s1135
        %s1137 = smul.addr %s1136, 8
        %s1138 = scalar_lea.vmem %s8, %s1137
        // Predicated region
        $region87: #{full_attention_forward.3} parent=81 // pred_check
          %p1139 = pneg %p234
        $region88: #{full_attention_forward.3} parent=81 // pred_check_branch
          %1141 = sbr.rel (%p1139) target = $region90
        $region89: #{full_attention_forward.3} parent=81 // pred_region
          %s1142 = smul.addr %s25, 4
          %s1143 = sadd.s32 %s26, %s1142
          %s1144 = smul.addr %s1143, 8
          %s1145 = scalar_lea.vmem %s7, %s1144
          // Predicated region
          $region91: #{full_attention_forward.3} parent=89 // pred_check
            _
          $region92: #{full_attention_forward.3} parent=89 // pred_check_branch
            %1147 = sbr.rel (0) target = $region94
          $region93: #{full_attention_forward.3} parent=89 // pred_region
            // Predicated region
            $region95: #{full_attention_forward.3} parent=93 // pred_check
              _
            $region96: #{full_attention_forward.3} parent=93 // pred_check_branch
              %1149 = sbr.rel (0) target = $region98
            $region97: #{full_attention_forward.3} parent=93 // pred_region
              // Predicated region
              $region110: #{full_attention_forward.3} parent=97 // pred_check
                _
              $region111: #{full_attention_forward.3} parent=97 // pred_check_branch
                %1166 = sbr.rel (0) target = $region113
              $region112: #{full_attention_forward.3} parent=97 // pred_region
                loop: start=0, step=1, limit=1
                $region114: #{full_attention_forward.3} parent=112 // loop_pre_header
                  _
                $region115: #{full_attention_forward.3} parent=112 // loop_header
                  %s1168 = sphi 0, %s1172
                  %p1169 = scmp.ge.s32.totalorder %s1168, 1
                  %s1173 = sphi %s1128, %s1128
                  %s1174 = sphi %s1145, %s1145
                $region116: #{full_attention_forward.3} parent=112 // loop_header_branch
                  %1171 = sbr.rel (%p1169) target = $region120
                $region117: #{full_attention_forward.3} parent=112 // loop_body
                  %v1175 = vld [vmem:[%s1173] sm:$0xff]
                  %1176 = vst [vmem:[%s1174] sm:$0xff] %v1175
                  %v1177 = vld [vmem:[%s1173 + $0x8] sm:$0xff]
                  %1178 = vst [vmem:[%s1174 + $0x10] sm:$0xff] %v1177
                $region118: #{full_attention_forward.3} parent=112 // loop_footer
                  %s1172 = sadd.s32 1, %s1168
                $region119: #{full_attention_forward.3} parent=112 // loop_footer_branch
                  %1167 = sbr.rel target = $region115
                $region120: #{full_attention_forward.3} parent=112 // loop_exit
                  _
              $region113: #{full_attention_forward.3} parent=97 // pred_fallthru
                _
              // Predicated region
              $region121: #{full_attention_forward.3} parent=97 // pred_check
                _
              $region122: #{full_attention_forward.3} parent=97 // pred_check_branch
                %1180 = sbr.rel target = $region124
              $region123: #{full_attention_forward.3} parent=97 // pred_region
                _
              $region124: #{full_attention_forward.3} parent=97 // pred_fallthru
                _
            $region98: #{full_attention_forward.3} parent=93 // pred_fallthru
              _
            // Predicated region
            $region99: #{full_attention_forward.3} parent=93 // pred_check
              _
            $region100: #{full_attention_forward.3} parent=93 // pred_check_branch
              %1151 = sbr.rel target = $region102
            $region101: #{full_attention_forward.3} parent=93 // pred_region
              loop: start=0, step=1, limit=1
              $region103: #{full_attention_forward.3} parent=101 // loop_pre_header
                _
              $region104: #{full_attention_forward.3} parent=101 // loop_header
                %s1154 = sphi 0, %s1158
                %p1155 = scmp.ge.s32.totalorder %s1154, 1
                %s1159 = sphi %s1128, %s1128
                %s1160 = sphi %s1145, %s1145
              $region105: #{full_attention_forward.3} parent=101 // loop_header_branch
                %1157 = sbr.rel (%p1155) target = $region109
              $region106: #{full_attention_forward.3} parent=101 // loop_body
                %v1161 = vld [vmem:[%s1159] sm:$0xff]
                %1162 = vst [vmem:[%s1160] sm:$0xff] %v1161
                %v1163 = vld [vmem:[%s1159 + $0x8] sm:$0xff]
                %1164 = vst [vmem:[%s1160 + $0x10] sm:$0xff] %v1163
              $region107: #{full_attention_forward.3} parent=101 // loop_footer
                %s1158 = sadd.s32 1, %s1154
              $region108: #{full_attention_forward.3} parent=101 // loop_footer_branch
                %1153 = sbr.rel target = $region104
              $region109: #{full_attention_forward.3} parent=101 // loop_exit
                _
            $region102: #{full_attention_forward.3} parent=93 // pred_fallthru
              _
          $region94: #{full_attention_forward.3} parent=89 // pred_fallthru
            _
          %1181 = vnop
        $region90: #{full_attention_forward.3} parent=81 // pred_fallthru
          _
        // Predicated region
        $region125: #{full_attention_forward.3} parent=81 // pred_check
          %p1182 = pneg %p262
        $region126: #{full_attention_forward.3} parent=81 // pred_check_branch
          %1184 = sbr.rel (%p1182) target = $region128
        $region127: #{full_attention_forward.3} parent=81 // pred_region
          %s1185 = smul.u32 16, %s26
        $region128: #{full_attention_forward.3} parent=81 // pred_fallthru
          _
      $region82: #{full_attention_forward.3} parent=5 // pred_fallthru
        _
      %p1186 = scmp.le.s32.totalorder 2, %s16
      // Predicated region
      $region129: #{full_attention_forward.3} parent=5 // pred_check
        %p1187 = pneg %p1186
      $region130: #{full_attention_forward.3} parent=5 // pred_check_branch
        %1189 = sbr.rel (%p1187) target = $region132
      $region131: #{full_attention_forward.3} parent=5 // pred_region
        %s1190 = ssub.s32 %s16, 2
        // Predicated region
        $region133: #{full_attention_forward.3} parent=131 // pred_check
          %p1191 = pneg %p240
        $region134: #{full_attention_forward.3} parent=131 // pred_check_branch
          %1193 = sbr.rel (%p1191) target = $region136
        $region135: #{full_attention_forward.3} parent=131 // pred_region
          %s1194 = sand.u32 %s225, 1
          %s1195 = sand.u32 %s225, 1
          %s1196 = smul.addr %s1195, 16
          %s1197 = scalar_lea.vmem [#allocation4], %s1196
        $region136: #{full_attention_forward.3} parent=131 // pred_fallthru
          _
        // Predicated region
        $region137: #{full_attention_forward.3} parent=131 // pred_check
          %p1198 = pneg %p268
        $region138: #{full_attention_forward.3} parent=131 // pred_check_branch
          %1200 = sbr.rel (%p1198) target = $region140
        $region139: #{full_attention_forward.3} parent=131 // pred_region
          %s1201 = smul.u32 16, %s28
          %p1202 = scmp.lt.s32.totalorder %s27, 1
          %s1203 = scalar_select %p1202, %s27, 1
          %p1204 = scmp.lt.s32.totalorder %s1201, 31
          %s1205 = scalar_select %p1204, %s1201, 31
          %s1206 = smul.addr %s1205, 2
          %s1207 = smul.addr %s1203, 64
          %s1208 = sadd.s32 %s1206, %s1207
          %s1209 = smul.addr %s1208, 8
          %s1210 = scalar_lea.vmem %s8, %s1209
        $region140: #{full_attention_forward.3} parent=131 // pred_fallthru
          _
      $region132: #{full_attention_forward.3} parent=5 // pred_fallthru
        _
    $region6: #{full_attention_forward.3} parent=1 // loop_footer
      %s20 = sadd.s32 1, %s16
    $region7: #{full_attention_forward.3} parent=1 // loop_footer_branch
      %15 = sbr.rel target = $region3
    $region8: #{full_attention_forward.3} parent=1 // loop_exit
      _

// kernel: full_attention_forward.2
$region0: #{full_attention_forward.2}
  #allocation0 [shape = 'u32[]', space=smem, size = 0x4, offset = 0x4, fixed_abs, tag = 'smem constant byte address 0x4 - core index']
  #allocation1 [shape = 'u32[144,128]{1,0:T(1,128)}', space=vmem, size = 0x12000, scoped, tag = 'internal scratch']
  %s0 = inlined_call_operand.vmem [shape: f32[9,36,16], index: 0, kind: input, shape index: {}]
  %s1 = inlined_call_operand.vmem [shape: f32[36,1], index: 1, kind: input, shape index: {}]
  %s2 = inlined_call_operand.vmem [shape: f32[3,1,256], index: 2, kind: input, shape index: {}]
  %s3 = inlined_call_operand.vmem [shape: f32[2,16,290], index: 3, kind: input, shape index: {}]
  %s4 = inlined_call_operand.vmem [shape: f32[2,2,256], index: 4, kind: output, shape index: {0}]
  %s5 = inlined_call_operand.vmem [shape: f32[2,2,256], index: 5, kind: output, shape index: {1}]
  %s6 = inlined_call_operand.vmem [shape: f32[2,16,256], index: 6, kind: output, shape index: {2}]
  %s7 = inlined_call_operand.vmem [shape: f32[2,16,256], index: 7, kind: output, shape index: {3}]
  %s8 = inlined_call_operand.vmem [shape: f32[2,16,1], index: 8, kind: output, shape index: {4}]
  %s9 = inlined_call_operand.vmem [shape: f32[2,16,1], index: 9, kind: output, shape index: {5}]
  %10 = xla_tuple %s4, %s5, %s6, %s7, %s8, %s9
  %s11 = sld [smem:[#allocation0]]
  $region89: #{full_attention_forward.2} parent=0
    _
  %s13 = ssub.s32 1, %s11
  %s14 = scalar_select 0, %s13, %s11
  loop: start=0, step=1, limit=4
  $region2: #{full_attention_forward.2} parent=0 // loop_pre_header
    _
  $region3: #{full_attention_forward.2} parent=0 // loop_header
    %s16 = sphi 0, %s20
    %p17 = scmp.ge.s32.totalorder %s16, 4
    %s24 = sphi 0, %s24
    %s26 = sphi 0, %s24
    %s27 = sphi 0, %s26
    %s41 = sphi 0, %s27
    %s45 = sphi 0, %s45
    %s47 = sphi 0, %s45
    %s48 = sphi 0, %s47
    %s62 = sphi 0, %s48
    %s66 = sphi 0, %s66
    %s68 = sphi 0, %s66
    %s69 = sphi 0, %s68
    %s83 = sphi 0, %s69
    %s89 = sphi 0, %s91
    %s92 = sphi 0, %s89
    %s93 = sphi 0, %s92
    %s109 = sphi 0, %s93
    %s115 = sphi 0, %s117
    %s118 = sphi 0, %s115
    %s119 = sphi 0, %s118
    %s135 = sphi 0, %s119
    %s141 = sphi 0, %s143
    %s144 = sphi 0, %s141
    %s145 = sphi 0, %s144
    %s161 = sphi 0, %s145
    %s167 = sphi 0, %s169
    %s170 = sphi 0, %s167
    %s171 = sphi 0, %s170
    %s187 = sphi 0, %s171
    %s193 = sphi 0, %s195
    %s196 = sphi 0, %s193
    %s197 = sphi 0, %s196
    %s213 = sphi 0, %s197
    %s219 = sphi 0, %s221
    %s222 = sphi 0, %s219
    %s223 = sphi 0, %s222
    %s239 = sphi 0, %s223
    %s245 = sphi 0, %s247
    %s248 = sphi 0, %s245
    %s249 = sphi 0, %s248
    %s265 = sphi 0, %s249
  $region4: #{full_attention_forward.2} parent=0 // loop_header_branch
    %19 = sbr.rel (%p17) target = $region8
  $region5: #{full_attention_forward.2} parent=0 // loop_body
    %s21 = ssub.s32 %s16, 1
    %s22 = ssub.s32 %s16, 2
    %s23 = sadd.s32 %s16, 1
    %s25 = sadd.s32 %s24, 1
    %p28 = scmp.eq.s32.totalorder %s16, 1
    %p29 = scmp.ne.s32.totalorder %s24, %s26
    %p30 = scmp.eq.s32.totalorder %s16, 0
    %p31 = por %p29, %p30
    %p32 = scmp.ne.s32.totalorder %s24, %s26
    %p33 = scmp.eq.s32.totalorder %s21, 1
    %p34 = por %p32, %p33
    %p35 = scmp.ne.s32.totalorder %s26, %s27
    %p36 = scmp.eq.s32.totalorder %s21, 0
    %p37 = por %p35, %p36
    %p38 = scmp.ne.s32.totalorder %s26, %s27
    %p39 = scmp.eq.s32.totalorder %s22, 1
    %p40 = por %p38, %p39
    %p42 = scmp.ne.s32.totalorder %s27, %s41
    %p43 = scmp.eq.s32.totalorder %s22, 0
    %p44 = por %p42, %p43
    %s46 = sadd.s32 %s45, 1
    %p49 = scmp.eq.s32.totalorder %s16, 1
    %p50 = scmp.ne.s32.totalorder %s45, %s47
    %p51 = scmp.eq.s32.totalorder %s16, 0
    %p52 = por %p50, %p51
    %p53 = scmp.ne.s32.totalorder %s45, %s47
    %p54 = scmp.eq.s32.totalorder %s21, 1
    %p55 = por %p53, %p54
    %p56 = scmp.ne.s32.totalorder %s47, %s48
    %p57 = scmp.eq.s32.totalorder %s21, 0
    %p58 = por %p56, %p57
    %p59 = scmp.ne.s32.totalorder %s47, %s48
    %p60 = scmp.eq.s32.totalorder %s22, 1
    %p61 = por %p59, %p60
    %p63 = scmp.ne.s32.totalorder %s48, %s62
    %p64 = scmp.eq.s32.totalorder %s22, 0
    %p65 = por %p63, %p64
    %s67 = sadd.s32 %s66, 1
    %p70 = scmp.eq.s32.totalorder %s16, 1
    %p71 = scmp.ne.s32.totalorder %s66, %s68
    %p72 = scmp.eq.s32.totalorder %s16, 0
    %p73 = por %p71, %p72
    %p74 = scmp.ne.s32.totalorder %s66, %s68
    %p75 = scmp.eq.s32.totalorder %s21, 1
    %p76 = por %p74, %p75
    %p77 = scmp.ne.s32.totalorder %s68, %s69
    %p78 = scmp.eq.s32.totalorder %s21, 0
    %p79 = por %p77, %p78
    %p80 = scmp.ne.s32.totalorder %s68, %s69
    %p81 = scmp.eq.s32.totalorder %s22, 1
    %p82 = por %p80, %p81
    %p84 = scmp.ne.s32.totalorder %s69, %s83
    %p85 = scmp.eq.s32.totalorder %s22, 0
    %p86 = por %p84, %p85
    %s87 = ssub.s32 %s16, %s23
    %p88 = scmp.eq.s32.totalorder %s87, 0
    %s90 = sadd.s32 %s89, 1
    %s91 = scalar_select %p88, %s89, %s90
    %p94 = pneg %p88
    %p95 = scmp.eq.s32.totalorder %s16, 1
    %p96 = por %p94, %p95
    %p97 = scmp.ne.s32.totalorder %s89, %s92
    %p98 = scmp.eq.s32.totalorder %s16, 0
    %p99 = por %p97, %p98
    %p100 = scmp.ne.s32.totalorder %s89, %s92
    %p101 = scmp.eq.s32.totalorder %s21, 1
    %p102 = por %p100, %p101
    %p103 = scmp.ne.s32.totalorder %s92, %s93
    %p104 = scmp.eq.s32.totalorder %s21, 0
    %p105 = por %p103, %p104
    %p106 = scmp.ne.s32.totalorder %s92, %s93
    %p107 = scmp.eq.s32.totalorder %s22, 1
    %p108 = por %p106, %p107
    %p110 = scmp.ne.s32.totalorder %s93, %s109
    %p111 = scmp.eq.s32.totalorder %s22, 0
    %p112 = por %p110, %p111
    %s113 = ssub.s32 %s16, %s23
    %p114 = scmp.eq.s32.totalorder %s113, 0
    %s116 = sadd.s32 %s115, 1
    %s117 = scalar_select %p114, %s115, %s116
    %p120 = pneg %p114
    %p121 = scmp.eq.s32.totalorder %s16, 1
    %p122 = por %p120, %p121
    %p123 = scmp.ne.s32.totalorder %s115, %s118
    %p124 = scmp.eq.s32.totalorder %s16, 0
    %p125 = por %p123, %p124
    %p126 = scmp.ne.s32.totalorder %s115, %s118
    %p127 = scmp.eq.s32.totalorder %s21, 1
    %p128 = por %p126, %p127
    %p129 = scmp.ne.s32.totalorder %s118, %s119
    %p130 = scmp.eq.s32.totalorder %s21, 0
    %p131 = por %p129, %p130
    %p132 = scmp.ne.s32.totalorder %s118, %s119
    %p133 = scmp.eq.s32.totalorder %s22, 1
    %p134 = por %p132, %p133
    %p136 = scmp.ne.s32.totalorder %s119, %s135
    %p137 = scmp.eq.s32.totalorder %s22, 0
    %p138 = por %p136, %p137
    %s139 = ssub.s32 %s16, %s23
    %p140 = scmp.eq.s32.totalorder %s139, 0
    %s142 = sadd.s32 %s141, 1
    %s143 = scalar_select %p140, %s141, %s142
    %p146 = pneg %p140
    %p147 = scmp.eq.s32.totalorder %s16, 1
    %p148 = por %p146, %p147
    %p149 = scmp.ne.s32.totalorder %s141, %s144
    %p150 = scmp.eq.s32.totalorder %s16, 0
    %p151 = por %p149, %p150
    %p152 = scmp.ne.s32.totalorder %s141, %s144
    %p153 = scmp.eq.s32.totalorder %s21, 1
    %p154 = por %p152, %p153
    %p155 = scmp.ne.s32.totalorder %s144, %s145
    %p156 = scmp.eq.s32.totalorder %s21, 0
    %p157 = por %p155, %p156
    %p158 = scmp.ne.s32.totalorder %s144, %s145
    %p159 = scmp.eq.s32.totalorder %s22, 1
    %p160 = por %p158, %p159
    %p162 = scmp.ne.s32.totalorder %s145, %s161
    %p163 = scmp.eq.s32.totalorder %s22, 0
    %p164 = por %p162, %p163
    %s165 = ssub.s32 %s16, %s23
    %p166 = scmp.eq.s32.totalorder %s165, 0
    %s168 = sadd.s32 %s167, 1
    %s169 = scalar_select %p166, %s167, %s168
    %p172 = pneg %p166
    %p173 = scmp.eq.s32.totalorder %s16, 1
    %p174 = por %p172, %p173
    %p175 = scmp.ne.s32.totalorder %s167, %s170
    %p176 = scmp.eq.s32.totalorder %s16, 0
    %p177 = por %p175, %p176
    %p178 = scmp.ne.s32.totalorder %s167, %s170
    %p179 = scmp.eq.s32.totalorder %s21, 1
    %p180 = por %p178, %p179
    %p181 = scmp.ne.s32.totalorder %s170, %s171
    %p182 = scmp.eq.s32.totalorder %s21, 0
    %p183 = por %p181, %p182
    %p184 = scmp.ne.s32.totalorder %s170, %s171
    %p185 = scmp.eq.s32.totalorder %s22, 1
    %p186 = por %p184, %p185
    %p188 = scmp.ne.s32.totalorder %s171, %s187
    %p189 = scmp.eq.s32.totalorder %s22, 0
    %p190 = por %p188, %p189
    %s191 = ssub.s32 %s16, %s23
    %p192 = scmp.eq.s32.totalorder %s191, 0
    %s194 = sadd.s32 %s193, 1
    %s195 = scalar_select %p192, %s193, %s194
    %p198 = pneg %p192
    %p199 = scmp.eq.s32.totalorder %s16, 1
    %p200 = por %p198, %p199
    %p201 = scmp.ne.s32.totalorder %s193, %s196
    %p202 = scmp.eq.s32.totalorder %s16, 0
    %p203 = por %p201, %p202
    %p204 = scmp.ne.s32.totalorder %s193, %s196
    %p205 = scmp.eq.s32.totalorder %s21, 1
    %p206 = por %p204, %p205
    %p207 = scmp.ne.s32.totalorder %s196, %s197
    %p208 = scmp.eq.s32.totalorder %s21, 0
    %p209 = por %p207, %p208
    %p210 = scmp.ne.s32.totalorder %s196, %s197
    %p211 = scmp.eq.s32.totalorder %s22, 1
    %p212 = por %p210, %p211
    %p214 = scmp.ne.s32.totalorder %s197, %s213
    %p215 = scmp.eq.s32.totalorder %s22, 0
    %p216 = por %p214, %p215
    %s217 = ssub.s32 %s16, %s23
    %p218 = scmp.eq.s32.totalorder %s217, 0
    %s220 = sadd.s32 %s219, 1
    %s221 = scalar_select %p218, %s219, %s220
    %p224 = pneg %p218
    %p225 = scmp.eq.s32.totalorder %s16, 1
    %p226 = por %p224, %p225
    %p227 = scmp.ne.s32.totalorder %s219, %s222
    %p228 = scmp.eq.s32.totalorder %s16, 0
    %p229 = por %p227, %p228
    %p230 = scmp.ne.s32.totalorder %s219, %s222
    %p231 = scmp.eq.s32.totalorder %s21, 1
    %p232 = por %p230, %p231
    %p233 = scmp.ne.s32.totalorder %s222, %s223
    %p234 = scmp.eq.s32.totalorder %s21, 0
    %p235 = por %p233, %p234
    %p236 = scmp.ne.s32.totalorder %s222, %s223
    %p237 = scmp.eq.s32.totalorder %s22, 1
    %p238 = por %p236, %p237
    %p240 = scmp.ne.s32.totalorder %s223, %s239
    %p241 = scmp.eq.s32.totalorder %s22, 0
    %p242 = por %p240, %p241
    %s243 = ssub.s32 %s16, %s23
    %p244 = scmp.eq.s32.totalorder %s243, 0
    %s246 = sadd.s32 %s245, 1
    %s247 = scalar_select %p244, %s245, %s246
    %p250 = pneg %p244
    %p251 = scmp.eq.s32.totalorder %s16, 1
    %p252 = por %p250, %p251
    %p253 = scmp.ne.s32.totalorder %s245, %s248
    %p254 = scmp.eq.s32.totalorder %s16, 0
    %p255 = por %p253, %p254
    %p256 = scmp.ne.s32.totalorder %s245, %s248
    %p257 = scmp.eq.s32.totalorder %s21, 1
    %p258 = por %p256, %p257
    %p259 = scmp.ne.s32.totalorder %s248, %s249
    %p260 = scmp.eq.s32.totalorder %s21, 0
    %p261 = por %p259, %p260
    %p262 = scmp.ne.s32.totalorder %s248, %s249
    %p263 = scmp.eq.s32.totalorder %s22, 1
    %p264 = por %p262, %p263
    %p266 = scmp.ne.s32.totalorder %s249, %s265
    %p267 = scmp.eq.s32.totalorder %s22, 0
    %p268 = por %p266, %p267
    %p269 = scmp.le.s32.totalorder 1, %s16
    %p270 = scmp.lt.s32.totalorder %s16, 3
    %p271 = pnand %p269, %p270
    %p272 = pneg %p271
    // Predicated region
    $region9: #{full_attention_forward.2} parent=5 // pred_check
      _
    $region10: #{full_attention_forward.2} parent=5 // pred_check_branch
      %274 = sbr.rel (%p271) target = $region12
    $region11: #{full_attention_forward.2} parent=5 // pred_region
      %s275 = ssub.s32 %s16, 1
      // Predicated region
      $region13: #{full_attention_forward.2} parent=11 // pred_check
        %p276 = pneg %p37
      $region14: #{full_attention_forward.2} parent=11 // pred_check_branch
        %278 = sbr.rel (%p276) target = $region16
      $region15: #{full_attention_forward.2} parent=11 // pred_region
        _
      $region16: #{full_attention_forward.2} parent=11 // pred_fallthru
        _
      // Predicated region
      $region17: #{full_attention_forward.2} parent=11 // pred_check
        %p279 = pneg %p58
      $region18: #{full_attention_forward.2} parent=11 // pred_check_branch
        %281 = sbr.rel (%p279) target = $region20
      $region19: #{full_attention_forward.2} parent=11 // pred_region
        _
      $region20: #{full_attention_forward.2} parent=11 // pred_fallthru
        _
      // Predicated region
      $region21: #{full_attention_forward.2} parent=11 // pred_check
        %p282 = pneg %p79
      $region22: #{full_attention_forward.2} parent=11 // pred_check_branch
        %284 = sbr.rel (%p282) target = $region24
      $region23: #{full_attention_forward.2} parent=11 // pred_region
        _
      $region24: #{full_attention_forward.2} parent=11 // pred_fallthru
        _
    $region12: #{full_attention_forward.2} parent=5 // pred_fallthru
      _
    %p285 = scmp.lt.s32.totalorder %s16, 2
    // Predicated region
    $region25: #{full_attention_forward.2} parent=5 // pred_check
      %p286 = pneg %p285
    $region26: #{full_attention_forward.2} parent=5 // pred_check_branch
      %288 = sbr.rel (%p286) target = $region28
    $region27: #{full_attention_forward.2} parent=5 // pred_region
      // Predicated region
      $region29: #{full_attention_forward.2} parent=27 // pred_check
        %p289 = pneg %p99
      $region30: #{full_attention_forward.2} parent=27 // pred_check_branch
        %291 = sbr.rel (%p289) target = $region32
      $region31: #{full_attention_forward.2} parent=27 // pred_region
        %p292 = scmp.lt.s32.totalorder %s16, 1
        %s293 = scalar_select %p292, %s16, 1
        %s294 = smul.addr %s293, 6
        %s295 = smul.addr %s294, 8
        %s296 = scalar_lea.vmem %s3, %s295
      $region32: #{full_attention_forward.2} parent=27 // pred_fallthru
        _
    $region28: #{full_attention_forward.2} parent=5 // pred_fallthru
      _
    %p297 = scmp.le.s32.totalorder 1, %s16
    %p298 = scmp.lt.s32.totalorder %s16, 3
    %p299 = pnand %p297, %p298
    %p300 = pneg %p299
    // Predicated region
    $region33: #{full_attention_forward.2} parent=5 // pred_check
      _
    $region34: #{full_attention_forward.2} parent=5 // pred_check_branch
      %302 = sbr.rel (%p299) target = $region36
    $region35: #{full_attention_forward.2} parent=5 // pred_region
      %s303 = ssub.s32 %s16, 1
      %p304 = pneg %p37
      %p305 = pneg %p34
      %p306 = pneg %p58
      %p307 = pneg %p55
      %p308 = pneg %p79
      %p309 = pneg %p76
      %p310 = scmp.lt.s32.totalorder %s21, 1
      %s311 = scalar_select %p310, %s21, 1
      %s312 = smul.addr %s311, 6
      %s313 = smul.addr %s312, 8
      %s314 = scalar_lea.vmem %s3, %s313
      %p315 = pneg %p105
      %p316 = pneg %p102
      %p317 = pneg %p131
      %p318 = pneg %p128
      %p319 = scmp.lt.s32.totalorder %s21, 1
      %s320 = scalar_select %p319, %s21, 1
      %s321 = smul.addr %s320, 2
      %s322 = smul.addr %s321, 2
      %s323 = scalar_lea.vmem %s4, %s322
      %p324 = pneg %p157
      %p325 = pneg %p154
      %p326 = scmp.lt.s32.totalorder %s21, 1
      %s327 = scalar_select %p326, %s21, 1
      %s328 = smul.addr %s327, 2
      %s329 = smul.addr %s328, 2
      %s330 = scalar_lea.vmem %s5, %s329
      %p331 = pneg %p183
      %p332 = pneg %p180
      %p333 = scmp.lt.s32.totalorder %s21, 1
      %s334 = scalar_select %p333, %s21, 1
      %s335 = smul.addr %s334, 4
      %s336 = smul.addr %s335, 8
      %s337 = scalar_lea.vmem %s6, %s336
      %p338 = pneg %p209
      %p339 = pneg %p206
      %p340 = scmp.lt.s32.totalorder %s21, 1
      %s341 = scalar_select %p340, %s21, 1
      %s342 = smul.addr %s341, 4
      %s343 = smul.addr %s342, 8
      %s344 = scalar_lea.vmem %s7, %s343
      %p345 = pneg %p235
      %p346 = pneg %p232
      %p347 = scmp.lt.s32.totalorder %s21, 1
      %s348 = scalar_select %p347, %s21, 1
      %s349 = smul.addr %s348, 2
      %s350 = smul.addr %s349, 8
      %s351 = scalar_lea.vmem %s8, %s350
      %p352 = pneg %p261
      %p353 = pneg %p258
      %p354 = scmp.lt.s32.totalorder %s21, 1
      %s355 = scalar_select %p354, %s21, 1
      %s356 = smul.addr %s355, 2
      %s357 = smul.addr %s356, 8
      %s358 = scalar_lea.vmem %s9, %s357
      %p359 = scmp.lt.s32.totalorder %s21, 1
      %s360 = scalar_select %p359, %s21, 1
      %s361 = smul.addr %s360, 6
      %s362 = smul.addr %s361, 8
      %s363 = scalar_lea.vmem %s3, %s362
      %p364 = scmp.lt.s32.totalorder %s21, 1
      %s365 = scalar_select %p364, %s21, 1
      %s366 = smul.addr %s365, 2
      %s367 = smul.addr %s366, 2
      %s368 = scalar_lea.vmem %s4, %s367
      %p369 = scmp.lt.s32.totalorder %s21, 1
      %s370 = scalar_select %p369, %s21, 1
      %s371 = smul.addr %s370, 2
      %s372 = smul.addr %s371, 2
      %s373 = scalar_lea.vmem %s5, %s372
      %p374 = scmp.lt.s32.totalorder %s21, 1
      %s375 = scalar_select %p374, %s21, 1
      %s376 = smul.addr %s375, 4
      %s377 = smul.addr %s376, 8
      %s378 = scalar_lea.vmem %s6, %s377
      %p379 = scmp.lt.s32.totalorder %s21, 1
      %s380 = scalar_select %p379, %s21, 1
      %s381 = smul.addr %s380, 4
      %s382 = smul.addr %s381, 8
      %s383 = scalar_lea.vmem %s7, %s382
      %p384 = scmp.lt.s32.totalorder %s21, 1
      %s385 = scalar_select %p384, %s21, 1
      %s386 = smul.addr %s385, 2
      %s387 = smul.addr %s386, 8
      %s388 = scalar_lea.vmem %s8, %s387
      %p389 = scmp.lt.s32.totalorder %s21, 1
      %s390 = scalar_select %p389, %s21, 1
      %s391 = smul.addr %s390, 2
      %s392 = smul.addr %s391, 8
      %s393 = scalar_lea.vmem %s9, %s392
      %v394 = vld [vmem:[%s363] sm:$0xff]
      %v395 = vld [vmem:[%s363 + $0x8] sm:$0xff]
      %v396 = vld [vmem:[%s363 + $0x10] sm:$0xff]
      %v397 = vld [vmem:[%s363 + $0x18] sm:$0xff]
      %v398 = vld [vmem:[%s363 + $0x20] sm:$0xff]
      %v399 = vld [vmem:[%s363 + $0x28] sm:$0xff]
      %v400 = vld [vmem:[%s2] sm:$0x3]
      %v402 = vlaneseq
      %v403 = vshrl.u32 %v402, 7
      %v404 = vsub.s32 0, %v403
      %v405 = vrot.slane %v400, %v404
      %v406 = vlaneseq
      %v407 = vshrl.u32 %v406, 7
      %v408 = vsub.s32 1, %v407
      %v409 = vrot.slane %v400, %v408
      %v412 = vmul.f32 %v394, %v405
      %v413 = vmul.f32 %v395, %v409
      %v414 = vmul.f32 %v397, %v405
      %v415 = vmul.f32 %v398, %v409
      %v416 = vld [vmem:[%s0] sm:$0xff]
      %v417 = vld [vmem:[%s0 + $0x8] sm:$0xff]
      %v418 = vld [vmem:[%s0 + $0x10] sm:$0xff]
      %v419 = vld [vmem:[%s0 + $0x18] sm:$0xff]
      %v420 = vld [vmem:[%s0 + $0x20] sm:$0xf]
      %s421 = scalar_lea.vmem %s0, 40
      %v422 = vld [vmem:[%s421] sm:$0xff]
      %v423 = vld [vmem:[%s421 + $0x8] sm:$0xff]
      %v424 = vld [vmem:[%s421 + $0x10] sm:$0xff]
      %v425 = vld [vmem:[%s421 + $0x18] sm:$0xff]
      %v426 = vld [vmem:[%s421 + $0x20] sm:$0xf]
      %433 = vrot.lane.b32.xlu0 %v394, 127
      %v434 = vpop.permute.xlu0 %433
      %435 = vrot.lane.b32.xlu0 %v395, 127
      %v436 = vpop.permute.xlu0 %435
      %437 = vrot.lane.b32.xlu0 %v396, 127
      %v438 = vpop.permute.xlu0 %437
      %439 = vrot.lane.b32.xlu0 %v397, 127
      %v440 = vpop.permute.xlu0 %439
      %441 = vrot.lane.b32.xlu0 %v398, 127
      %v442 = vpop.permute.xlu0 %441
      %443 = vrot.lane.b32.xlu0 %v399, 127
      %v444 = vpop.permute.xlu0 %443
      %vm445 = vcmask 1039360
      %v446 = vsel %vm445, %v434, %v436
      %v447 = vsel %vm445, %v436, %v438
      %v448 = vsel %vm445, %v440, %v442
      %v449 = vsel %vm445, %v442, %v444
      %vm454 = vcmask 130048
      %v456 = vsel %vm454, %v422, 0
      %v459 = vsel %vm454, %v423, 0
      %v462 = vsel %vm454, %v424, 0
      %v465 = vsel %vm454, %v425, 0
      %v468 = vsel %vm454, %v426, 0
      %470 = vmatprep.subr.mxu0 %v447
      %471 = vmatpush1.msra.mxu0 %v446
      %472 = vmatprep.subr.mxu0 %v449
      %473 = vmatpush1.msra.mxu0 %v448
      %474 = vmatprep.subr.mxu0 0.0
      %475 = vmatpush1.msra.mxu0 0.0
      %476 = vmatprep.subr.mxu0 0.0
      %477 = vmatpush1.msra.mxu0 0.0
      %478 = vmatprep.subr.mxu0 0.0
      %479 = vmatpush1.msra.mxu0 0.0
      %480 = vmatprep.subr.mxu0 0.0
      %481 = vmatpush1.msra.mxu0 0.0
      %482 = vmatprep.subr.mxu0 0.0
      %483 = vmatpush1.msra.mxu0 0.0
      %484 = vmatprep.subr.mxu0 0.0
      %485 = vmatpush1.msra.mxu0 0.0
      %486 = vmatprep.subr.mxu0 0.0
      %487 = vmatpush1.msra.mxu0 0.0
      %488 = vmatprep.subr.mxu0 0.0
      %489 = vmatpush1.msra.mxu0 0.0
      %490 = vmatprep.subr.mxu0 0.0
      %491 = vmatpush1.msra.mxu0 0.0
      %492 = vmatprep.subr.mxu0 0.0
      %493 = vmatpush1.msra.mxu0 0.0
      %494 = vmatprep.subr.mxu0 0.0
      %495 = vmatpush1.msra.mxu0 0.0
      %496 = vmatprep.subr.mxu0 0.0
      %497 = vmatpush1.msra.mxu0 0.0
      %498 = vmatprep.subr.mxu0 0.0
      %499 = vmatpush1.msra.mxu0 0.0
      %500 = vmatprep.subr.mxu0 0.0
      %501 = vmatpush1.msra.mxu0 0.0
      %502 = vmatprep.subr.mxu0 0.0
      %503 = vmatpush1.msra.mxu0 0.0
      %504 = vmatprep.subr.mxu0 0.0
      %505 = vmatpush1.msra.mxu0 0.0
      %506 = vmatprep.subr.mxu0 0.0
      %507 = vmatpush1.msra.mxu0 0.0
      %508 = vmatprep.subr.mxu0 0.0
      %509 = vmatpush1.msra.mxu0 0.0
      %510 = vmatprep.subr.mxu0 0.0
      %511 = vmatpush1.msra.mxu0 0.0
      %512 = vmatprep.subr.mxu0 0.0
      %513 = vmatpush1.msra.mxu0 0.0
      %514 = vmatprep.subr.mxu0 0.0
      %515 = vmatpush1.msra.mxu0 0.0
      %516 = vmatprep.subr.mxu0 0.0
      %517 = vmatpush1.msra.mxu0 0.0
      %518 = vmatprep.subr.mxu0 0.0
      %519 = vmatpush1.msra.mxu0 0.0
      %520 = vmatprep.subr.mxu0 0.0
      %521 = vmatpush1.msra.mxu0 0.0
      %522 = vmatprep.subr.mxu0 0.0
      %523 = vmatpush1.msra.mxu0 0.0
      %524 = vmatprep.subr.mxu0 0.0
      %525 = vmatpush1.msra.mxu0 0.0
      %526 = vmatprep.subr.mxu0 0.0
      %527 = vmatpush1.msra.mxu0 0.0
      %528 = vmatprep.subr.mxu0 0.0
      %529 = vmatpush1.msra.mxu0 0.0
      %530 = vmatprep.subr.mxu0 0.0
      %531 = vmatpush1.msra.mxu0 0.0
      %532 = vmatprep.subr.mxu0 0.0
      %533 = vmatpush1.msra.mxu0 0.0
      %534 = vmatprep.mubr.f32.mxu0 0.0
      %535 = vmatmul.mubr.f32.gmra.mrb[0].mxu0 %v456
      %v536 = vpop.f32.mrb[0].mxu0
      %v537 = vadd.f32 0.0, %v536
      %v538 = vpop.f32.mrb[0].mxu0
      %v539 = vadd.f32 0.0, %v538
      %540 = vmatprep.mubr.f32.mxu0 0.0
      %541 = vmatmul.mubr.f32.gmra.mrb[0].mxu0 %v459
      %v542 = vpop.f32.mrb[0].mxu0
      %v543 = vadd.f32 0.0, %v542
      %v544 = vpop.f32.mrb[0].mxu0
      %v545 = vadd.f32 0.0, %v544
      %546 = vmatprep.mubr.f32.mxu0 0.0
      %547 = vmatmul.mubr.f32.gmra.mrb[0].mxu0 %v462
      %v548 = vpop.f32.mrb[0].mxu0
      %v549 = vadd.f32 0.0, %v548
      %v550 = vpop.f32.mrb[0].mxu0
      %v551 = vadd.f32 0.0, %v550
      %552 = vmatprep.mubr.f32.mxu0 0.0
      %553 = vmatmul.mubr.f32.gmra.mrb[0].mxu0 %v465
      %v554 = vpop.f32.mrb[0].mxu0
      %v555 = vadd.f32 0.0, %v554
      %v556 = vpop.f32.mrb[0].mxu0
      %v557 = vadd.f32 0.0, %v556
      %558 = vmatprep.mubr.f32.mxu0 0.0
      %559 = vmatmul.mubr.f32.gmra.mrb[0].mxu0 %v468
      %v560 = vpop.f32.mrb[0].mxu0
      %v561 = vadd.f32 0.0, %v560
      %v562 = vpop.f32.mrb[0].mxu0
      %v563 = vadd.f32 0.0, %v562
      %564 = vdwg.mxu0
      %v566 = vsel %vm454, %v416, 0
      %v569 = vsel %vm454, %v417, 0
      %v572 = vsel %vm454, %v418, 0
      %v575 = vsel %vm454, %v419, 0
      %v578 = vsel %vm454, %v420, 0
      %580 = vmatprep.subr.mxu0 %v413
      %581 = vmatpush1.msra.mxu0 %v412
      %582 = vmatprep.subr.mxu0 %v415
      %583 = vmatpush1.msra.mxu0 %v414
      %584 = vmatprep.subr.mxu0 0.0
      %585 = vmatpush1.msra.mxu0 0.0
      %586 = vmatprep.subr.mxu0 0.0
      %587 = vmatpush1.msra.mxu0 0.0
      %588 = vmatprep.subr.mxu0 0.0
      %589 = vmatpush1.msra.mxu0 0.0
      %590 = vmatprep.subr.mxu0 0.0
      %591 = vmatpush1.msra.mxu0 0.0
      %592 = vmatprep.subr.mxu0 0.0
      %593 = vmatpush1.msra.mxu0 0.0
      %594 = vmatprep.subr.mxu0 0.0
      %595 = vmatpush1.msra.mxu0 0.0
      %596 = vmatprep.subr.mxu0 0.0
      %597 = vmatpush1.msra.mxu0 0.0
      %598 = vmatprep.subr.mxu0 0.0
      %599 = vmatpush1.msra.mxu0 0.0
      %600 = vmatprep.subr.mxu0 0.0
      %601 = vmatpush1.msra.mxu0 0.0
      %602 = vmatprep.subr.mxu0 0.0
      %603 = vmatpush1.msra.mxu0 0.0
      %604 = vmatprep.subr.mxu0 0.0
      %605 = vmatpush1.msra.mxu0 0.0
      %606 = vmatprep.subr.mxu0 0.0
      %607 = vmatpush1.msra.mxu0 0.0
      %608 = vmatprep.subr.mxu0 0.0
      %609 = vmatpush1.msra.mxu0 0.0
      %610 = vmatprep.subr.mxu0 0.0
      %611 = vmatpush1.msra.mxu0 0.0
      %612 = vmatprep.subr.mxu0 0.0
      %613 = vmatpush1.msra.mxu0 0.0
      %614 = vmatprep.subr.mxu0 0.0
      %615 = vmatpush1.msra.mxu0 0.0
      %616 = vmatprep.subr.mxu0 0.0
      %617 = vmatpush1.msra.mxu0 0.0
      %618 = vmatprep.subr.mxu0 0.0
      %619 = vmatpush1.msra.mxu0 0.0
      %620 = vmatprep.subr.mxu0 0.0
      %621 = vmatpush1.msra.mxu0 0.0
      %622 = vmatprep.subr.mxu0 0.0
      %623 = vmatpush1.msra.mxu0 0.0
      %624 = vmatprep.subr.mxu0 0.0
      %625 = vmatpush1.msra.mxu0 0.0
      %626 = vmatprep.subr.mxu0 0.0
      %627 = vmatpush1.msra.mxu0 0.0
      %628 = vmatprep.subr.mxu0 0.0
      %629 = vmatpush1.msra.mxu0 0.0
      %630 = vmatprep.subr.mxu0 0.0
      %631 = vmatpush1.msra.mxu0 0.0
      %632 = vmatprep.subr.mxu0 0.0
      %633 = vmatpush1.msra.mxu0 0.0
      %634 = vmatprep.subr.mxu0 0.0
      %635 = vmatpush1.msra.mxu0 0.0
      %636 = vmatprep.subr.mxu0 0.0
      %637 = vmatpush1.msra.mxu0 0.0
      %638 = vmatprep.subr.mxu0 0.0
      %639 = vmatpush1.msra.mxu0 0.0
      %640 = vmatprep.subr.mxu0 0.0
      %641 = vmatpush1.msra.mxu0 0.0
      %642 = vmatprep.subr.mxu0 0.0
      %643 = vmatpush1.msra.mxu0 0.0
      %644 = vmatprep.mubr.f32.mxu0 0.0
      %645 = vmatmul.mubr.f32.gmra.mrb[0].mxu0 %v566
      %v646 = vpop.f32.mrb[0].mxu0
      %v647 = vadd.f32 %v537, %v646
      %v648 = vpop.f32.mrb[0].mxu0
      %v649 = vadd.f32 %v539, %v648
      %650 = vmatprep.mubr.f32.mxu0 0.0
      %651 = vmatmul.mubr.f32.gmra.mrb[0].mxu0 %v569
      %v652 = vpop.f32.mrb[0].mxu0
      %v653 = vadd.f32 %v543, %v652
      %v654 = vpop.f32.mrb[0].mxu0
      %v655 = vadd.f32 %v545, %v654
      %656 = vmatprep.mubr.f32.mxu0 0.0
      %657 = vmatmul.mubr.f32.gmra.mrb[0].mxu0 %v572
      %v658 = vpop.f32.mrb[0].mxu0
      %v659 = vadd.f32 %v549, %v658
      %v660 = vpop.f32.mrb[0].mxu0
      %v661 = vadd.f32 %v551, %v660
      %662 = vmatprep.mubr.f32.mxu0 0.0
      %663 = vmatmul.mubr.f32.gmra.mrb[0].mxu0 %v575
      %v664 = vpop.f32.mrb[0].mxu0
      %v665 = vadd.f32 %v555, %v664
      %v666 = vpop.f32.mrb[0].mxu0
      %v667 = vadd.f32 %v557, %v666
      %668 = vmatprep.mubr.f32.mxu0 0.0
      %669 = vmatmul.mubr.f32.gmra.mrb[0].mxu0 %v578
      %v670 = vpop.f32.mrb[0].mxu0
      %v671 = vadd.f32 %v561, %v670
      %v672 = vpop.f32.mrb[0].mxu0
      %v673 = vadd.f32 %v563, %v672
      %674 = vdwg.mxu0
      %s675 = scalar_lea.vmem %s2, 4
      %v676 = vld [vmem:[%s675] sm:$0x3]
      %v678 = vlaneseq
      %v679 = vshrl.u32 %v678, 7
      %v680 = vsub.s32 0, %v679
      %v681 = vrot.slane %v676, %v680
      %v682 = vlaneseq
      %v683 = vshrl.u32 %v682, 7
      %v684 = vsub.s32 1, %v683
      %v685 = vrot.slane %v676, %v684
      %686 = vrot.lane.b32.xlu0 %v681, 2
      %v687 = vpop.permute.xlu0 %686
      %688 = vrot.lane.b32.xlu0 %v685, 2
      %v689 = vpop.permute.xlu0 %688
      %vm690 = vcmask 15360
      %v691 = vsel %vm690, %v687, %v689
      %v695 = vmul.f32 %v394, %v687
      %v696 = vmul.f32 %v395, %v691
      %v697 = vmul.f32 %v396, %v689
      %v698 = vmul.f32 %v397, %v687
      %v699 = vmul.f32 %v398, %v691
      %v700 = vmul.f32 %v399, %v689
      %s701 = scalar_lea.vmem %s0, 80
      %v702 = vld [vmem:[%s701] sm:$0xff]
      %v703 = vld [vmem:[%s701 + $0x8] sm:$0xff]
      %v704 = vld [vmem:[%s701 + $0x10] sm:$0xff]
      %v705 = vld [vmem:[%s701 + $0x18] sm:$0xff]
      %v706 = vld [vmem:[%s701 + $0x20] sm:$0xf]
      %713 = vrot.lane.b32.xlu0 %v695, 126
      %v714 = vpop.permute.xlu0 %713
      %715 = vrot.lane.b32.xlu0 %v696, 126
      %v716 = vpop.permute.xlu0 %715
      %717 = vrot.lane.b32.xlu0 %v697, 126
      %v718 = vpop.permute.xlu0 %717
      %719 = vrot.lane.b32.xlu0 %v698, 126
      %v720 = vpop.permute.xlu0 %719
      %721 = vrot.lane.b32.xlu0 %v699, 126
      %v722 = vpop.permute.xlu0 %721
      %723 = vrot.lane.b32.xlu0 %v700, 126
      %v724 = vpop.permute.xlu0 %723
      %vm725 = vcmask 1031168
      %v726 = vsel %vm725, %v714, %v716
      %v727 = vsel %vm725, %v716, %v718
      %v728 = vsel %vm725, %v720, %v722
      %v729 = vsel %vm725, %v722, %v724
      %v735 = vsel %vm454, %v702, 0
      %v738 = vsel %vm454, %v703, 0
      %v741 = vsel %vm454, %v704, 0
      %v744 = vsel %vm454, %v705, 0
      %v747 = vsel %vm454, %v706, 0
      %749 = vmatprep.subr.mxu0 %v727
      %750 = vmatpush1.msra.mxu0 %v726
      %751 = vmatprep.subr.mxu0 %v729
      %752 = vmatpush1.msra.mxu0 %v728
      %753 = vmatprep.subr.mxu0 0.0
      %754 = vmatpush1.msra.mxu0 0.0
      %755 = vmatprep.subr.mxu0 0.0
      %756 = vmatpush1.msra.mxu0 0.0
      %757 = vmatprep.subr.mxu0 0.0
      %758 = vmatpush1.msra.mxu0 0.0
      %759 = vmatprep.subr.mxu0 0.0
      %760 = vmatpush1.msra.mxu0 0.0
      %761 = vmatprep.subr.mxu0 0.0
      %762 = vmatpush1.msra.mxu0 0.0
      %763 = vmatprep.subr.mxu0 0.0
      %764 = vmatpush1.msra.mxu0 0.0
      %765 = vmatprep.subr.mxu0 0.0
      %766 = vmatpush1.msra.mxu0 0.0
      %767 = vmatprep.subr.mxu0 0.0
      %768 = vmatpush1.msra.mxu0 0.0
      %769 = vmatprep.subr.mxu0 0.0
      %770 = vmatpush1.msra.mxu0 0.0
      %771 = vmatprep.subr.mxu0 0.0
      %772 = vmatpush1.msra.mxu0 0.0
      %773 = vmatprep.subr.mxu0 0.0
      %774 = vmatpush1.msra.mxu0 0.0
      %775 = vmatprep.subr.mxu0 0.0
      %776 = vmatpush1.msra.mxu0 0.0
      %777 = vmatprep.subr.mxu0 0.0
      %778 = vmatpush1.msra.mxu0 0.0
      %779 = vmatprep.subr.mxu0 0.0
      %780 = vmatpush1.msra.mxu0 0.0
      %781 = vmatprep.subr.mxu0 0.0
      %782 = vmatpush1.msra.mxu0 0.0
      %783 = vmatprep.subr.mxu0 0.0
      %784 = vmatpush1.msra.mxu0 0.0
      %785 = vmatprep.subr.mxu0 0.0
      %786 = vmatpush1.msra.mxu0 0.0
      %787 = vmatprep.subr.mxu0 0.0
      %788 = vmatpush1.msra.mxu0 0.0
      %789 = vmatprep.subr.mxu0 0.0
      %790 = vmatpush1.msra.mxu0 0.0
      %791 = vmatprep.subr.mxu0 0.0
      %792 = vmatpush1.msra.mxu0 0.0
      %793 = vmatprep.subr.mxu0 0.0
      %794 = vmatpush1.msra.mxu0 0.0
      %795 = vmatprep.subr.mxu0 0.0
      %796 = vmatpush1.msra.mxu0 0.0
      %797 = vmatprep.subr.mxu0 0.0
      %798 = vmatpush1.msra.mxu0 0.0
      %799 = vmatprep.subr.mxu0 0.0
      %800 = vmatpush1.msra.mxu0 0.0
      %801 = vmatprep.subr.mxu0 0.0
      %802 = vmatpush1.msra.mxu0 0.0
      %803 = vmatprep.subr.mxu0 0.0
      %804 = vmatpush1.msra.mxu0 0.0
      %805 = vmatprep.subr.mxu0 0.0
      %806 = vmatpush1.msra.mxu0 0.0
      %807 = vmatprep.subr.mxu0 0.0
      %808 = vmatpush1.msra.mxu0 0.0
      %809 = vmatprep.subr.mxu0 0.0
      %810 = vmatpush1.msra.mxu0 0.0
      %811 = vmatprep.subr.mxu0 0.0
      %812 = vmatpush1.msra.mxu0 0.0
      %813 = vmatprep.mubr.f32.mxu0 0.0
      %814 = vmatmul.mubr.f32.gmra.mrb[0].mxu0 %v735
      %v815 = vpop.f32.mrb[0].mxu0
      %v816 = vadd.f32 0.0, %v815
      %v817 = vpop.f32.mrb[0].mxu0
      %v818 = vadd.f32 0.0, %v817
      %819 = vmatprep.mubr.f32.mxu0 0.0
      %820 = vmatmul.mubr.f32.gmra.mrb[0].mxu0 %v738
      %v821 = vpop.f32.mrb[0].mxu0
      %v822 = vadd.f32 0.0, %v821
      %v823 = vpop.f32.mrb[0].mxu0
      %v824 = vadd.f32 0.0, %v823
      %825 = vmatprep.mubr.f32.mxu0 0.0
      %826 = vmatmul.mubr.f32.gmra.mrb[0].mxu0 %v741
      %v827 = vpop.f32.mrb[0].mxu0
      %v828 = vadd.f32 0.0, %v827
      %v829 = vpop.f32.mrb[0].mxu0
      %v830 = vadd.f32 0.0, %v829
      %831 = vmatprep.mubr.f32.mxu0 0.0
      %832 = vmatmul.mubr.f32.gmra.mrb[0].mxu0 %v744
      %v833 = vpop.f32.mrb[0].mxu0
      %v834 = vadd.f32 0.0, %v833
      %v835 = vpop.f32.mrb[0].mxu0
      %v836 = vadd.f32 0.0, %v835
      %837 = vmatprep.mubr.f32.mxu0 0.0
      %838 = vmatmul.mubr.f32.gmra.mrb[0].mxu0 %v747
      %v839 = vpop.f32.mrb[0].mxu0
      %v840 = vadd.f32 0.0, %v839
      %v841 = vpop.f32.mrb[0].mxu0
      %v842 = vadd.f32 0.0, %v841
      %843 = vdwg.mxu0
      %v844 = vadd.f32 %v647, %v816
      %v845 = vadd.f32 %v649, %v818
      %v846 = vadd.f32 %v653, %v822
      %v847 = vadd.f32 %v655, %v824
      %v848 = vadd.f32 %v659, %v828
      %v849 = vadd.f32 %v661, %v830
      %v850 = vadd.f32 %v665, %v834
      %v851 = vadd.f32 %v667, %v836
      %v852 = vadd.f32 %v671, %v840
      %v853 = vadd.f32 %v673, %v842
      %854 = vrot.lane.b32.xlu0 %v405, 16
      %v855 = vpop.permute.xlu0 %854
      %856 = vrot.lane.b32.xlu0 %v409, 16
      %v857 = vpop.permute.xlu0 %856
      %v858 = vsel %vm454, %v855, %v857
      %v862 = vmul.f32 %v394, %v855
      %v863 = vmul.f32 %v395, %v858
      %v864 = vmul.f32 %v396, %v857
      %v865 = vmul.f32 %v397, %v855
      %v866 = vmul.f32 %v398, %v858
      %v867 = vmul.f32 %v399, %v857
      %s868 = scalar_lea.vmem %s0, 120
      %v869 = vld [vmem:[%s868] sm:$0xff]
      %v870 = vld [vmem:[%s868 + $0x8] sm:$0xff]
      %v871 = vld [vmem:[%s868 + $0x10] sm:$0xff]
      %v872 = vld [vmem:[%s868 + $0x18] sm:$0xff]
      %v873 = vld [vmem:[%s868 + $0x20] sm:$0xf]
      %880 = vrot.lane.b32.xlu0 %v862, 112
      %v881 = vpop.permute.xlu0 %880
      %882 = vrot.lane.b32.xlu0 %v863, 112
      %v883 = vpop.permute.xlu0 %882
      %884 = vrot.lane.b32.xlu0 %v864, 112
      %v885 = vpop.permute.xlu0 %884
      %886 = vrot.lane.b32.xlu0 %v865, 112
      %v887 = vpop.permute.xlu0 %886
      %888 = vrot.lane.b32.xlu0 %v866, 112
      %v889 = vpop.permute.xlu0 %888
      %890 = vrot.lane.b32.xlu0 %v867, 112
      %v891 = vpop.permute.xlu0 %890
      %vm892 = vcmask 916480
      %v893 = vsel %vm892, %v881, %v883
      %v894 = vsel %vm892, %v883, %v885
      %v895 = vsel %vm892, %v887, %v889
      %v896 = vsel %vm892, %v889, %v891
      %v902 = vsel %vm454, %v869, 0
      %v905 = vsel %vm454, %v870, 0
      %v908 = vsel %vm454, %v871, 0
      %v911 = vsel %vm454, %v872, 0
      %v914 = vsel %vm454, %v873, 0
      %916 = vmatprep.subr.mxu0 %v894
      %917 = vmatpush1.msra.mxu0 %v893
      %918 = vmatprep.subr.mxu0 %v896
      %919 = vmatpush1.msra.mxu0 %v895
      %920 = vmatprep.subr.mxu0 0.0
      %921 = vmatpush1.msra.mxu0 0.0
      %922 = vmatprep.subr.mxu0 0.0
      %923 = vmatpush1.msra.mxu0 0.0
      %924 = vmatprep.subr.mxu0 0.0
      %925 = vmatpush1.msra.mxu0 0.0
      %926 = vmatprep.subr.mxu0 0.0
      %927 = vmatpush1.msra.mxu0 0.0
      %928 = vmatprep.subr.mxu0 0.0
      %929 = vmatpush1.msra.mxu0 0.0
      %930 = vmatprep.subr.mxu0 0.0
      %931 = vmatpush1.msra.mxu0 0.0
      %932 = vmatprep.subr.mxu0 0.0
      %933 = vmatpush1.msra.mxu0 0.0
      %934 = vmatprep.subr.mxu0 0.0
      %935 = vmatpush1.msra.mxu0 0.0
      %936 = vmatprep.subr.mxu0 0.0
      %937 = vmatpush1.msra.mxu0 0.0
      %938 = vmatprep.subr.mxu0 0.0
      %939 = vmatpush1.msra.mxu0 0.0
      %940 = vmatprep.subr.mxu0 0.0
      %941 = vmatpush1.msra.mxu0 0.0
      %942 = vmatprep.subr.mxu0 0.0
      %943 = vmatpush1.msra.mxu0 0.0
      %944 = vmatprep.subr.mxu0 0.0
      %945 = vmatpush1.msra.mxu0 0.0
      %946 = vmatprep.subr.mxu0 0.0
      %947 = vmatpush1.msra.mxu0 0.0
      %948 = vmatprep.subr.mxu0 0.0
      %949 = vmatpush1.msra.mxu0 0.0
      %950 = vmatprep.subr.mxu0 0.0
      %951 = vmatpush1.msra.mxu0 0.0
      %952 = vmatprep.subr.mxu0 0.0
      %953 = vmatpush1.msra.mxu0 0.0
      %954 = vmatprep.subr.mxu0 0.0
      %955 = vmatpush1.msra.mxu0 0.0
      %956 = vmatprep.subr.mxu0 0.0
      %957 = vmatpush1.msra.mxu0 0.0
      %958 = vmatprep.subr.mxu0 0.0
      %959 = vmatpush1.msra.mxu0 0.0
      %960 = vmatprep.subr.mxu0 0.0
      %961 = vmatpush1.msra.mxu0 0.0
      %962 = vmatprep.subr.mxu0 0.0
      %963 = vmatpush1.msra.mxu0 0.0
      %964 = vmatprep.subr.mxu0 0.0
      %965 = vmatpush1.msra.mxu0 0.0
      %966 = vmatprep.subr.mxu0 0.0
      %967 = vmatpush1.msra.mxu0 0.0
      %968 = vmatprep.subr.mxu0 0.0
      %969 = vmatpush1.msra.mxu0 0.0
      %970 = vmatprep.subr.mxu0 0.0
      %971 = vmatpush1.msra.mxu0 0.0
      %972 = vmatprep.subr.mxu0 0.0
      %973 = vmatpush1.msra.mxu0 0.0
      %974 = vmatprep.subr.mxu0 0.0
      %975 = vmatpush1.msra.mxu0 0.0
      %976 = vmatprep.subr.mxu0 0.0
      %977 = vmatpush1.msra.mxu0 0.0
      %978 = vmatprep.subr.mxu0 0.0
      %979 = vmatpush1.msra.mxu0 0.0
      %980 = vmatprep.mubr.f32.mxu0 0.0
      %981 = vmatmul.mubr.f32.gmra.mrb[0].mxu0 %v902
      %v982 = vpop.f32.mrb[0].mxu0
      %v983 = vadd.f32 0.0, %v982
      %v984 = vpop.f32.mrb[0].mxu0
      %v985 = vadd.f32 0.0, %v984
      %986 = vmatprep.mubr.f32.mxu0 0.0
      %987 = vmatmul.mubr.f32.gmra.mrb[0].mxu0 %v905
      %v988 = vpop.f32.mrb[0].mxu0
      %v989 = vadd.f32 0.0, %v988
      %v990 = vpop.f32.mrb[0].mxu0
      %v991 = vadd.f32 0.0, %v990
      %992 = vmatprep.mubr.f32.mxu0 0.0
      %993 = vmatmul.mubr.f32.gmra.mrb[0].mxu0 %v908
      %v994 = vpop.f32.mrb[0].mxu0
      %v995 = vadd.f32 0.0, %v994
      %v996 = vpop.f32.mrb[0].mxu0
      %v997 = vadd.f32 0.0, %v996
      %998 = vmatprep.mubr.f32.mxu0 0.0
      %999 = vmatmul.mubr.f32.gmra.mrb[0].mxu0 %v911
      %v1000 = vpop.f32.mrb[0].mxu0
      %v1001 = vadd.f32 0.0, %v1000
      %v1002 = vpop.f32.mrb[0].mxu0
      %v1003 = vadd.f32 0.0, %v1002
      %1004 = vmatprep.mubr.f32.mxu0 0.0
      %1005 = vmatmul.mubr.f32.gmra.mrb[0].mxu0 %v914
      %v1006 = vpop.f32.mrb[0].mxu0
      %v1007 = vadd.f32 0.0, %v1006
      %v1008 = vpop.f32.mrb[0].mxu0
      %v1009 = vadd.f32 0.0, %v1008
      %1010 = vdwg.mxu0
      %v1011 = vadd.f32 %v844, %v983
      %v1012 = vadd.f32 %v845, %v985
      %v1013 = vadd.f32 %v846, %v989
      %v1014 = vadd.f32 %v847, %v991
      %v1015 = vadd.f32 %v848, %v995
      %v1016 = vadd.f32 %v849, %v997
      %v1017 = vadd.f32 %v850, %v1001
      %v1018 = vadd.f32 %v851, %v1003
      %v1019 = vadd.f32 %v852, %v1007
      %v1020 = vadd.f32 %v853, %v1009
      %s1021 = scalar_lea.vmem %s0, 160
      %v1022 = vld [vmem:[%s1021] sm:$0xff]
      %v1023 = vld [vmem:[%s1021 + $0x8] sm:$0xff]
      %v1024 = vld [vmem:[%s1021 + $0x10] sm:$0xff]
      %v1025 = vld [vmem:[%s1021 + $0x18] sm:$0xff]
      %v1026 = vld [vmem:[%s1021 + $0x20] sm:$0xf]
      %1027 = vrot.lane.b32.xlu0 %v394, 111
      %v1028 = vpop.permute.xlu0 %1027
      %1029 = vrot.lane.b32.xlu0 %v395, 111
      %v1030 = vpop.permute.xlu0 %1029
      %1031 = vrot.lane.b32.xlu0 %v396, 111
      %v1032 = vpop.permute.xlu0 %1031
      %1033 = vrot.lane.b32.xlu0 %v397, 111
      %v1034 = vpop.permute.xlu0 %1033
      %1035 = vrot.lane.b32.xlu0 %v398, 111
      %v1036 = vpop.permute.xlu0 %1035
      %1037 = vrot.lane.b32.xlu0 %v399, 111
      %v1038 = vpop.permute.xlu0 %1037
      %vm1039 = vcmask 908288
      %v1040 = vsel %vm1039, %v1028, %v1030
      %v1041 = vsel %vm1039, %v1030, %v1032
      %v1042 = vsel %vm1039, %v1034, %v1036
      %v1043 = vsel %vm1039, %v1036, %v1038
      %v1049 = vsel %vm454, %v1022, 0
      %v1052 = vsel %vm454, %v1023, 0
      %v1055 = vsel %vm454, %v1024, 0
      %v1058 = vsel %vm454, %v1025, 0
      %v1061 = vsel %vm454, %v1026, 0
      %1063 = vmatprep.subr.mxu0 %v1041
      %1064 = vmatpush1.msra.mxu0 %v1040
      %1065 = vmatprep.subr.mxu0 %v1043
      %1066 = vmatpush1.msra.mxu0 %v1042
      %1067 = vmatprep.subr.mxu0 0.0
      %1068 = vmatpush1.msra.mxu0 0.0
      %1069 = vmatprep.subr.mxu0 0.0
      %1070 = vmatpush1.msra.mxu0 0.0
      %1071 = vmatprep.subr.mxu0 0.0
      %1072 = vmatpush1.msra.mxu0 0.0
      %1073 = vmatprep.subr.mxu0 0.0
      %1074 = vmatpush1.msra.mxu0 0.0
      %1075 = vmatprep.subr.mxu0 0.0
      %1076 = vmatpush1.msra.mxu0 0.0
      %1077 = vmatprep.subr.mxu0 0.0
      %1078 = vmatpush1.msra.mxu0 0.0
      %1079 = vmatprep.subr.mxu0 0.0
      %1080 = vmatpush1.msra.mxu0 0.0
      %1081 = vmatprep.subr.mxu0 0.0
      %1082 = vmatpush1.msra.mxu0 0.0
      %1083 = vmatprep.subr.mxu0 0.0
      %1084 = vmatpush1.msra.mxu0 0.0
      %1085 = vmatprep.subr.mxu0 0.0
      %1086 = vmatpush1.msra.mxu0 0.0
      %1087 = vmatprep.subr.mxu0 0.0
      %1088 = vmatpush1.msra.mxu0 0.0
      %1089 = vmatprep.subr.mxu0 0.0
      %1090 = vmatpush1.msra.mxu0 0.0
      %1091 = vmatprep.subr.mxu0 0.0
      %1092 = vmatpush1.msra.mxu0 0.0
      %1093 = vmatprep.subr.mxu0 0.0
      %1094 = vmatpush1.msra.mxu0 0.0
      %1095 = vmatprep.subr.mxu0 0.0
      %1096 = vmatpush1.msra.mxu0 0.0
      %1097 = vmatprep.subr.mxu0 0.0
      %1098 = vmatpush1.msra.mxu0 0.0
      %1099 = vmatprep.subr.mxu0 0.0
      %1100 = vmatpush1.msra.mxu0 0.0
      %1101 = vmatprep.subr.mxu0 0.0
      %1102 = vmatpush1.msra.mxu0 0.0
      %1103 = vmatprep.subr.mxu0 0.0
      %1104 = vmatpush1.msra.mxu0 0.0
      %1105 = vmatprep.subr.mxu0 0.0
      %1106 = vmatpush1.msra.mxu0 0.0
      %1107 = vmatprep.subr.mxu0 0.0
      %1108 = vmatpush1.msra.mxu0 0.0
      %1109 = vmatprep.subr.mxu0 0.0
      %1110 = vmatpush1.msra.mxu0 0.0
      %1111 = vmatprep.subr.mxu0 0.0
      %1112 = vmatpush1.msra.mxu0 0.0
      %1113 = vmatprep.subr.mxu0 0.0
      %1114 = vmatpush1.msra.mxu0 0.0
      %1115 = vmatprep.subr.mxu0 0.0
      %1116 = vmatpush1.msra.mxu0 0.0
      %1117 = vmatprep.subr.mxu0 0.0
      %1118 = vmatpush1.msra.mxu0 0.0
      %1119 = vmatprep.subr.mxu0 0.0
      %1120 = vmatpush1.msra.mxu0 0.0
      %1121 = vmatprep.subr.mxu0 0.0
      %1122 = vmatpush1.msra.mxu0 0.0
      %1123 = vmatprep.subr.mxu0 0.0
      %1124 = vmatpush1.msra.mxu0 0.0
      %1125 = vmatprep.subr.mxu0 0.0
      %1126 = vmatpush1.msra.mxu0 0.0
      %1127 = vmatprep.mubr.f32.mxu0 0.0
      %1128 = vmatmul.mubr.f32.gmra.mrb[0].mxu0 %v1049
      %v1129 = vpop.f32.mrb[0].mxu0
      %v1130 = vadd.f32 0.0, %v1129
      %v1131 = vpop.f32.mrb[0].mxu0
      %v1132 = vadd.f32 0.0, %v1131
      %1133 = vmatprep.mubr.f32.mxu0 0.0
      %1134 = vmatmul.mubr.f32.gmra.mrb[0].mxu0 %v1052
      %v1135 = vpop.f32.mrb[0].mxu0
      %v1136 = vadd.f32 0.0, %v1135
      %v1137 = vpop.f32.mrb[0].mxu0
      %v1138 = vadd.f32 0.0, %v1137
      %1139 = vmatprep.mubr.f32.mxu0 0.0
      %1140 = vmatmul.mubr.f32.gmra.mrb[0].mxu0 %v1055
      %v1141 = vpop.f32.mrb[0].mxu0
      %v1142 = vadd.f32 0.0, %v1141
      %v1143 = vpop.f32.mrb[0].mxu0
      %v1144 = vadd.f32 0.0, %v1143
      %1145 = vmatprep.mubr.f32.mxu0 0.0
      %1146 = vmatmul.mubr.f32.gmra.mrb[0].mxu0 %v1058
      %v1147 = vpop.f32.mrb[0].mxu0
      %v1148 = vadd.f32 0.0, %v1147
      %v1149 = vpop.f32.mrb[0].mxu0
      %v1150 = vadd.f32 0.0, %v1149
      %1151 = vmatprep.mubr.f32.mxu0 0.0
      %1152 = vmatmul.mubr.f32.gmra.mrb[0].mxu0 %v1061
      %v1153 = vpop.f32.mrb[0].mxu0
      %v1154 = vadd.f32 0.0, %v1153
      %v1155 = vpop.f32.mrb[0].mxu0
      %v1156 = vadd.f32 0.0, %v1155
      %1157 = vdwg.mxu0
      %v1158 = vadd.f32 %v1011, %v1130
      %v1159 = vadd.f32 %v1012, %v1132
      %v1160 = vadd.f32 %v1013, %v1136
      %v1161 = vadd.f32 %v1014, %v1138
      %v1162 = vadd.f32 %v1015, %v1142
      %v1163 = vadd.f32 %v1016, %v1144
      %v1164 = vadd.f32 %v1017, %v1148
      %v1165 = vadd.f32 %v1018, %v1150
      %v1166 = vadd.f32 %v1019, %v1154
      %v1167 = vadd.f32 %v1020, %v1156
      %1168 = vrot.lane.b32.xlu0 %v681, 18
      %v1169 = vpop.permute.xlu0 %1168
      %1170 = vrot.lane.b32.xlu0 %v685, 18
      %v1171 = vpop.permute.xlu0 %1170
      %vm1172 = vcmask 146432
      %v1173 = vsel %vm1172, %v1169, %v1171
      %v1177 = vmul.f32 %v394, %v1169
      %v1178 = vmul.f32 %v395, %v1173
      %v1179 = vmul.f32 %v396, %v1171
      %v1180 = vmul.f32 %v397, %v1169
      %v1181 = vmul.f32 %v398, %v1173
      %v1182 = vmul.f32 %v399, %v1171
      %s1183 = scalar_lea.vmem %s0, 200
      %v1184 = vld [vmem:[%s1183] sm:$0xff]
      %v1185 = vld [vmem:[%s1183 + $0x8] sm:$0xff]
      %v1186 = vld [vmem:[%s1183 + $0x10] sm:$0xff]
      %v1187 = vld [vmem:[%s1183 + $0x18] sm:$0xff]
      %v1188 = vld [vmem:[%s1183 + $0x20] sm:$0xf]
      %1195 = vrot.lane.b32.xlu0 %v1177, 110
      %v1196 = vpop.permute.xlu0 %1195
      %1197 = vrot.lane.b32.xlu0 %v1178, 110
      %v1198 = vpop.permute.xlu0 %1197
      %1199 = vrot.lane.b32.xlu0 %v1179, 110
      %v1200 = vpop.permute.xlu0 %1199
      %1201 = vrot.lane.b32.xlu0 %v1180, 110
      %v1202 = vpop.permute.xlu0 %1201
      %1203 = vrot.lane.b32.xlu0 %v1181, 110
      %v1204 = vpop.permute.xlu0 %1203
      %1205 = vrot.lane.b32.xlu0 %v1182, 110
      %v1206 = vpop.permute.xlu0 %1205
      %vm1207 = vcmask 900096
      %v1208 = vsel %vm1207, %v1196, %v1198
      %v1209 = vsel %vm1207, %v1198, %v1200
      %v1210 = vsel %vm1207, %v1202, %v1204
      %v1211 = vsel %vm1207, %v1204, %v1206
      %v1217 = vsel %vm454, %v1184, 0
      %v1220 = vsel %vm454, %v1185, 0
      %v1223 = vsel %vm454, %v1186, 0
      %v1226 = vsel %vm454, %v1187, 0
      %v1229 = vsel %vm454, %v1188, 0
      %1231 = vmatprep.subr.mxu0 %v1209
      %1232 = vmatpush1.msra.mxu0 %v1208
      %1233 = vmatprep.subr.mxu0 %v1211
      %1234 = vmatpush1.msra.mxu0 %v1210
      %1235 = vmatprep.subr.mxu0 0.0
      %1236 = vmatpush1.msra.mxu0 0.0
      %1237 = vmatprep.subr.mxu0 0.0
      %1238 = vmatpush1.msra.mxu0 0.0
      %1239 = vmatprep.subr.mxu0 0.0
      %1240 = vmatpush1.msra.mxu0 0.0
      %1241 = vmatprep.subr.mxu0 0.0
      %1242 = vmatpush1.msra.mxu0 0.0
      %1243 = vmatprep.subr.mxu0 0.0
      %1244 = vmatpush1.msra.mxu0 0.0
      %1245 = vmatprep.subr.mxu0 0.0
      %1246 = vmatpush1.msra.mxu0 0.0
      %1247 = vmatprep.subr.mxu0 0.0
      %1248 = vmatpush1.msra.mxu0 0.0
      %1249 = vmatprep.subr.mxu0 0.0
      %1250 = vmatpush1.msra.mxu0 0.0
      %1251 = vmatprep.subr.mxu0 0.0
      %1252 = vmatpush1.msra.mxu0 0.0
      %1253 = vmatprep.subr.mxu0 0.0
      %1254 = vmatpush1.msra.mxu0 0.0
      %1255 = vmatprep.subr.mxu0 0.0
      %1256 = vmatpush1.msra.mxu0 0.0
      %1257 = vmatprep.subr.mxu0 0.0
      %1258 = vmatpush1.msra.mxu0 0.0
      %1259 = vmatprep.subr.mxu0 0.0
      %1260 = vmatpush1.msra.mxu0 0.0
      %1261 = vmatprep.subr.mxu0 0.0
      %1262 = vmatpush1.msra.mxu0 0.0
      %1263 = vmatprep.subr.mxu0 0.0
      %1264 = vmatpush1.msra.mxu0 0.0
      %1265 = vmatprep.subr.mxu0 0.0
      %1266 = vmatpush1.msra.mxu0 0.0
      %1267 = vmatprep.subr.mxu0 0.0
      %1268 = vmatpush1.msra.mxu0 0.0
      %1269 = vmatprep.subr.mxu0 0.0
      %1270 = vmatpush1.msra.mxu0 0.0
      %1271 = vmatprep.subr.mxu0 0.0
      %1272 = vmatpush1.msra.mxu0 0.0
      %1273 = vmatprep.subr.mxu0 0.0
      %1274 = vmatpush1.msra.mxu0 0.0
      %1275 = vmatprep.subr.mxu0 0.0
      %1276 = vmatpush1.msra.mxu0 0.0
      %1277 = vmatprep.subr.mxu0 0.0
      %1278 = vmatpush1.msra.mxu0 0.0
      %1279 = vmatprep.subr.mxu0 0.0
      %1280 = vmatpush1.msra.mxu0 0.0
      %1281 = vmatprep.subr.mxu0 0.0
      %1282 = vmatpush1.msra.mxu0 0.0
      %1283 = vmatprep.subr.mxu0 0.0
      %1284 = vmatpush1.msra.mxu0 0.0
      %1285 = vmatprep.subr.mxu0 0.0
      %1286 = vmatpush1.msra.mxu0 0.0
      %1287 = vmatprep.subr.mxu0 0.0
      %1288 = vmatpush1.msra.mxu0 0.0
      %1289 = vmatprep.subr.mxu0 0.0
      %1290 = vmatpush1.msra.mxu0 0.0
      %1291 = vmatprep.subr.mxu0 0.0
      %1292 = vmatpush1.msra.mxu0 0.0
      %1293 = vmatprep.subr.mxu0 0.0
      %1294 = vmatpush1.msra.mxu0 0.0
      %1295 = vmatprep.mubr.f32.mxu0 0.0
      %1296 = vmatmul.mubr.f32.gmra.mrb[0].mxu0 %v1217
      %v1297 = vpop.f32.mrb[0].mxu0
      %v1298 = vadd.f32 0.0, %v1297
      %v1299 = vpop.f32.mrb[0].mxu0
      %v1300 = vadd.f32 0.0, %v1299
      %1301 = vmatprep.mubr.f32.mxu0 0.0
      %1302 = vmatmul.mubr.f32.gmra.mrb[0].mxu0 %v1220
      %v1303 = vpop.f32.mrb[0].mxu0
      %v1304 = vadd.f32 0.0, %v1303
      %v1305 = vpop.f32.mrb[0].mxu0
      %v1306 = vadd.f32 0.0, %v1305
      %1307 = vmatprep.mubr.f32.mxu0 0.0
      %1308 = vmatmul.mubr.f32.gmra.mrb[0].mxu0 %v1223
      %v1309 = vpop.f32.mrb[0].mxu0
      %v1310 = vadd.f32 0.0, %v1309
      %v1311 = vpop.f32.mrb[0].mxu0
      %v1312 = vadd.f32 0.0, %v1311
      %1313 = vmatprep.mubr.f32.mxu0 0.0
      %1314 = vmatmul.mubr.f32.gmra.mrb[0].mxu0 %v1226
      %v1315 = vpop.f32.mrb[0].mxu0
      %v1316 = vadd.f32 0.0, %v1315
      %v1317 = vpop.f32.mrb[0].mxu0
      %v1318 = vadd.f32 0.0, %v1317
      %1319 = vmatprep.mubr.f32.mxu0 0.0
      %1320 = vmatmul.mubr.f32.gmra.mrb[0].mxu0 %v1229
      %v1321 = vpop.f32.mrb[0].mxu0
      %v1322 = vadd.f32 0.0, %v1321
      %v1323 = vpop.f32.mrb[0].mxu0
      %v1324 = vadd.f32 0.0, %v1323
      %1325 = vdwg.mxu0
      %v1326 = vadd.f32 %v1158, %v1298
      %v1327 = vadd.f32 %v1159, %v1300
      %v1328 = vadd.f32 %v1160, %v1304
      %v1329 = vadd.f32 %v1161, %v1306
      %v1330 = vadd.f32 %v1162, %v1310
      %v1331 = vadd.f32 %v1163, %v1312
      %v1332 = vadd.f32 %v1164, %v1316
      %v1333 = vadd.f32 %v1165, %v1318
      %v1334 = vadd.f32 %v1166, %v1322
      %v1335 = vadd.f32 %v1167, %v1324
      %1336 = vrot.lane.b32.xlu0 %v405, 32
      %v1337 = vpop.permute.xlu0 %1336
      %1338 = vrot.lane.b32.xlu0 %v409, 32
      %v1339 = vpop.permute.xlu0 %1338
      %vm1340 = vcmask 261120
      %v1341 = vsel %vm1340, %v1337, %v1339
      %v1345 = vmul.f32 %v394, %v1337
      %v1346 = vmul.f32 %v395, %v1341
      %v1347 = vmul.f32 %v396, %v1339
      %v1348 = vmul.f32 %v397, %v1337
      %v1349 = vmul.f32 %v398, %v1341
      %v1350 = vmul.f32 %v399, %v1339
      %s1351 = scalar_lea.vmem %s0, 240
      %v1352 = vld [vmem:[%s1351] sm:$0xff]
      %v1353 = vld [vmem:[%s1351 + $0x8] sm:$0xff]
      %v1354 = vld [vmem:[%s1351 + $0x10] sm:$0xff]
      %v1355 = vld [vmem:[%s1351 + $0x18] sm:$0xff]
      %v1356 = vld [vmem:[%s1351 + $0x20] sm:$0xf]
      %1363 = vrot.lane.b32.xlu0 %v1345, 96
      %v1364 = vpop.permute.xlu0 %1363
      %1365 = vrot.lane.b32.xlu0 %v1346, 96
      %v1366 = vpop.permute.xlu0 %1365
      %1367 = vrot.lane.b32.xlu0 %v1347, 96
      %v1368 = vpop.permute.xlu0 %1367
      %1369 = vrot.lane.b32.xlu0 %v1348, 96
      %v1370 = vpop.permute.xlu0 %1369
      %1371 = vrot.lane.b32.xlu0 %v1349, 96
      %v1372 = vpop.permute.xlu0 %1371
      %1373 = vrot.lane.b32.xlu0 %v1350, 96
      %v1374 = vpop.permute.xlu0 %1373
      %vm1375 = vcmask 785408
      %v1376 = vsel %vm1375, %v1364, %v1366
      %v1377 = vsel %vm1375, %v1366, %v1368
      %v1378 = vsel %vm1375, %v1370, %v1372
      %v1379 = vsel %vm1375, %v1372, %v1374
      %v1385 = vsel %vm454, %v1352, 0
      %v1388 = vsel %vm454, %v1353, 0
      %v1391 = vsel %vm454, %v1354, 0
      %v1394 = vsel %vm454, %v1355, 0
      %v1397 = vsel %vm454, %v1356, 0
      %1399 = vmatprep.subr.mxu0 %v1377
      %1400 = vmatpush1.msra.mxu0 %v1376
      %1401 = vmatprep.subr.mxu0 %v1379
      %1402 = vmatpush1.msra.mxu0 %v1378
      %1403 = vmatprep.subr.mxu0 0.0
      %1404 = vmatpush1.msra.mxu0 0.0
      %1405 = vmatprep.subr.mxu0 0.0
      %1406 = vmatpush1.msra.mxu0 0.0
      %1407 = vmatprep.subr.mxu0 0.0
      %1408 = vmatpush1.msra.mxu0 0.0
      %1409 = vmatprep.subr.mxu0 0.0
      %1410 = vmatpush1.msra.mxu0 0.0
      %1411 = vmatprep.subr.mxu0 0.0
      %1412 = vmatpush1.msra.mxu0 0.0
      %1413 = vmatprep.subr.mxu0 0.0
      %1414 = vmatpush1.msra.mxu0 0.0
      %1415 = vmatprep.subr.mxu0 0.0
      %1416 = vmatpush1.msra.mxu0 0.0
      %1417 = vmatprep.subr.mxu0 0.0
      %1418 = vmatpush1.msra.mxu0 0.0
      %1419 = vmatprep.subr.mxu0 0.0
      %1420 = vmatpush1.msra.mxu0 0.0
      %1421 = vmatprep.subr.mxu0 0.0
      %1422 = vmatpush1.msra.mxu0 0.0
      %1423 = vmatprep.subr.mxu0 0.0
      %1424 = vmatpush1.msra.mxu0 0.0
      %1425 = vmatprep.subr.mxu0 0.0
      %1426 = vmatpush1.msra.mxu0 0.0
      %1427 = vmatprep.subr.mxu0 0.0
      %1428 = vmatpush1.msra.mxu0 0.0
      %1429 = vmatprep.subr.mxu0 0.0
      %1430 = vmatpush1.msra.mxu0 0.0
      %1431 = vmatprep.subr.mxu0 0.0
      %1432 = vmatpush1.msra.mxu0 0.0
      %1433 = vmatprep.subr.mxu0 0.0
      %1434 = vmatpush1.msra.mxu0 0.0
      %1435 = vmatprep.subr.mxu0 0.0
      %1436 = vmatpush1.msra.mxu0 0.0
      %1437 = vmatprep.subr.mxu0 0.0
      %1438 = vmatpush1.msra.mxu0 0.0
      %1439 = vmatprep.subr.mxu0 0.0
      %1440 = vmatpush1.msra.mxu0 0.0
      %1441 = vmatprep.subr.mxu0 0.0
      %1442 = vmatpush1.msra.mxu0 0.0
      %1443 = vmatprep.subr.mxu0 0.0
      %1444 = vmatpush1.msra.mxu0 0.0
      %1445 = vmatprep.subr.mxu0 0.0
      %1446 = vmatpush1.msra.mxu0 0.0
      %1447 = vmatprep.subr.mxu0 0.0
      %1448 = vmatpush1.msra.mxu0 0.0
      %1449 = vmatprep.subr.mxu0 0.0
      %1450 = vmatpush1.msra.mxu0 0.0
      %1451 = vmatprep.subr.mxu0 0.0
      %1452 = vmatpush1.msra.mxu0 0.0
      %1453 = vmatprep.subr.mxu0 0.0
      %1454 = vmatpush1.msra.mxu0 0.0
      %1455 = vmatprep.subr.mxu0 0.0
      %1456 = vmatpush1.msra.mxu0 0.0
      %1457 = vmatprep.subr.mxu0 0.0
      %1458 = vmatpush1.msra.mxu0 0.0
      %1459 = vmatprep.subr.mxu0 0.0
      %1460 = vmatpush1.msra.mxu0 0.0
      %1461 = vmatprep.subr.mxu0 0.0
      %1462 = vmatpush1.msra.mxu0 0.0
      %1463 = vmatprep.mubr.f32.mxu0 0.0
      %1464 = vmatmul.mubr.f32.gmra.mrb[0].mxu0 %v1385
      %v1465 = vpop.f32.mrb[0].mxu0
      %v1466 = vadd.f32 0.0, %v1465
      %v1467 = vpop.f32.mrb[0].mxu0
      %v1468 = vadd.f32 0.0, %v1467
      %1469 = vmatprep.mubr.f32.mxu0 0.0
      %1470 = vmatmul.mubr.f32.gmra.mrb[0].mxu0 %v1388
      %v1471 = vpop.f32.mrb[0].mxu0
      %v1472 = vadd.f32 0.0, %v1471
      %v1473 = vpop.f32.mrb[0].mxu0
      %v1474 = vadd.f32 0.0, %v1473
      %1475 = vmatprep.mubr.f32.mxu0 0.0
      %1476 = vmatmul.mubr.f32.gmra.mrb[0].mxu0 %v1391
      %v1477 = vpop.f32.mrb[0].mxu0
      %v1478 = vadd.f32 0.0, %v1477
      %v1479 = vpop.f32.mrb[0].mxu0
      %v1480 = vadd.f32 0.0, %v1479
      %1481 = vmatprep.mubr.f32.mxu0 0.0
      %1482 = vmatmul.mubr.f32.gmra.mrb[0].mxu0 %v1394
      %v1483 = vpop.f32.mrb[0].mxu0
      %v1484 = vadd.f32 0.0, %v1483
      %v1485 = vpop.f32.mrb[0].mxu0
      %v1486 = vadd.f32 0.0, %v1485
      %1487 = vmatprep.mubr.f32.mxu0 0.0
      %1488 = vmatmul.mubr.f32.gmra.mrb[0].mxu0 %v1397
      %v1489 = vpop.f32.mrb[0].mxu0
      %v1490 = vadd.f32 0.0, %v1489
      %v1491 = vpop.f32.mrb[0].mxu0
      %v1492 = vadd.f32 0.0, %v1491
      %1493 = vdwg.mxu0
      %v1494 = vadd.f32 %v1326, %v1466
      %v1495 = vadd.f32 %v1327, %v1468
      %v1496 = vadd.f32 %v1328, %v1472
      %v1497 = vadd.f32 %v1329, %v1474
      %v1498 = vadd.f32 %v1330, %v1478
      %v1499 = vadd.f32 %v1331, %v1480
      %v1500 = vadd.f32 %v1332, %v1484
      %v1501 = vadd.f32 %v1333, %v1486
      %v1502 = vadd.f32 %v1334, %v1490
      %v1503 = vadd.f32 %v1335, %v1492
      %s1504 = scalar_lea.vmem %s0, 280
      %v1505 = vld [vmem:[%s1504] sm:$0xff]
      %v1506 = vld [vmem:[%s1504 + $0x8] sm:$0xff]
      %v1507 = vld [vmem:[%s1504 + $0x10] sm:$0xff]
      %v1508 = vld [vmem:[%s1504 + $0x18] sm:$0xff]
      %v1509 = vld [vmem:[%s1504 + $0x20] sm:$0xf]
      %1510 = vrot.lane.b32.xlu0 %v394, 95
      %v1511 = vpop.permute.xlu0 %1510
      %1512 = vrot.lane.b32.xlu0 %v395, 95
      %v1513 = vpop.permute.xlu0 %1512
      %1514 = vrot.lane.b32.xlu0 %v396, 95
      %v1515 = vpop.permute.xlu0 %1514
      %1516 = vrot.lane.b32.xlu0 %v397, 95
      %v1517 = vpop.permute.xlu0 %1516
      %1518 = vrot.lane.b32.xlu0 %v398, 95
      %v1519 = vpop.permute.xlu0 %1518
      %1520 = vrot.lane.b32.xlu0 %v399, 95
      %v1521 = vpop.permute.xlu0 %1520
      %vm1522 = vcmask 777216
      %v1523 = vsel %vm1522, %v1511, %v1513
      %v1524 = vsel %vm1522, %v1513, %v1515
      %v1525 = vsel %vm1522, %v1517, %v1519
      %v1526 = vsel %vm1522, %v1519, %v1521
      %v1532 = vsel %vm454, %v1505, 0
      %v1535 = vsel %vm454, %v1506, 0
      %v1538 = vsel %vm454, %v1507, 0
      %v1541 = vsel %vm454, %v1508, 0
      %v1544 = vsel %vm454, %v1509, 0
      %1546 = vmatprep.subr.mxu0 %v1524
      %1547 = vmatpush1.msra.mxu0 %v1523
      %1548 = vmatprep.subr.mxu0 %v1526
      %1549 = vmatpush1.msra.mxu0 %v1525
      %1550 = vmatprep.subr.mxu0 0.0
      %1551 = vmatpush1.msra.mxu0 0.0
      %1552 = vmatprep.subr.mxu0 0.0
      %1553 = vmatpush1.msra.mxu0 0.0
      %1554 = vmatprep.subr.mxu0 0.0
      %1555 = vmatpush1.msra.mxu0 0.0
      %1556 = vmatprep.subr.mxu0 0.0
      %1557 = vmatpush1.msra.mxu0 0.0
      %1558 = vmatprep.subr.mxu0 0.0
      %1559 = vmatpush1.msra.mxu0 0.0
      %1560 = vmatprep.subr.mxu0 0.0
      %1561 = vmatpush1.msra.mxu0 0.0
      %1562 = vmatprep.subr.mxu0 0.0
      %1563 = vmatpush1.msra.mxu0 0.0
      %1564 = vmatprep.subr.mxu0 0.0
      %1565 = vmatpush1.msra.mxu0 0.0
      %1566 = vmatprep.subr.mxu0 0.0
      %1567 = vmatpush1.msra.mxu0 0.0
      %1568 = vmatprep.subr.mxu0 0.0
      %1569 = vmatpush1.msra.mxu0 0.0
      %1570 = vmatprep.subr.mxu0 0.0
      %1571 = vmatpush1.msra.mxu0 0.0
      %1572 = vmatprep.subr.mxu0 0.0
      %1573 = vmatpush1.msra.mxu0 0.0
      %1574 = vmatprep.subr.mxu0 0.0
      %1575 = vmatpush1.msra.mxu0 0.0
      %1576 = vmatprep.subr.mxu0 0.0
      %1577 = vmatpush1.msra.mxu0 0.0
      %1578 = vmatprep.subr.mxu0 0.0
      %1579 = vmatpush1.msra.mxu0 0.0
      %1580 = vmatprep.subr.mxu0 0.0
      %1581 = vmatpush1.msra.mxu0 0.0
      %1582 = vmatprep.subr.mxu0 0.0
      %1583 = vmatpush1.msra.mxu0 0.0
      %1584 = vmatprep.subr.mxu0 0.0
      %1585 = vmatpush1.msra.mxu0 0.0
      %1586 = vmatprep.subr.mxu0 0.0
      %1587 = vmatpush1.msra.mxu0 0.0
      %1588 = vmatprep.subr.mxu0 0.0
      %1589 = vmatpush1.msra.mxu0 0.0
      %1590 = vmatprep.subr.mxu0 0.0
      %1591 = vmatpush1.msra.mxu0 0.0
      %1592 = vmatprep.subr.mxu0 0.0
      %1593 = vmatpush1.msra.mxu0 0.0
      %1594 = vmatprep.subr.mxu0 0.0
      %1595 = vmatpush1.msra.mxu0 0.0
      %1596 = vmatprep.subr.mxu0 0.0
      %1597 = vmatpush1.msra.mxu0 0.0
      %1598 = vmatprep.subr.mxu0 0.0
      %1599 = vmatpush1.msra.mxu0 0.0
      %1600 = vmatprep.subr.mxu0 0.0
      %1601 = vmatpush1.msra.mxu0 0.0
      %1602 = vmatprep.subr.mxu0 0.0
      %1603 = vmatpush1.msra.mxu0 0.0
      %1604 = vmatprep.subr.mxu0 0.0
      %1605 = vmatpush1.msra.mxu0 0.0
      %1606 = vmatprep.subr.mxu0 0.0
      %1607 = vmatpush1.msra.mxu0 0.0
      %1608 = vmatprep.subr.mxu0 0.0
      %1609 = vmatpush1.msra.mxu0 0.0
      %1610 = vmatprep.mubr.f32.mxu0 0.0
      %1611 = vmatmul.mubr.f32.gmra.mrb[0].mxu0 %v1532
      %v1612 = vpop.f32.mrb[0].mxu0
      %v1613 = vadd.f32 0.0, %v1612
      %v1614 = vpop.f32.mrb[0].mxu0
      %v1615 = vadd.f32 0.0, %v1614
      %1616 = vmatprep.mubr.f32.mxu0 0.0
      %1617 = vmatmul.mubr.f32.gmra.mrb[0].mxu0 %v1535
      %v1618 = vpop.f32.mrb[0].mxu0
      %v1619 = vadd.f32 0.0, %v1618
      %v1620 = vpop.f32.mrb[0].mxu0
      %v1621 = vadd.f32 0.0, %v1620
      %1622 = vmatprep.mubr.f32.mxu0 0.0
      %1623 = vmatmul.mubr.f32.gmra.mrb[0].mxu0 %v1538
      %v1624 = vpop.f32.mrb[0].mxu0
      %v1625 = vadd.f32 0.0, %v1624
      %v1626 = vpop.f32.mrb[0].mxu0
      %v1627 = vadd.f32 0.0, %v1626
      %1628 = vmatprep.mubr.f32.mxu0 0.0
      %1629 = vmatmul.mubr.f32.gmra.mrb[0].mxu0 %v1541
      %v1630 = vpop.f32.mrb[0].mxu0
      %v1631 = vadd.f32 0.0, %v1630
      %v1632 = vpop.f32.mrb[0].mxu0
      %v1633 = vadd.f32 0.0, %v1632
      %1634 = vmatprep.mubr.f32.mxu0 0.0
      %1635 = vmatmul.mubr.f32.gmra.mrb[0].mxu0 %v1544
      %v1636 = vpop.f32.mrb[0].mxu0
      %v1637 = vadd.f32 0.0, %v1636
      %v1638 = vpop.f32.mrb[0].mxu0
      %v1639 = vadd.f32 0.0, %v1638
      %1640 = vdwg.mxu0
      %v1641 = vadd.f32 %v1494, %v1613
      %v1642 = vadd.f32 %v1495, %v1615
      %v1643 = vadd.f32 %v1496, %v1619
      %v1644 = vadd.f32 %v1497, %v1621
      %v1645 = vadd.f32 %v1498, %v1625
      %v1646 = vadd.f32 %v1499, %v1627
      %v1647 = vadd.f32 %v1500, %v1631
      %v1648 = vadd.f32 %v1501, %v1633
      %v1649 = vadd.f32 %v1502, %v1637
      %v1650 = vadd.f32 %v1503, %v1639
      %1651 = vrot.lane.b32.xlu0 %v681, 34
      %v1652 = vpop.permute.xlu0 %1651
      %1653 = vrot.lane.b32.xlu0 %v685, 34
      %v1654 = vpop.permute.xlu0 %1653
      %vm1655 = vcmask 277504
      %v1656 = vsel %vm1655, %v1652, %v1654
      %v1660 = vmul.f32 %v394, %v1652
      %v1661 = vmul.f32 %v395, %v1656
      %v1662 = vmul.f32 %v396, %v1654
      %v1663 = vmul.f32 %v397, %v1652
      %v1664 = vmul.f32 %v398, %v1656
      %v1665 = vmul.f32 %v399, %v1654
      %s1666 = scalar_lea.vmem %s0, 320
      %v1667 = vld [vmem:[%s1666] sm:$0xff]
      %v1668 = vld [vmem:[%s1666 + $0x8] sm:$0xff]
      %v1669 = vld [vmem:[%s1666 + $0x10] sm:$0xff]
      %v1670 = vld [vmem:[%s1666 + $0x18] sm:$0xff]
      %v1671 = vld [vmem:[%s1666 + $0x20] sm:$0xf]
      %1678 = vrot.lane.b32.xlu0 %v1660, 94
      %v1679 = vpop.permute.xlu0 %1678
      %1680 = vrot.lane.b32.xlu0 %v1661, 94
      %v1681 = vpop.permute.xlu0 %1680
      %1682 = vrot.lane.b32.xlu0 %v1662, 94
      %v1683 = vpop.permute.xlu0 %1682
      %1684 = vrot.lane.b32.xlu0 %v1663, 94
      %v1685 = vpop.permute.xlu0 %1684
      %1686 = vrot.lane.b32.xlu0 %v1664, 94
      %v1687 = vpop.permute.xlu0 %1686
      %1688 = vrot.lane.b32.xlu0 %v1665, 94
      %v1689 = vpop.permute.xlu0 %1688
      %vm1690 = vcmask 769024
      %v1691 = vsel %vm1690, %v1679, %v1681
      %v1692 = vsel %vm1690, %v1681, %v1683
      %v1693 = vsel %vm1690, %v1685, %v1687
      %v1694 = vsel %vm1690, %v1687, %v1689
      %v1700 = vsel %vm454, %v1667, 0
      %v1703 = vsel %vm454, %v1668, 0
      %v1706 = vsel %vm454, %v1669, 0
      %v1709 = vsel %vm454, %v1670, 0
      %v1712 = vsel %vm454, %v1671, 0
      %1714 = vmatprep.subr.mxu0 %v1692
      %1715 = vmatpush1.msra.mxu0 %v1691
      %1716 = vmatprep.subr.mxu0 %v1694
      %1717 = vmatpush1.msra.mxu0 %v1693
      %1718 = vmatprep.subr.mxu0 0.0
      %1719 = vmatpush1.msra.mxu0 0.0
      %1720 = vmatprep.subr.mxu0 0.0
      %1721 = vmatpush1.msra.mxu0 0.0
      %1722 = vmatprep.subr.mxu0 0.0
      %1723 = vmatpush1.msra.mxu0 0.0
      %1724 = vmatprep.subr.mxu0 0.0
      %1725 = vmatpush1.msra.mxu0 0.0
      %1726 = vmatprep.subr.mxu0 0.0
      %1727 = vmatpush1.msra.mxu0 0.0
      %1728 = vmatprep.subr.mxu0 0.0
      %1729 = vmatpush1.msra.mxu0 0.0
      %1730 = vmatprep.subr.mxu0 0.0
      %1731 = vmatpush1.msra.mxu0 0.0
      %1732 = vmatprep.subr.mxu0 0.0
      %1733 = vmatpush1.msra.mxu0 0.0
      %1734 = vmatprep.subr.mxu0 0.0
      %1735 = vmatpush1.msra.mxu0 0.0
      %1736 = vmatprep.subr.mxu0 0.0
      %1737 = vmatpush1.msra.mxu0 0.0
      %1738 = vmatprep.subr.mxu0 0.0
      %1739 = vmatpush1.msra.mxu0 0.0
      %1740 = vmatprep.subr.mxu0 0.0
      %1741 = vmatpush1.msra.mxu0 0.0
      %1742 = vmatprep.subr.mxu0 0.0
      %1743 = vmatpush1.msra.mxu0 0.0
      %1744 = vmatprep.subr.mxu0 0.0
      %1745 = vmatpush1.msra.mxu0 0.0
      %1746 = vmatprep.subr.mxu0 0.0
      %1747 = vmatpush1.msra.mxu0 0.0
      %1748 = vmatprep.subr.mxu0 0.0
      %1749 = vmatpush1.msra.mxu0 0.0
      %1750 = vmatprep.subr.mxu0 0.0
      %1751 = vmatpush1.msra.mxu0 0.0
      %1752 = vmatprep.subr.mxu0 0.0
      %1753 = vmatpush1.msra.mxu0 0.0
      %1754 = vmatprep.subr.mxu0 0.0
      %1755 = vmatpush1.msra.mxu0 0.0
      %1756 = vmatprep.subr.mxu0 0.0
      %1757 = vmatpush1.msra.mxu0 0.0
      %1758 = vmatprep.subr.mxu0 0.0
      %1759 = vmatpush1.msra.mxu0 0.0
      %1760 = vmatprep.subr.mxu0 0.0
      %1761 = vmatpush1.msra.mxu0 0.0
      %1762 = vmatprep.subr.mxu0 0.0
      %1763 = vmatpush1.msra.mxu0 0.0
      %1764 = vmatprep.subr.mxu0 0.0
      %1765 = vmatpush1.msra.mxu0 0.0
      %1766 = vmatprep.subr.mxu0 0.0
      %1767 = vmatpush1.msra.mxu0 0.0
      %1768 = vmatprep.subr.mxu0 0.0
      %1769 = vmatpush1.msra.mxu0 0.0
      %1770 = vmatprep.subr.mxu0 0.0
      %1771 = vmatpush1.msra.mxu0 0.0
      %1772 = vmatprep.subr.mxu0 0.0
      %1773 = vmatpush1.msra.mxu0 0.0
      %1774 = vmatprep.subr.mxu0 0.0
      %1775 = vmatpush1.msra.mxu0 0.0
      %1776 = vmatprep.subr.mxu0 0.0
      %1777 = vmatpush1.msra.mxu0 0.0
      %1778 = vmatprep.mubr.f32.mxu0 0.0
      %1779 = vmatmul.mubr.f32.gmra.mrb[0].mxu0 %v1700
      %v1780 = vpop.f32.mrb[0].mxu0
      %v1781 = vadd.f32 0.0, %v1780
      %v1782 = vpop.f32.mrb[0].mxu0
      %v1783 = vadd.f32 0.0, %v1782
      %1784 = vmatprep.mubr.f32.mxu0 0.0
      %1785 = vmatmul.mubr.f32.gmra.mrb[0].mxu0 %v1703
      %v1786 = vpop.f32.mrb[0].mxu0
      %v1787 = vadd.f32 0.0, %v1786
      %v1788 = vpop.f32.mrb[0].mxu0
      %v1789 = vadd.f32 0.0, %v1788
      %1790 = vmatprep.mubr.f32.mxu0 0.0
      %1791 = vmatmul.mubr.f32.gmra.mrb[0].mxu0 %v1706
      %v1792 = vpop.f32.mrb[0].mxu0
      %v1793 = vadd.f32 0.0, %v1792
      %v1794 = vpop.f32.mrb[0].mxu0
      %v1795 = vadd.f32 0.0, %v1794
      %1796 = vmatprep.mubr.f32.mxu0 0.0
      %1797 = vmatmul.mubr.f32.gmra.mrb[0].mxu0 %v1709
      %v1798 = vpop.f32.mrb[0].mxu0
      %v1799 = vadd.f32 0.0, %v1798
      %v1800 = vpop.f32.mrb[0].mxu0
      %v1801 = vadd.f32 0.0, %v1800
      %1802 = vmatprep.mubr.f32.mxu0 0.0
      %1803 = vmatmul.mubr.f32.gmra.mrb[0].mxu0 %v1712
      %v1804 = vpop.f32.mrb[0].mxu0
      %v1805 = vadd.f32 0.0, %v1804
      %v1806 = vpop.f32.mrb[0].mxu0
      %v1807 = vadd.f32 0.0, %v1806
      %1808 = vdwg.mxu0
      %v1809 = vadd.f32 %v1641, %v1781
      %v1810 = vadd.f32 %v1642, %v1783
      %v1811 = vadd.f32 %v1643, %v1787
      %v1812 = vadd.f32 %v1644, %v1789
      %v1813 = vadd.f32 %v1645, %v1793
      %v1814 = vadd.f32 %v1646, %v1795
      %v1815 = vadd.f32 %v1647, %v1799
      %v1816 = vadd.f32 %v1648, %v1801
      %v1817 = vadd.f32 %v1649, %v1805
      %v1818 = vadd.f32 %v1650, %v1807
      %v1819 = vld [vmem:[%s1] sm:$0xff]
      %v1820 = vld [vmem:[%s1 + $0x8] sm:$0xff]
      %v1821 = vld [vmem:[%s1 + $0x10] sm:$0xff]
      %v1822 = vld [vmem:[%s1 + $0x18] sm:$0xff]
      %v1823 = vld [vmem:[%s1 + $0x20] sm:$0xf]
      %1825 = vset.pattern.permute.xlu0 0
      %1826 = vperm.xlu0 %1825, %v1819
      %v1827 = vpop.permute.xlu0 %1826
      %1830 = vset.pattern.permute.xlu0 0
      %1831 = vperm.xlu0 %1830, %v1820
      %v1832 = vpop.permute.xlu0 %1831
      %1835 = vset.pattern.permute.xlu0 0
      %1836 = vperm.xlu0 %1835, %v1821
      %v1837 = vpop.permute.xlu0 %1836
      %1840 = vset.pattern.permute.xlu0 0
      %1841 = vperm.xlu0 %1840, %v1822
      %v1842 = vpop.permute.xlu0 %1841
      %1845 = vset.pattern.permute.xlu0 0
      %1846 = vperm.xlu0 %1845, %v1823
      %v1847 = vpop.permute.xlu0 %1846
      %v1849 = vadd.f32 %v1809, %v1827
      %v1850 = vadd.f32 %v1810, %v1827
      %v1851 = vadd.f32 %v1811, %v1832
      %v1852 = vadd.f32 %v1812, %v1832
      %v1853 = vadd.f32 %v1813, %v1837
      %v1854 = vadd.f32 %v1814, %v1837
      %v1855 = vadd.f32 %v1815, %v1842
      %v1856 = vadd.f32 %v1816, %v1842
      %v1857 = vadd.f32 %v1817, %v1847
      %v1858 = vadd.f32 %v1818, %v1847
      %v1861 = vcombine.low %v1849, %v1850
      %v1863 = vunpack.c.l.s4 1983009808
      %v1864 = vunpack.c.0.s8 %v1863
      %v1865 = vlaneseq
      %v1866 = vshrl.u32 %v1865, 7
      %v1867 = vsub.s32 %v1864, %v1866
      %v1868 = vrot.slane %v1861, %v1867
      %1870 = vst [vmem:[%s368] sm:$0xf] %v1868
      %v1871 = vcombine.high %v1868, %v1868
      %1873 = vst [vmem:[%s373] sm:$0xf] %v1871
      %vm1878 = vcmask 1043456
      %v1879 = vrot.slane %v1849, 4
      %v1880 = vrot.slane %v1851, 4
      %v1881 = vsel %vm1878, %v1879, %v1880
      %v1882 = vrot.slane %v1850, 4
      %v1883 = vrot.slane %v1852, 4
      %v1884 = vsel %vm1878, %v1882, %v1883
      %v1885 = vrot.slane %v1853, 4
      %v1886 = vsel %vm1878, %v1880, %v1885
      %v1887 = vrot.slane %v1854, 4
      %v1888 = vsel %vm1878, %v1883, %v1887
      %1893 = vst [vmem:[%s378] sm:$0xff] %v1881
      %1894 = vst [vmem:[%s378 + $0x8] sm:$0xff] %v1884
      %1895 = vst [vmem:[%s378 + $0x10] sm:$0xff] %v1886
      %1896 = vst [vmem:[%s378 + $0x18] sm:$0xff] %v1888
      %v1901 = vrot.slane %v1855, 4
      %v1902 = vsel %vm1878, %v1885, %v1901
      %v1903 = vrot.slane %v1856, 4
      %v1904 = vsel %vm1878, %v1887, %v1903
      %v1905 = vrot.slane %v1857, 4
      %v1906 = vsel %vm1878, %v1901, %v1905
      %v1907 = vrot.slane %v1858, 4
      %v1908 = vsel %vm1878, %v1903, %v1907
      %1913 = vst [vmem:[%s383] sm:$0xff] %v1902
      %1914 = vst [vmem:[%s383 + $0x8] sm:$0xff] %v1904
      %1915 = vst [vmem:[%s383 + $0x10] sm:$0xff] %v1906
      %1916 = vst [vmem:[%s383 + $0x18] sm:$0xff] %v1908
      %vm1917 = vcmask 1047556
      %v1918 = vsel %vm1917, %v1853, 0.0
      %v1919 = vsel %vm1917, %v1854, 0.0
      %v1920 = vadd.f32 %v1918, %v1919
      %1921 = vadd.xlane.f32.xlu0 %v1920
      %v1922 = vpop.xlane.xlu0 %1921
      %v1923 = vadd.f32 %v1855, %v1856
      %1924 = vadd.xlane.f32.xlu0 %v1923
      %v1925 = vpop.xlane.xlu0 %1924
      %v1926 = vsel %vm1878, %v1857, 0.0
      %v1927 = vsel %vm1878, %v1858, 0.0
      %v1928 = vadd.f32 %v1926, %v1927
      %1929 = vadd.xlane.f32.xlu0 %v1928
      %v1930 = vpop.xlane.xlu0 %1929
      %v1931 = vrcp.pop 256.0
      %v1932 = vmul.f32 %v1922, %v1931
      %v1933 = vmul.f32 %v1925, %v1931
      %v1934 = vmul.f32 %v1930, %v1931
      %v1935 = vsub.f32 %v1853, %v1932
      %v1936 = vsub.f32 %v1854, %v1932
      %v1937 = vsub.f32 %v1855, %v1933
      %v1938 = vsub.f32 %v1856, %v1933
      %v1939 = vsub.f32 %v1857, %v1934
      %v1940 = vsub.f32 %v1858, %v1934
      %v1941 = vmul.f32 %v1935, %v1935
      %v1942 = vmul.f32 %v1936, %v1936
      %v1943 = vmul.f32 %v1937, %v1937
      %v1944 = vmul.f32 %v1938, %v1938
      %v1945 = vmul.f32 %v1939, %v1939
      %v1946 = vmul.f32 %v1940, %v1940
      %v1947 = vsel %vm1917, %v1941, 0.0
      %v1948 = vsel %vm1917, %v1942, 0.0
      %v1949 = vadd.f32 %v1947, %v1948
      %1950 = vadd.xlane.f32.xlu0 %v1949
      %v1951 = vpop.xlane.xlu0 %1950
      %v1952 = vadd.f32 %v1943, %v1944
      %1953 = vadd.xlane.f32.xlu0 %v1952
      %v1954 = vpop.xlane.xlu0 %1953
      %v1955 = vsel %vm1878, %v1945, 0.0
      %v1956 = vsel %vm1878, %v1946, 0.0
      %v1957 = vadd.f32 %v1955, %v1956
      %1958 = vadd.xlane.f32.xlu0 %v1957
      %v1959 = vpop.xlane.xlu0 %1958
      %v1960 = vmul.f32 %v1951, %v1931
      %v1961 = vmul.f32 %v1954, %v1931
      %v1962 = vmul.f32 %v1959, %v1931
      %vm1963 = vcmask 7172
      %1964 = vst.msk [vmem:[%s388 - $0x4] sm:$0xf0] %vm1963, %v1932
      %vm1965 = vcmask 7168
      %1966 = vst.msk [vmem:[%s388 + $0x4] sm:$0xff] %vm1965, %v1933
      %vm1967 = vcmask 3072
      %1968 = vst.msk [vmem:[%s388 + $0xc] sm:$0xf] %vm1967, %v1934
      %v1969 = vadd.f32 %v1960, 1e-05
      %v1970 = vadd.f32 %v1961, 1e-05
      %v1971 = vadd.f32 %v1962, 1e-05
      %v1972 = vrsqrt.pop %v1969
      %v1973 = vrsqrt.pop %v1970
      %v1974 = vrsqrt.pop %v1971
      %1975 = vst.msk [vmem:[%s393 - $0x4] sm:$0xf0] %vm1963, %v1972
      %1976 = vst.msk [vmem:[%s393 + $0x4] sm:$0xff] %vm1965, %v1973
      %1977 = vst.msk [vmem:[%s393 + $0xc] sm:$0xf] %vm1967, %v1974
      %p1978 = scmp.lt.s32.totalorder %s21, 1
      %s1979 = scalar_select %p1978, %s21, 1
      %s1980 = smul.addr %s1979, 2
      %s1981 = smul.addr %s1980, 2
      %s1982 = scalar_lea.vmem %s4, %s1981
      %p1983 = scmp.lt.s32.totalorder %s21, 1
      %s1984 = scalar_select %p1983, %s21, 1
      %s1985 = smul.addr %s1984, 2
      %s1986 = smul.addr %s1985, 2
      %s1987 = scalar_lea.vmem %s5, %s1986
      %p1988 = scmp.lt.s32.totalorder %s21, 1
      %s1989 = scalar_select %p1988, %s21, 1
      %s1990 = smul.addr %s1989, 4
      %s1991 = smul.addr %s1990, 8
      %s1992 = scalar_lea.vmem %s6, %s1991
      %p1993 = scmp.lt.s32.totalorder %s21, 1
      %s1994 = scalar_select %p1993, %s21, 1
      %s1995 = smul.addr %s1994, 4
      %s1996 = smul.addr %s1995, 8
      %s1997 = scalar_lea.vmem %s7, %s1996
      %p1998 = scmp.lt.s32.totalorder %s21, 1
      %s1999 = scalar_select %p1998, %s21, 1
      %s2000 = smul.addr %s1999, 2
      %s2001 = smul.addr %s2000, 8
      %s2002 = scalar_lea.vmem %s8, %s2001
      %p2003 = scmp.lt.s32.totalorder %s21, 1
      %s2004 = scalar_select %p2003, %s21, 1
      %s2005 = smul.addr %s2004, 2
      %s2006 = smul.addr %s2005, 8
      %s2007 = scalar_lea.vmem %s9, %s2006
      // Predicated region
      $region37: #{full_attention_forward.2} parent=35 // pred_check
        %p2008 = pneg %p128
      $region38: #{full_attention_forward.2} parent=35 // pred_check_branch
        %2010 = sbr.rel (%p2008) target = $region40
      $region39: #{full_attention_forward.2} parent=35 // pred_region
        _
      $region40: #{full_attention_forward.2} parent=35 // pred_fallthru
        _
      // Predicated region
      $region41: #{full_attention_forward.2} parent=35 // pred_check
        %p2011 = pneg %p154
      $region42: #{full_attention_forward.2} parent=35 // pred_check_branch
        %2013 = sbr.rel (%p2011) target = $region44
      $region43: #{full_attention_forward.2} parent=35 // pred_region
        _
      $region44: #{full_attention_forward.2} parent=35 // pred_fallthru
        _
      // Predicated region
      $region45: #{full_attention_forward.2} parent=35 // pred_check
        %p2014 = pneg %p180
      $region46: #{full_attention_forward.2} parent=35 // pred_check_branch
        %2016 = sbr.rel (%p2014) target = $region48
      $region47: #{full_attention_forward.2} parent=35 // pred_region
        _
      $region48: #{full_attention_forward.2} parent=35 // pred_fallthru
        _
      // Predicated region
      $region49: #{full_attention_forward.2} parent=35 // pred_check
        %p2017 = pneg %p206
      $region50: #{full_attention_forward.2} parent=35 // pred_check_branch
        %2019 = sbr.rel (%p2017) target = $region52
      $region51: #{full_attention_forward.2} parent=35 // pred_region
        _
      $region52: #{full_attention_forward.2} parent=35 // pred_fallthru
        _
      // Predicated region
      $region53: #{full_attention_forward.2} parent=35 // pred_check
        %p2020 = pneg %p232
      $region54: #{full_attention_forward.2} parent=35 // pred_check_branch
        %2022 = sbr.rel (%p2020) target = $region56
      $region55: #{full_attention_forward.2} parent=35 // pred_region
        _
      $region56: #{full_attention_forward.2} parent=35 // pred_fallthru
        _
      // Predicated region
      $region57: #{full_attention_forward.2} parent=35 // pred_check
        %p2023 = pneg %p258
      $region58: #{full_attention_forward.2} parent=35 // pred_check_branch
        %2025 = sbr.rel (%p2023) target = $region60
      $region59: #{full_attention_forward.2} parent=35 // pred_region
        _
      $region60: #{full_attention_forward.2} parent=35 // pred_fallthru
        _
    $region36: #{full_attention_forward.2} parent=5 // pred_fallthru
      _
    %p2026 = scmp.le.s32.totalorder 2, %s16
    // Predicated region
    $region61: #{full_attention_forward.2} parent=5 // pred_check
      %p2027 = pneg %p2026
    $region62: #{full_attention_forward.2} parent=5 // pred_check_branch
      %2029 = sbr.rel (%p2027) target = $region64
    $region63: #{full_attention_forward.2} parent=5 // pred_region
      %s2030 = ssub.s32 %s16, 2
      // Predicated region
      $region65: #{full_attention_forward.2} parent=63 // pred_check
        %p2031 = pneg %p134
      $region66: #{full_attention_forward.2} parent=63 // pred_check_branch
        %2033 = sbr.rel (%p2031) target = $region68
      $region67: #{full_attention_forward.2} parent=63 // pred_region
        %p2034 = scmp.lt.s32.totalorder %s22, 1
        %s2035 = scalar_select %p2034, %s22, 1
        %s2036 = smul.addr %s2035, 2
        %s2037 = smul.addr %s2036, 2
        %s2038 = scalar_lea.vmem %s4, %s2037
      $region68: #{full_attention_forward.2} parent=63 // pred_fallthru
        _
      // Predicated region
      $region69: #{full_attention_forward.2} parent=63 // pred_check
        %p2039 = pneg %p160
      $region70: #{full_attention_forward.2} parent=63 // pred_check_branch
        %2041 = sbr.rel (%p2039) target = $region72
      $region71: #{full_attention_forward.2} parent=63 // pred_region
        %p2042 = scmp.lt.s32.totalorder %s22, 1
        %s2043 = scalar_select %p2042, %s22, 1
        %s2044 = smul.addr %s2043, 2
        %s2045 = smul.addr %s2044, 2
        %s2046 = scalar_lea.vmem %s5, %s2045
      $region72: #{full_attention_forward.2} parent=63 // pred_fallthru
        _
      // Predicated region
      $region73: #{full_attention_forward.2} parent=63 // pred_check
        %p2047 = pneg %p186
      $region74: #{full_attention_forward.2} parent=63 // pred_check_branch
        %2049 = sbr.rel (%p2047) target = $region76
      $region75: #{full_attention_forward.2} parent=63 // pred_region
        %p2050 = scmp.lt.s32.totalorder %s22, 1
        %s2051 = scalar_select %p2050, %s22, 1
        %s2052 = smul.addr %s2051, 4
        %s2053 = smul.addr %s2052, 8
        %s2054 = scalar_lea.vmem %s6, %s2053
      $region76: #{full_attention_forward.2} parent=63 // pred_fallthru
        _
      // Predicated region
      $region77: #{full_attention_forward.2} parent=63 // pred_check
        %p2055 = pneg %p212
      $region78: #{full_attention_forward.2} parent=63 // pred_check_branch
        %2057 = sbr.rel (%p2055) target = $region80
      $region79: #{full_attention_forward.2} parent=63 // pred_region
        %p2058 = scmp.lt.s32.totalorder %s22, 1
        %s2059 = scalar_select %p2058, %s22, 1
        %s2060 = smul.addr %s2059, 4
        %s2061 = smul.addr %s2060, 8
        %s2062 = scalar_lea.vmem %s7, %s2061
      $region80: #{full_attention_forward.2} parent=63 // pred_fallthru
        _
      // Predicated region
      $region81: #{full_attention_forward.2} parent=63 // pred_check
        %p2063 = pneg %p238
      $region82: #{full_attention_forward.2} parent=63 // pred_check_branch
        %2065 = sbr.rel (%p2063) target = $region84
      $region83: #{full_attention_forward.2} parent=63 // pred_region
        %p2066 = scmp.lt.s32.totalorder %s22, 1
        %s2067 = scalar_select %p2066, %s22, 1
        %s2068 = smul.addr %s2067, 2
        %s2069 = smul.addr %s2068, 8
        %s2070 = scalar_lea.vmem %s8, %s2069
      $region84: #{full_attention_forward.2} parent=63 // pred_fallthru
        _
      // Predicated region
      $region85: #{full_attention_forward.2} parent=63 // pred_check
        %p2071 = pneg %p264
      $region86: #{full_attention_forward.2} parent=63 // pred_check_branch
        %2073 = sbr.rel (%p2071) target = $region88
      $region87: #{full_attention_forward.2} parent=63 // pred_region
        %p2074 = scmp.lt.s32.totalorder %s22, 1
        %s2075 = scalar_select %p2074, %s22, 1
        %s2076 = smul.addr %s2075, 2
        %s2077 = smul.addr %s2076, 8
        %s2078 = scalar_lea.vmem %s9, %s2077
      $region88: #{full_attention_forward.2} parent=63 // pred_fallthru
        _
    $region64: #{full_attention_forward.2} parent=5 // pred_fallthru
      _
  $region6: #{full_attention_forward.2} parent=0 // loop_footer
    %s20 = sadd.s32 1, %s16
  $region7: #{full_attention_forward.2} parent=0 // loop_footer_branch
    %15 = sbr.rel target = $region3
  $region8: #{full_attention_forward.2} parent=0 // loop_exit
    _

</llo_original>
